<compile_context>
chip_gen: v7x
topology: tpu7x:2x2x1
jax: 0.10.0
libtpu: 0.0.40
codegen_flags: <defaults>
</compile_context>

<pallas_src>
import functools

import jax
import jax.numpy as jnp
from jax.experimental import pallas as pl
from jax.experimental.pallas import tpu as pltpu


def _round_up(n, m):
    return ((n + m - 1) // m) * m


# ----------------------------------------------------------------------------
# Fused kernel: maxpool2x2 -> conv3x3x3+ReLU -> conv3x3x3+ReLU  (one batch elem)
# ----------------------------------------------------------------------------
def _down_conv_block_kernel(xprep_ref, w1_ref, b1_ref, w2_ref, b2_ref, mask_ref,
                            o_ref, act_ref, slab_ref,
                            *, cp, taps, guard, length):
    # ---- MaxPool2d(2, 2): f32 VPU max of the four pooling-offset slabs
    #      (already padded + flattened + lane-dense, courtesy of the wrapper).
    pooled = jnp.maximum(xprep_ref[0, 0], xprep_ref[0, 1])
    pooled = jnp.maximum(pooled, xprep_ref[0, 2])
    pooled = jnp.maximum(pooled, xprep_ref[0, 3])               # (cp, L) f32
    mask = mask_ref[...]                                        # (1, L) f32

    # ---- zero ONLY the guard bands of the (aliased) activation buffer; the
    #      interior + tail (incl. zero-padded channel rows) are overwritten.
    act_ref[:, :guard] = jnp.zeros((cp, guard), jnp.bfloat16)
    act_ref[:, guard + length:] = jnp.zeros((cp, guard), jnp.bfloat16)

    def conv3x3x3(w_ref, b_ref, v):
        # v: (rows, L) f32 with rows <= cp.  Stale values in act rows >= rows
        # are harmless: the matching weight columns are zero (and act holds
        # finite zeros there from the conv1 pooled write).
        act_ref[:v.shape[0], guard:guard + length] = v.astype(jnp.bfloat16)
        acc = b_ref[...]                                        # (Cout, L) f32
        for kd in range(3):
            # Build the 9-tap (kh, kw) sub-slab for this kd into the reused
            # scratch; each tap is a shifted lane-slice of the guarded act.
            for t in range(9):
                s = taps[kd * 9 + t]
                slab_ref[t * cp:(t + 1) * cp, :] = \
                    act_ref[:, guard + s:guard + s + length]
            acc = acc + jnp.dot(w_ref[kd], slab_ref[...],
                                preferred_element_type=jnp.float32)
        return jnp.maximum(acc, 0.0)                            # ReLU (Cout, L)

    h1 = conv3x3x3(w1_ref, b1_ref, pooled) * mask   # re-zero halo for conv2
    o_ref[0] = conv3x3x3(w2_ref, b2_ref, h1)        # lane-dense final store


# ----------------------------------------------------------------------------
# Wrapper: layout glue (cheap XLA ops on tiny tensors) + one pallas_call
# ----------------------------------------------------------------------------
def down_conv_block(x, params):
    """x: (B, in_channels, D, H, W) f32 -> (B, out_channels, D, H//2, W//2)."""
    B, c_in, D, H, W = x.shape
    assert H % 2 == 0 and W % 2 == 0, "maxpool2x2 expects even H, W"
    Ho, Wo = H // 2, W // 2
    Dp, Hp, Wp = D + 2, Ho + 2, Wo + 2
    Mp = Dp * Hp * Wp
    L = _round_up(Mp, 128)                       # lane-dense flattened length
    guard = _round_up(Hp * Wp + Wp + 1, 128)     # >= max |tap shift|
    c_out = params["w1"].shape[0]
    CP = _round_up(max(c_in, c_out), 16)         # 16 -> full-tile bf16 tap rows

    # pooling offsets to front, channel-padded, spatially zero-padded, flattened
    x6 = x.reshape(B, c_in, D, Ho, 2, Wo, 2)
    x6 = jnp.transpose(x6, (0, 4, 6, 1, 2, 3, 5))            # (B,2,2,Cin,D,Ho,Wo)
    x6 = jnp.pad(x6, ((0, 0), (0, 0), (0, 0), (0, CP - c_in),
                      (1, 1), (1, 1), (1, 1)))
    xprep = jnp.pad(x6.reshape(B, 4, CP, Mp),
                    ((0, 0), (0, 0), (0, 0), (0, L - Mp)))   # (B, 4, CP, L) f32

    # weights -> (3, Cout, 9*CP) bf16: kd-major chunks, (kh,kw)-major /
    # channel-minor columns, zero-padded channels
    def prep_w(w):
        co, ci = w.shape[0], w.shape[1]
        wt = jnp.transpose(w, (2, 3, 4, 0, 1))               # (kd,kh,kw,co,ci)
        wt = jnp.pad(wt, ((0, 0), (0, 0), (0, 0), (0, 0), (0, CP - ci)))
        wt = wt.reshape(3, 9, co, CP).transpose(0, 2, 1, 3)
        return wt.reshape(3, co, 9 * CP).astype(jnp.bfloat16)

    w1m, w2m = prep_w(params["w1"]), prep_w(params["w2"])
    b1 = jnp.broadcast_to(params["b1"].astype(jnp.float32)[:, None], (c_out, L))
    b2 = jnp.broadcast_to(params["b2"].astype(jnp.float32)[:, None], (c_out, L))

    # 1 at interior voxels of the padded flattened layout, 0 at halo / tail
    inner = jnp.pad(jnp.ones((D, Ho, Wo), jnp.float32), ((1, 1), (1, 1), (1, 1)))
    mask = jnp.pad(inner.reshape(1, Mp), ((0, 0), (0, L - Mp)))      # (1, L)

    # tap shifts in the padded flattened layout, ordered (kd, kh, kw)
    taps = tuple((kd - 1) * Hp * Wp + (kh - 1) * Wp + (kw - 1)
                 for kd in range(3) for kh in range(3) for kw in range(3))

    kernel = functools.partial(_down_conv_block_kernel,
                               cp=CP, taps=taps, guard=guard, length=L)
    width = guard + L + guard

    res = pl.pallas_call(
        kernel,
        out_shape=jax.ShapeDtypeStruct((B, c_out, L), jnp.float32),
        grid=(B,),
        in_specs=[
            pl.BlockSpec((1, 4, CP, L), lambda b: (b, 0, 0, 0)),
            pl.BlockSpec((3, c_out, 9 * CP), lambda b: (0, 0, 0)),
            pl.BlockSpec((c_out, L), lambda b: (0, 0)),
            pl.BlockSpec((3, c_out, 9 * CP), lambda b: (0, 0, 0)),
            pl.BlockSpec((c_out, L), lambda b: (0, 0)),
            pl.BlockSpec((1, L), lambda b: (0, 0)),
        ],
        out_specs=pl.BlockSpec((1, c_out, L), lambda b: (b, 0, 0)),
        scratch_shapes=[
            pltpu.VMEM((CP, width), jnp.bfloat16),      # guarded act (aliased)
            pltpu.VMEM((9 * CP, L), jnp.bfloat16),      # per-kd sub-slab (reused)
        ],
        compiler_params=pltpu.CompilerParams(
            dimension_semantics=("parallel",)),
    )(xprep, w1m, b1, w2m, b2, mask)

    # strip the zero halo / lane tail: (B, Cout, L) -> (B, Cout, D, Ho, Wo)
    return res[:, :, :Mp].reshape(B, c_out, Dp, Hp, Wp)[:, :, 1:-1, 1:-1, 1:-1]


# ----------------------------------------------------------------------------
# Pure-JAX reference for the sanity check.
# ----------------------------------------------------------------------------
def _reference(x, params):
    B, C, D, H, W = x.shape
    xp = x.reshape(B, C, D, H // 2, 2, W // 2, 2).max(axis=(4, 6))

    def conv(v, w, b):
        out = jax.lax.conv_general_dilated(
            v, w, window_strides=(1, 1, 1), padding="SAME",
            dimension_numbers=("NCDHW", "OIDHW", "NCDHW"),
            precision=jax.lax.Precision.HIGHEST)
        return jnp.maximum(out + b[None, :, None, None, None], 0.0)

    v = conv(xp, params["w1"], params["b1"])
    v = conv(v, params["w2"], params["b2"])
    return v


if __name__ == "__main__":
    B, in_channels, out_channels = 2, 4, 8
    D, H, W = 8, 16, 16

    key = jax.random.PRNGKey(0)
    k_x, k_w1, k_b1, k_w2, k_b2 = jax.random.split(key, 5)
    x = jax.random.normal(k_x, (B, in_channels, D, H, W), jnp.float32)

    def conv_init(kw, kb, cin, cout):
        # matches PyTorch Conv3d default init bounds (deterministic here)
        bound = (cin * 27) ** -0.5
        w = jax.random.uniform(kw, (cout, cin, 3, 3, 3), jnp.float32, -bound, bound)
        b = jax.random.uniform(kb, (cout,), jnp.float32, -bound, bound)
        return w, b

    w1, b1 = conv_init(k_w1, k_b1, in_channels, out_channels)
    w2, b2 = conv_init(k_w2, k_b2, out_channels, out_channels)
    params = {"w1": w1, "b1": b1, "w2": w2, "b2": b2}

    out = jax.jit(down_conv_block)(x, params)
    jax.block_until_ready(out)

    assert out.shape == (B, out_channels, D, H // 2, W // 2), out.shape

    ref = _reference(x, params)
    max_err = float(jnp.max(jnp.abs(out - ref)))
    # tolerance sized for bf16 MXU operands with f32 accumulation vs an f32
    # HIGHEST-precision reference; layout bugs produce O(0.1..1) errors.
    assert max_err < 2e-2, f"max abs error vs reference: {max_err}"

    print("KERNEL_OK")
</pallas_src>

<mosaic_0001>
module attributes {stable_mosaic.version = 11 : i64} {
  func.func @_down_conv_block_kernel(%arg0: i32, %arg1: memref<1x4x16x1024xf32, #tpu.memory_space<vmem>>, %arg2: memref<3x8x144xbf16, #tpu.memory_space<vmem>>, %arg3: memref<8x1024xf32, #tpu.memory_space<vmem>>, %arg4: memref<3x8x144xbf16, #tpu.memory_space<vmem>>, %arg5: memref<8x1024xf32, #tpu.memory_space<vmem>>, %arg6: memref<1x1024xf32, #tpu.memory_space<vmem>>, %arg7: memref<1x8x1024xf32, #tpu.memory_space<vmem>>, %arg8: memref<16x1280xbf16, #tpu.memory_space<vmem>>, %arg9: memref<144x1024xbf16, #tpu.memory_space<vmem>>) attributes {dimension_semantics = [#tpu.dimension_semantics<parallel>], iteration_bounds = array<i64: 2>, scalar_prefetch = 0 : i64, scratch_operands = 2 : i64, tpu.core_type = #tpu.core_type<tc>, window_params = [{transform_indices = @transform_0, window_bounds = array<i64: 1, 4, 16, 1024>}, {pipeline_mode = #tpu.pipeline_mode<synchronous>, transform_indices = @transform_1, window_bounds = array<i64: 3, 8, 144>}, {pipeline_mode = #tpu.pipeline_mode<synchronous>, transform_indices = @transform_2, window_bounds = array<i64: 8, 1024>}, {pipeline_mode = #tpu.pipeline_mode<synchronous>, transform_indices = @transform_3, window_bounds = array<i64: 3, 8, 144>}, {pipeline_mode = #tpu.pipeline_mode<synchronous>, transform_indices = @transform_4, window_bounds = array<i64: 8, 1024>}, {pipeline_mode = #tpu.pipeline_mode<synchronous>, transform_indices = @transform_5, window_bounds = array<i64: 1, 1024>}, {transform_indices = @transform_6, window_bounds = array<i64: 1, 8, 1024>}]} {
    %c0 = arith.constant 0 : index
    %c0_0 = arith.constant 0 : index
    %c0_1 = arith.constant 0 : index
    %c0_2 = arith.constant 0 : index
    %0 = vector.load %arg1[%c0, %c0_0, %c0_1, %c0_2] : memref<1x4x16x1024xf32, #tpu.memory_space<vmem>>, vector<1x1x16x1024xf32>
    %1 = vector.shape_cast %0 : vector<1x1x16x1024xf32> to vector<16x1024xf32>
    %c0_3 = arith.constant 0 : index
    %c1 = arith.constant 1 : index
    %c0_4 = arith.constant 0 : index
    %c0_5 = arith.constant 0 : index
    %2 = vector.load %arg1[%c0_3, %c1, %c0_4, %c0_5] : memref<1x4x16x1024xf32, #tpu.memory_space<vmem>>, vector<1x1x16x1024xf32>
    %3 = vector.shape_cast %2 : vector<1x1x16x1024xf32> to vector<16x1024xf32>
    %4 = arith.maximumf %1, %3 : vector<16x1024xf32>
    %c0_6 = arith.constant 0 : index
    %c2 = arith.constant 2 : index
    %c0_7 = arith.constant 0 : index
    %c0_8 = arith.constant 0 : index
    %5 = vector.load %arg1[%c0_6, %c2, %c0_7, %c0_8] : memref<1x4x16x1024xf32, #tpu.memory_space<vmem>>, vector<1x1x16x1024xf32>
    %6 = vector.shape_cast %5 : vector<1x1x16x1024xf32> to vector<16x1024xf32>
    %7 = arith.maximumf %4, %6 : vector<16x1024xf32>
    %c0_9 = arith.constant 0 : index
    %c3 = arith.constant 3 : index
    %c0_10 = arith.constant 0 : index
    %c0_11 = arith.constant 0 : index
    %8 = vector.load %arg1[%c0_9, %c3, %c0_10, %c0_11] : memref<1x4x16x1024xf32, #tpu.memory_space<vmem>>, vector<1x1x16x1024xf32>
    %9 = vector.shape_cast %8 : vector<1x1x16x1024xf32> to vector<16x1024xf32>
    %10 = arith.maximumf %7, %9 : vector<16x1024xf32>
    %c0_12 = arith.constant 0 : index
    %c0_13 = arith.constant 0 : index
    %11 = vector.load %arg6[%c0_12, %c0_13] : memref<1x1024xf32, #tpu.memory_space<vmem>>, vector<1x1024xf32>
    %cst = arith.constant 0.000000e+00 : bf16
    %12 = vector.broadcast %cst : bf16 to vector<16x128xbf16>
    %c0_14 = arith.constant 0 : index
    %c0_15 = arith.constant 0 : index
    %13 = vector.load %arg8[%c0_14, %c0_15] : memref<16x1280xbf16, #tpu.memory_space<vmem>>, vector<16x128xbf16>
    tpu.vector_store %arg8[%c0_14, %c0_15], %12 {strides = array<i32>} : memref<16x1280xbf16, #tpu.memory_space<vmem>>, vector<16x128xbf16>,
    %cst_16 = arith.constant 0.000000e+00 : bf16
    %14 = vector.broadcast %cst_16 : bf16 to vector<16x128xbf16>
    %c0_17 = arith.constant 0 : index
    %c1152 = arith.constant 1152 : index
    %15 = vector.load %arg8[%c0_17, %c1152] : memref<16x1280xbf16, #tpu.memory_space<vmem>>, vector<16x128xbf16>
    tpu.vector_store %arg8[%c0_17, %c1152], %14 {strides = array<i32>} : memref<16x1280xbf16, #tpu.memory_space<vmem>>, vector<16x128xbf16>,
    %16 = arith.truncf %10 : vector<16x1024xf32> to vector<16x1024xbf16>
    %c0_18 = arith.constant 0 : index
    %c128 = arith.constant 128 : index
    %17 = vector.load %arg8[%c0_18, %c128] : memref<16x1280xbf16, #tpu.memory_space<vmem>>, vector<16x1024xbf16>
    tpu.vector_store %arg8[%c0_18, %c128], %16 {strides = array<i32>} : memref<16x1280xbf16, #tpu.memory_space<vmem>>, vector<16x1024xbf16>,
    %c0_19 = arith.constant 0 : index
    %c0_20 = arith.constant 0 : index
    %18 = vector.load %arg3[%c0_19, %c0_20] : memref<8x1024xf32, #tpu.memory_space<vmem>>, vector<8x1024xf32>
    %c0_21 = arith.constant 0 : index
    %c17 = arith.constant 17 : index
    %19 = vector.load %arg8[%c0_21, %c17] : memref<16x1280xbf16, #tpu.memory_space<vmem>>, vector<16x1024xbf16>
    %c0_22 = arith.constant 0 : index
    %c0_23 = arith.constant 0 : index
    %20 = vector.load %arg9[%c0_22, %c0_23] : memref<144x1024xbf16, #tpu.memory_space<vmem>>, vector<16x1024xbf16>
    tpu.vector_store %arg9[%c0_22, %c0_23], %19 {strides = array<i32>} : memref<144x1024xbf16, #tpu.memory_space<vmem>>, vector<16x1024xbf16>,
    %c0_24 = arith.constant 0 : index
    %c18 = arith.constant 18 : index
    %21 = vector.load %arg8[%c0_24, %c18] : memref<16x1280xbf16, #tpu.memory_space<vmem>>, vector<16x1024xbf16>
    %c16 = arith.constant 16 : index
    %c0_25 = arith.constant 0 : index
    %22 = vector.load %arg9[%c16, %c0_25] : memref<144x1024xbf16, #tpu.memory_space<vmem>>, vector<16x1024xbf16>
    tpu.vector_store %arg9[%c16, %c0_25], %21 {strides = array<i32>} : memref<144x1024xbf16, #tpu.memory_space<vmem>>, vector<16x1024xbf16>,
    %c0_26 = arith.constant 0 : index
    %c19 = arith.constant 19 : index
    %23 = vector.load %arg8[%c0_26, %c19] : memref<16x1280xbf16, #tpu.memory_space<vmem>>, vector<16x1024xbf16>
    %c32 = arith.constant 32 : index
    %c0_27 = arith.constant 0 : index
    %24 = vector.load %arg9[%c32, %c0_27] : memref<144x1024xbf16, #tpu.memory_space<vmem>>, vector<16x1024xbf16>
    tpu.vector_store %arg9[%c32, %c0_27], %23 {strides = array<i32>} : memref<144x1024xbf16, #tpu.memory_space<vmem>>, vector<16x1024xbf16>,
    %c0_28 = arith.constant 0 : index
    %c27 = arith.constant 27 : index
    %25 = vector.load %arg8[%c0_28, %c27] : memref<16x1280xbf16, #tpu.memory_space<vmem>>, vector<16x1024xbf16>
    %c48 = arith.constant 48 : index
    %c0_29 = arith.constant 0 : index
    %26 = vector.load %arg9[%c48, %c0_29] : memref<144x1024xbf16, #tpu.memory_space<vmem>>, vector<16x1024xbf16>
    tpu.vector_store %arg9[%c48, %c0_29], %25 {strides = array<i32>} : memref<144x1024xbf16, #tpu.memory_space<vmem>>, vector<16x1024xbf16>,
    %c0_30 = arith.constant 0 : index
    %c28 = arith.constant 28 : index
    %27 = vector.load %arg8[%c0_30, %c28] : memref<16x1280xbf16, #tpu.memory_space<vmem>>, vector<16x1024xbf16>
    %c64 = arith.constant 64 : index
    %c0_31 = arith.constant 0 : index
    %28 = vector.load %arg9[%c64, %c0_31] : memref<144x1024xbf16, #tpu.memory_space<vmem>>, vector<16x1024xbf16>
    tpu.vector_store %arg9[%c64, %c0_31], %27 {strides = array<i32>} : memref<144x1024xbf16, #tpu.memory_space<vmem>>, vector<16x1024xbf16>,
    %c0_32 = arith.constant 0 : index
    %c29 = arith.constant 29 : index
    %29 = vector.load %arg8[%c0_32, %c29] : memref<16x1280xbf16, #tpu.memory_space<vmem>>, vector<16x1024xbf16>
    %c80 = arith.constant 80 : index
    %c0_33 = arith.constant 0 : index
    %30 = vector.load %arg9[%c80, %c0_33] : memref<144x1024xbf16, #tpu.memory_space<vmem>>, vector<16x1024xbf16>
    tpu.vector_store %arg9[%c80, %c0_33], %29 {strides = array<i32>} : memref<144x1024xbf16, #tpu.memory_space<vmem>>, vector<16x1024xbf16>,
    %c0_34 = arith.constant 0 : index
    %c37 = arith.constant 37 : index
    %31 = vector.load %arg8[%c0_34, %c37] : memref<16x1280xbf16, #tpu.memory_space<vmem>>, vector<16x1024xbf16>
    %c96 = arith.constant 96 : index
    %c0_35 = arith.constant 0 : index
    %32 = vector.load %arg9[%c96, %c0_35] : memref<144x1024xbf16, #tpu.memory_space<vmem>>, vector<16x1024xbf16>
    tpu.vector_store %arg9[%c96, %c0_35], %31 {strides = array<i32>} : memref<144x1024xbf16, #tpu.memory_space<vmem>>, vector<16x1024xbf16>,
    %c0_36 = arith.constant 0 : index
    %c38 = arith.constant 38 : index
    %33 = vector.load %arg8[%c0_36, %c38] : memref<16x1280xbf16, #tpu.memory_space<vmem>>, vector<16x1024xbf16>
    %c112 = arith.constant 112 : index
    %c0_37 = arith.constant 0 : index
    %34 = vector.load %arg9[%c112, %c0_37] : memref<144x1024xbf16, #tpu.memory_space<vmem>>, vector<16x1024xbf16>
    tpu.vector_store %arg9[%c112, %c0_37], %33 {strides = array<i32>} : memref<144x1024xbf16, #tpu.memory_space<vmem>>, vector<16x1024xbf16>,
    %c0_38 = arith.constant 0 : index
    %c39 = arith.constant 39 : index
    %35 = vector.load %arg8[%c0_38, %c39] : memref<16x1280xbf16, #tpu.memory_space<vmem>>, vector<16x1024xbf16>
    %c128_39 = arith.constant 128 : index
    %c0_40 = arith.constant 0 : index
    %36 = vector.load %arg9[%c128_39, %c0_40] : memref<144x1024xbf16, #tpu.memory_space<vmem>>, vector<16x1024xbf16>
    tpu.vector_store %arg9[%c128_39, %c0_40], %35 {strides = array<i32>} : memref<144x1024xbf16, #tpu.memory_space<vmem>>, vector<16x1024xbf16>,
    %c0_41 = arith.constant 0 : index
    %c0_42 = arith.constant 0 : index
    %c0_43 = arith.constant 0 : index
    %37 = vector.load %arg2[%c0_41, %c0_42, %c0_43] : memref<3x8x144xbf16, #tpu.memory_space<vmem>>, vector<1x8x144xbf16>
    %38 = vector.shape_cast %37 : vector<1x8x144xbf16> to vector<8x144xbf16>
    %c0_44 = arith.constant 0 : index
    %c0_45 = arith.constant 0 : index
    %39 = vector.load %arg9[%c0_44, %c0_45] : memref<144x1024xbf16, #tpu.memory_space<vmem>>, vector<144x1024xbf16>
    %cst_46 = arith.constant dense<0.000000e+00> : vector<8x1024xf32>
    %40 = tpu.matmul %38, %39, %cst_46 {dimension_numbers = #tpu.dot_dimension_numbers<[1], [0], [0], [1], [0, 0, 1, 1], [], []>} : vector<8x144xbf16>, vector<144x1024xbf16>, vector<8x1024xf32> -> vector<8x1024xf32>
    %41 = arith.addf %18, %40 : vector<8x1024xf32>
    %c0_47 = arith.constant 0 : index
    %c117 = arith.constant 117 : index
    %42 = vector.load %arg8[%c0_47, %c117] : memref<16x1280xbf16, #tpu.memory_space<vmem>>, vector<16x1024xbf16>
    %c0_48 = arith.constant 0 : index
    %c0_49 = arith.constant 0 : index
    %43 = vector.load %arg9[%c0_48, %c0_49] : memref<144x1024xbf16, #tpu.memory_space<vmem>>, vector<16x1024xbf16>
    tpu.vector_store %arg9[%c0_48, %c0_49], %42 {strides = array<i32>} : memref<144x1024xbf16, #tpu.memory_space<vmem>>, vector<16x1024xbf16>,
    %c0_50 = arith.constant 0 : index
    %c118 = arith.constant 118 : index
    %44 = vector.load %arg8[%c0_50, %c118] : memref<16x1280xbf16, #tpu.memory_space<vmem>>, vector<16x1024xbf16>
    %c16_51 = arith.constant 16 : index
    %c0_52 = arith.constant 0 : index
    %45 = vector.load %arg9[%c16_51, %c0_52] : memref<144x1024xbf16, #tpu.memory_space<vmem>>, vector<16x1024xbf16>
    tpu.vector_store %arg9[%c16_51, %c0_52], %44 {strides = array<i32>} : memref<144x1024xbf16, #tpu.memory_space<vmem>>, vector<16x1024xbf16>,
    %c0_53 = arith.constant 0 : index
    %c119 = arith.constant 119 : index
    %46 = vector.load %arg8[%c0_53, %c119] : memref<16x1280xbf16, #tpu.memory_space<vmem>>, vector<16x1024xbf16>
    %c32_54 = arith.constant 32 : index
    %c0_55 = arith.constant 0 : index
    %47 = vector.load %arg9[%c32_54, %c0_55] : memref<144x1024xbf16, #tpu.memory_space<vmem>>, vector<16x1024xbf16>
    tpu.vector_store %arg9[%c32_54, %c0_55], %46 {strides = array<i32>} : memref<144x1024xbf16, #tpu.memory_space<vmem>>, vector<16x1024xbf16>,
    %c0_56 = arith.constant 0 : index
    %c127 = arith.constant 127 : index
    %48 = vector.load %arg8[%c0_56, %c127] : memref<16x1280xbf16, #tpu.memory_space<vmem>>, vector<16x1024xbf16>
    %c48_57 = arith.constant 48 : index
    %c0_58 = arith.constant 0 : index
    %49 = vector.load %arg9[%c48_57, %c0_58] : memref<144x1024xbf16, #tpu.memory_space<vmem>>, vector<16x1024xbf16>
    tpu.vector_store %arg9[%c48_57, %c0_58], %48 {strides = array<i32>} : memref<144x1024xbf16, #tpu.memory_space<vmem>>, vector<16x1024xbf16>,
    %c0_59 = arith.constant 0 : index
    %c128_60 = arith.constant 128 : index
    %50 = vector.load %arg8[%c0_59, %c128_60] : memref<16x1280xbf16, #tpu.memory_space<vmem>>, vector<16x1024xbf16>
    %c64_61 = arith.constant 64 : index
    %c0_62 = arith.constant 0 : index
    %51 = vector.load %arg9[%c64_61, %c0_62] : memref<144x1024xbf16, #tpu.memory_space<vmem>>, vector<16x1024xbf16>
    tpu.vector_store %arg9[%c64_61, %c0_62], %50 {strides = array<i32>} : memref<144x1024xbf16, #tpu.memory_space<vmem>>, vector<16x1024xbf16>,
    %c0_63 = arith.constant 0 : index
    %c129 = arith.constant 129 : index
    %52 = vector.load %arg8[%c0_63, %c129] : memref<16x1280xbf16, #tpu.memory_space<vmem>>, vector<16x1024xbf16>
    %c80_64 = arith.constant 80 : index
    %c0_65 = arith.constant 0 : index
    %53 = vector.load %arg9[%c80_64, %c0_65] : memref<144x1024xbf16, #tpu.memory_space<vmem>>, vector<16x1024xbf16>
    tpu.vector_store %arg9[%c80_64, %c0_65], %52 {strides = array<i32>} : memref<144x1024xbf16, #tpu.memory_space<vmem>>, vector<16x1024xbf16>,
    %c0_66 = arith.constant 0 : index
    %c137 = arith.constant 137 : index
    %54 = vector.load %arg8[%c0_66, %c137] : memref<16x1280xbf16, #tpu.memory_space<vmem>>, vector<16x1024xbf16>
    %c96_67 = arith.constant 96 : index
    %c0_68 = arith.constant 0 : index
    %55 = vector.load %arg9[%c96_67, %c0_68] : memref<144x1024xbf16, #tpu.memory_space<vmem>>, vector<16x1024xbf16>
    tpu.vector_store %arg9[%c96_67, %c0_68], %54 {strides = array<i32>} : memref<144x1024xbf16, #tpu.memory_space<vmem>>, vector<16x1024xbf16>,
    %c0_69 = arith.constant 0 : index
    %c138 = arith.constant 138 : index
    %56 = vector.load %arg8[%c0_69, %c138] : memref<16x1280xbf16, #tpu.memory_space<vmem>>, vector<16x1024xbf16>
    %c112_70 = arith.constant 112 : index
    %c0_71 = arith.constant 0 : index
    %57 = vector.load %arg9[%c112_70, %c0_71] : memref<144x1024xbf16, #tpu.memory_space<vmem>>, vector<16x1024xbf16>
    tpu.vector_store %arg9[%c112_70, %c0_71], %56 {strides = array<i32>} : memref<144x1024xbf16, #tpu.memory_space<vmem>>, vector<16x1024xbf16>,
    %c0_72 = arith.constant 0 : index
    %c139 = arith.constant 139 : index
    %58 = vector.load %arg8[%c0_72, %c139] : memref<16x1280xbf16, #tpu.memory_space<vmem>>, vector<16x1024xbf16>
    %c128_73 = arith.constant 128 : index
    %c0_74 = arith.constant 0 : index
    %59 = vector.load %arg9[%c128_73, %c0_74] : memref<144x1024xbf16, #tpu.memory_space<vmem>>, vector<16x1024xbf16>
    tpu.vector_store %arg9[%c128_73, %c0_74], %58 {strides = array<i32>} : memref<144x1024xbf16, #tpu.memory_space<vmem>>, vector<16x1024xbf16>,
    %c1_75 = arith.constant 1 : index
    %c0_76 = arith.constant 0 : index
    %c0_77 = arith.constant 0 : index
    %60 = vector.load %arg2[%c1_75, %c0_76, %c0_77] : memref<3x8x144xbf16, #tpu.memory_space<vmem>>, vector<1x8x144xbf16>
    %61 = vector.shape_cast %60 : vector<1x8x144xbf16> to vector<8x144xbf16>
    %c0_78 = arith.constant 0 : index
    %c0_79 = arith.constant 0 : index
    %62 = vector.load %arg9[%c0_78, %c0_79] : memref<144x1024xbf16, #tpu.memory_space<vmem>>, vector<144x1024xbf16>
    %cst_80 = arith.constant dense<0.000000e+00> : vector<8x1024xf32>
    %63 = tpu.matmul %61, %62, %cst_80 {dimension_numbers = #tpu.dot_dimension_numbers<[1], [0], [0], [1], [0, 0, 1, 1], [], []>} : vector<8x144xbf16>, vector<144x1024xbf16>, vector<8x1024xf32> -> vector<8x1024xf32>
    %64 = arith.addf %41, %63 : vector<8x1024xf32>
    %c0_81 = arith.constant 0 : index
    %c217 = arith.constant 217 : index
    %65 = vector.load %arg8[%c0_81, %c217] : memref<16x1280xbf16, #tpu.memory_space<vmem>>, vector<16x1024xbf16>
    %c0_82 = arith.constant 0 : index
    %c0_83 = arith.constant 0 : index
    %66 = vector.load %arg9[%c0_82, %c0_83] : memref<144x1024xbf16, #tpu.memory_space<vmem>>, vector<16x1024xbf16>
    tpu.vector_store %arg9[%c0_82, %c0_83], %65 {strides = array<i32>} : memref<144x1024xbf16, #tpu.memory_space<vmem>>, vector<16x1024xbf16>,
    %c0_84 = arith.constant 0 : index
    %c218 = arith.constant 218 : index
    %67 = vector.load %arg8[%c0_84, %c218] : memref<16x1280xbf16, #tpu.memory_space<vmem>>, vector<16x1024xbf16>
    %c16_85 = arith.constant 16 : index
    %c0_86 = arith.constant 0 : index
    %68 = vector.load %arg9[%c16_85, %c0_86] : memref<144x1024xbf16, #tpu.memory_space<vmem>>, vector<16x1024xbf16>
    tpu.vector_store %arg9[%c16_85, %c0_86], %67 {strides = array<i32>} : memref<144x1024xbf16, #tpu.memory_space<vmem>>, vector<16x1024xbf16>,
    %c0_87 = arith.constant 0 : index
    %c219 = arith.constant 219 : index
    %69 = vector.load %arg8[%c0_87, %c219] : memref<16x1280xbf16, #tpu.memory_space<vmem>>, vector<16x1024xbf16>
    %c32_88 = arith.constant 32 : index
    %c0_89 = arith.constant 0 : index
    %70 = vector.load %arg9[%c32_88, %c0_89] : memref<144x1024xbf16, #tpu.memory_space<vmem>>, vector<16x1024xbf16>
    tpu.vector_store %arg9[%c32_88, %c0_89], %69 {strides = array<i32>} : memref<144x1024xbf16, #tpu.memory_space<vmem>>, vector<16x1024xbf16>,
    %c0_90 = arith.constant 0 : index
    %c227 = arith.constant 227 : index
    %71 = vector.load %arg8[%c0_90, %c227] : memref<16x1280xbf16, #tpu.memory_space<vmem>>, vector<16x1024xbf16>
    %c48_91 = arith.constant 48 : index
    %c0_92 = arith.constant 0 : index
    %72 = vector.load %arg9[%c48_91, %c0_92] : memref<144x1024xbf16, #tpu.memory_space<vmem>>, vector<16x1024xbf16>
    tpu.vector_store %arg9[%c48_91, %c0_92], %71 {strides = array<i32>} : memref<144x1024xbf16, #tpu.memory_space<vmem>>, vector<16x1024xbf16>,
    %c0_93 = arith.constant 0 : index
    %c228 = arith.constant 228 : index
    %73 = vector.load %arg8[%c0_93, %c228] : memref<16x1280xbf16, #tpu.memory_space<vmem>>, vector<16x1024xbf16>
    %c64_94 = arith.constant 64 : index
    %c0_95 = arith.constant 0 : index
    %74 = vector.load %arg9[%c64_94, %c0_95] : memref<144x1024xbf16, #tpu.memory_space<vmem>>, vector<16x1024xbf16>
    tpu.vector_store %arg9[%c64_94, %c0_95], %73 {strides = array<i32>} : memref<144x1024xbf16, #tpu.memory_space<vmem>>, vector<16x1024xbf16>,
    %c0_96 = arith.constant 0 : index
    %c229 = arith.constant 229 : index
    %75 = vector.load %arg8[%c0_96, %c229] : memref<16x1280xbf16, #tpu.memory_space<vmem>>, vector<16x1024xbf16>
    %c80_97 = arith.constant 80 : index
    %c0_98 = arith.constant 0 : index
    %76 = vector.load %arg9[%c80_97, %c0_98] : memref<144x1024xbf16, #tpu.memory_space<vmem>>, vector<16x1024xbf16>
    tpu.vector_store %arg9[%c80_97, %c0_98], %75 {strides = array<i32>} : memref<144x1024xbf16, #tpu.memory_space<vmem>>, vector<16x1024xbf16>,
    %c0_99 = arith.constant 0 : index
    %c237 = arith.constant 237 : index
    %77 = vector.load %arg8[%c0_99, %c237] : memref<16x1280xbf16, #tpu.memory_space<vmem>>, vector<16x1024xbf16>
    %c96_100 = arith.constant 96 : index
    %c0_101 = arith.constant 0 : index
    %78 = vector.load %arg9[%c96_100, %c0_101] : memref<144x1024xbf16, #tpu.memory_space<vmem>>, vector<16x1024xbf16>
    tpu.vector_store %arg9[%c96_100, %c0_101], %77 {strides = array<i32>} : memref<144x1024xbf16, #tpu.memory_space<vmem>>, vector<16x1024xbf16>,
    %c0_102 = arith.constant 0 : index
    %c238 = arith.constant 238 : index
    %79 = vector.load %arg8[%c0_102, %c238] : memref<16x1280xbf16, #tpu.memory_space<vmem>>, vector<16x1024xbf16>
    %c112_103 = arith.constant 112 : index
    %c0_104 = arith.constant 0 : index
    %80 = vector.load %arg9[%c112_103, %c0_104] : memref<144x1024xbf16, #tpu.memory_space<vmem>>, vector<16x1024xbf16>
    tpu.vector_store %arg9[%c112_103, %c0_104], %79 {strides = array<i32>} : memref<144x1024xbf16, #tpu.memory_space<vmem>>, vector<16x1024xbf16>,
    %c0_105 = arith.constant 0 : index
    %c239 = arith.constant 239 : index
    %81 = vector.load %arg8[%c0_105, %c239] : memref<16x1280xbf16, #tpu.memory_space<vmem>>, vector<16x1024xbf16>
    %c128_106 = arith.constant 128 : index
    %c0_107 = arith.constant 0 : index
    %82 = vector.load %arg9[%c128_106, %c0_107] : memref<144x1024xbf16, #tpu.memory_space<vmem>>, vector<16x1024xbf16>
    tpu.vector_store %arg9[%c128_106, %c0_107], %81 {strides = array<i32>} : memref<144x1024xbf16, #tpu.memory_space<vmem>>, vector<16x1024xbf16>,
    %c2_108 = arith.constant 2 : index
    %c0_109 = arith.constant 0 : index
    %c0_110 = arith.constant 0 : index
    %83 = vector.load %arg2[%c2_108, %c0_109, %c0_110] : memref<3x8x144xbf16, #tpu.memory_space<vmem>>, vector<1x8x144xbf16>
    %84 = vector.shape_cast %83 : vector<1x8x144xbf16> to vector<8x144xbf16>
    %c0_111 = arith.constant 0 : index
    %c0_112 = arith.constant 0 : index
    %85 = vector.load %arg9[%c0_111, %c0_112] : memref<144x1024xbf16, #tpu.memory_space<vmem>>, vector<144x1024xbf16>
    %cst_113 = arith.constant dense<0.000000e+00> : vector<8x1024xf32>
    %86 = tpu.matmul %84, %85, %cst_113 {dimension_numbers = #tpu.dot_dimension_numbers<[1], [0], [0], [1], [0, 0, 1, 1], [], []>} : vector<8x144xbf16>, vector<144x1024xbf16>, vector<8x1024xf32> -> vector<8x1024xf32>
    %87 = arith.addf %64, %86 : vector<8x1024xf32>
    %cst_114 = arith.constant 0.000000e+00 : f32
    %88 = vector.broadcast %cst_114 : f32 to vector<8x1024xf32>
    %89 = arith.maximumf %87, %88 : vector<8x1024xf32>
    %90 = vector.broadcast %11 : vector<1x1024xf32> to vector<8x1024xf32>
    %91 = arith.mulf %89, %90 : vector<8x1024xf32>
    %92 = arith.truncf %91 : vector<8x1024xf32> to vector<8x1024xbf16>
    %c0_115 = arith.constant 0 : index
    %c128_116 = arith.constant 128 : index
    %93 = vector.load %arg8[%c0_115, %c128_116] : memref<16x1280xbf16, #tpu.memory_space<vmem>>, vector<8x1024xbf16>
    tpu.vector_store %arg8[%c0_115, %c128_116], %92 {strides = array<i32>} : memref<16x1280xbf16, #tpu.memory_space<vmem>>, vector<8x1024xbf16>,
    %c0_117 = arith.constant 0 : index
    %c0_118 = arith.constant 0 : index
    %94 = vector.load %arg5[%c0_117, %c0_118] : memref<8x1024xf32, #tpu.memory_space<vmem>>, vector<8x1024xf32>
    %c0_119 = arith.constant 0 : index
    %c17_120 = arith.constant 17 : index
    %95 = vector.load %arg8[%c0_119, %c17_120] : memref<16x1280xbf16, #tpu.memory_space<vmem>>, vector<16x1024xbf16>
    %c0_121 = arith.constant 0 : index
    %c0_122 = arith.constant 0 : index
    %96 = vector.load %arg9[%c0_121, %c0_122] : memref<144x1024xbf16, #tpu.memory_space<vmem>>, vector<16x1024xbf16>
    tpu.vector_store %arg9[%c0_121, %c0_122], %95 {strides = array<i32>} : memref<144x1024xbf16, #tpu.memory_space<vmem>>, vector<16x1024xbf16>,
    %c0_123 = arith.constant 0 : index
    %c18_124 = arith.constant 18 : index
    %97 = vector.load %arg8[%c0_123, %c18_124] : memref<16x1280xbf16, #tpu.memory_space<vmem>>, vector<16x1024xbf16>
    %c16_125 = arith.constant 16 : index
    %c0_126 = arith.constant 0 : index
    %98 = vector.load %arg9[%c16_125, %c0_126] : memref<144x1024xbf16, #tpu.memory_space<vmem>>, vector<16x1024xbf16>
    tpu.vector_store %arg9[%c16_125, %c0_126], %97 {strides = array<i32>} : memref<144x1024xbf16, #tpu.memory_space<vmem>>, vector<16x1024xbf16>,
    %c0_127 = arith.constant 0 : index
    %c19_128 = arith.constant 19 : index
    %99 = vector.load %arg8[%c0_127, %c19_128] : memref<16x1280xbf16, #tpu.memory_space<vmem>>, vector<16x1024xbf16>
    %c32_129 = arith.constant 32 : index
    %c0_130 = arith.constant 0 : index
    %100 = vector.load %arg9[%c32_129, %c0_130] : memref<144x1024xbf16, #tpu.memory_space<vmem>>, vector<16x1024xbf16>
    tpu.vector_store %arg9[%c32_129, %c0_130], %99 {strides = array<i32>} : memref<144x1024xbf16, #tpu.memory_space<vmem>>, vector<16x1024xbf16>,
    %c0_131 = arith.constant 0 : index
    %c27_132 = arith.constant 27 : index
    %101 = vector.load %arg8[%c0_131, %c27_132] : memref<16x1280xbf16, #tpu.memory_space<vmem>>, vector<16x1024xbf16>
    %c48_133 = arith.constant 48 : index
    %c0_134 = arith.constant 0 : index
    %102 = vector.load %arg9[%c48_133, %c0_134] : memref<144x1024xbf16, #tpu.memory_space<vmem>>, vector<16x1024xbf16>
    tpu.vector_store %arg9[%c48_133, %c0_134], %101 {strides = array<i32>} : memref<144x1024xbf16, #tpu.memory_space<vmem>>, vector<16x1024xbf16>,
    %c0_135 = arith.constant 0 : index
    %c28_136 = arith.constant 28 : index
    %103 = vector.load %arg8[%c0_135, %c28_136] : memref<16x1280xbf16, #tpu.memory_space<vmem>>, vector<16x1024xbf16>
    %c64_137 = arith.constant 64 : index
    %c0_138 = arith.constant 0 : index
    %104 = vector.load %arg9[%c64_137, %c0_138] : memref<144x1024xbf16, #tpu.memory_space<vmem>>, vector<16x1024xbf16>
    tpu.vector_store %arg9[%c64_137, %c0_138], %103 {strides = array<i32>} : memref<144x1024xbf16, #tpu.memory_space<vmem>>, vector<16x1024xbf16>,
    %c0_139 = arith.constant 0 : index
    %c29_140 = arith.constant 29 : index
    %105 = vector.load %arg8[%c0_139, %c29_140] : memref<16x1280xbf16, #tpu.memory_space<vmem>>, vector<16x1024xbf16>
    %c80_141 = arith.constant 80 : index
    %c0_142 = arith.constant 0 : index
    %106 = vector.load %arg9[%c80_141, %c0_142] : memref<144x1024xbf16, #tpu.memory_space<vmem>>, vector<16x1024xbf16>
    tpu.vector_store %arg9[%c80_141, %c0_142], %105 {strides = array<i32>} : memref<144x1024xbf16, #tpu.memory_space<vmem>>, vector<16x1024xbf16>,
    %c0_143 = arith.constant 0 : index
    %c37_144 = arith.constant 37 : index
    %107 = vector.load %arg8[%c0_143, %c37_144] : memref<16x1280xbf16, #tpu.memory_space<vmem>>, vector<16x1024xbf16>
    %c96_145 = arith.constant 96 : index
    %c0_146 = arith.constant 0 : index
    %108 = vector.load %arg9[%c96_145, %c0_146] : memref<144x1024xbf16, #tpu.memory_space<vmem>>, vector<16x1024xbf16>
    tpu.vector_store %arg9[%c96_145, %c0_146], %107 {strides = array<i32>} : memref<144x1024xbf16, #tpu.memory_space<vmem>>, vector<16x1024xbf16>,
    %c0_147 = arith.constant 0 : index
    %c38_148 = arith.constant 38 : index
    %109 = vector.load %arg8[%c0_147, %c38_148] : memref<16x1280xbf16, #tpu.memory_space<vmem>>, vector<16x1024xbf16>
    %c112_149 = arith.constant 112 : index
    %c0_150 = arith.constant 0 : index
    %110 = vector.load %arg9[%c112_149, %c0_150] : memref<144x1024xbf16, #tpu.memory_space<vmem>>, vector<16x1024xbf16>
    tpu.vector_store %arg9[%c112_149, %c0_150], %109 {strides = array<i32>} : memref<144x1024xbf16, #tpu.memory_space<vmem>>, vector<16x1024xbf16>,
    %c0_151 = arith.constant 0 : index
    %c39_152 = arith.constant 39 : index
    %111 = vector.load %arg8[%c0_151, %c39_152] : memref<16x1280xbf16, #tpu.memory_space<vmem>>, vector<16x1024xbf16>
    %c128_153 = arith.constant 128 : index
    %c0_154 = arith.constant 0 : index
    %112 = vector.load %arg9[%c128_153, %c0_154] : memref<144x1024xbf16, #tpu.memory_space<vmem>>, vector<16x1024xbf16>
    tpu.vector_store %arg9[%c128_153, %c0_154], %111 {strides = array<i32>} : memref<144x1024xbf16, #tpu.memory_space<vmem>>, vector<16x1024xbf16>,
    %c0_155 = arith.constant 0 : index
    %c0_156 = arith.constant 0 : index
    %c0_157 = arith.constant 0 : index
    %113 = vector.load %arg4[%c0_155, %c0_156, %c0_157] : memref<3x8x144xbf16, #tpu.memory_space<vmem>>, vector<1x8x144xbf16>
    %114 = vector.shape_cast %113 : vector<1x8x144xbf16> to vector<8x144xbf16>
    %c0_158 = arith.constant 0 : index
    %c0_159 = arith.constant 0 : index
    %115 = vector.load %arg9[%c0_158, %c0_159] : memref<144x1024xbf16, #tpu.memory_space<vmem>>, vector<144x1024xbf16>
    %cst_160 = arith.constant dense<0.000000e+00> : vector<8x1024xf32>
    %116 = tpu.matmul %114, %115, %cst_160 {dimension_numbers = #tpu.dot_dimension_numbers<[1], [0], [0], [1], [0, 0, 1, 1], [], []>} : vector<8x144xbf16>, vector<144x1024xbf16>, vector<8x1024xf32> -> vector<8x1024xf32>
    %117 = arith.addf %94, %116 : vector<8x1024xf32>
    %c0_161 = arith.constant 0 : index
    %c117_162 = arith.constant 117 : index
    %118 = vector.load %arg8[%c0_161, %c117_162] : memref<16x1280xbf16, #tpu.memory_space<vmem>>, vector<16x1024xbf16>
    %c0_163 = arith.constant 0 : index
    %c0_164 = arith.constant 0 : index
    %119 = vector.load %arg9[%c0_163, %c0_164] : memref<144x1024xbf16, #tpu.memory_space<vmem>>, vector<16x1024xbf16>
    tpu.vector_store %arg9[%c0_163, %c0_164], %118 {strides = array<i32>} : memref<144x1024xbf16, #tpu.memory_space<vmem>>, vector<16x1024xbf16>,
    %c0_165 = arith.constant 0 : index
    %c118_166 = arith.constant 118 : index
    %120 = vector.load %arg8[%c0_165, %c118_166] : memref<16x1280xbf16, #tpu.memory_space<vmem>>, vector<16x1024xbf16>
    %c16_167 = arith.constant 16 : index
    %c0_168 = arith.constant 0 : index
    %121 = vector.load %arg9[%c16_167, %c0_168] : memref<144x1024xbf16, #tpu.memory_space<vmem>>, vector<16x1024xbf16>
    tpu.vector_store %arg9[%c16_167, %c0_168], %120 {strides = array<i32>} : memref<144x1024xbf16, #tpu.memory_space<vmem>>, vector<16x1024xbf16>,
    %c0_169 = arith.constant 0 : index
    %c119_170 = arith.constant 119 : index
    %122 = vector.load %arg8[%c0_169, %c119_170] : memref<16x1280xbf16, #tpu.memory_space<vmem>>, vector<16x1024xbf16>
    %c32_171 = arith.constant 32 : index
    %c0_172 = arith.constant 0 : index
    %123 = vector.load %arg9[%c32_171, %c0_172] : memref<144x1024xbf16, #tpu.memory_space<vmem>>, vector<16x1024xbf16>
    tpu.vector_store %arg9[%c32_171, %c0_172], %122 {strides = array<i32>} : memref<144x1024xbf16, #tpu.memory_space<vmem>>, vector<16x1024xbf16>,
    %c0_173 = arith.constant 0 : index
    %c127_174 = arith.constant 127 : index
    %124 = vector.load %arg8[%c0_173, %c127_174] : memref<16x1280xbf16, #tpu.memory_space<vmem>>, vector<16x1024xbf16>
    %c48_175 = arith.constant 48 : index
    %c0_176 = arith.constant 0 : index
    %125 = vector.load %arg9[%c48_175, %c0_176] : memref<144x1024xbf16, #tpu.memory_space<vmem>>, vector<16x1024xbf16>
    tpu.vector_store %arg9[%c48_175, %c0_176], %124 {strides = array<i32>} : memref<144x1024xbf16, #tpu.memory_space<vmem>>, vector<16x1024xbf16>,
    %c0_177 = arith.constant 0 : index
    %c128_178 = arith.constant 128 : index
    %126 = vector.load %arg8[%c0_177, %c128_178] : memref<16x1280xbf16, #tpu.memory_space<vmem>>, vector<16x1024xbf16>
    %c64_179 = arith.constant 64 : index
    %c0_180 = arith.constant 0 : index
    %127 = vector.load %arg9[%c64_179, %c0_180] : memref<144x1024xbf16, #tpu.memory_space<vmem>>, vector<16x1024xbf16>
    tpu.vector_store %arg9[%c64_179, %c0_180], %126 {strides = array<i32>} : memref<144x1024xbf16, #tpu.memory_space<vmem>>, vector<16x1024xbf16>,
    %c0_181 = arith.constant 0 : index
    %c129_182 = arith.constant 129 : index
    %128 = vector.load %arg8[%c0_181, %c129_182] : memref<16x1280xbf16, #tpu.memory_space<vmem>>, vector<16x1024xbf16>
    %c80_183 = arith.constant 80 : index
    %c0_184 = arith.constant 0 : index
    %129 = vector.load %arg9[%c80_183, %c0_184] : memref<144x1024xbf16, #tpu.memory_space<vmem>>, vector<16x1024xbf16>
    tpu.vector_store %arg9[%c80_183, %c0_184], %128 {strides = array<i32>} : memref<144x1024xbf16, #tpu.memory_space<vmem>>, vector<16x1024xbf16>,
    %c0_185 = arith.constant 0 : index
    %c137_186 = arith.constant 137 : index
    %130 = vector.load %arg8[%c0_185, %c137_186] : memref<16x1280xbf16, #tpu.memory_space<vmem>>, vector<16x1024xbf16>
    %c96_187 = arith.constant 96 : index
    %c0_188 = arith.constant 0 : index
    %131 = vector.load %arg9[%c96_187, %c0_188] : memref<144x1024xbf16, #tpu.memory_space<vmem>>, vector<16x1024xbf16>
    tpu.vector_store %arg9[%c96_187, %c0_188], %130 {strides = array<i32>} : memref<144x1024xbf16, #tpu.memory_space<vmem>>, vector<16x1024xbf16>,
    %c0_189 = arith.constant 0 : index
    %c138_190 = arith.constant 138 : index
    %132 = vector.load %arg8[%c0_189, %c138_190] : memref<16x1280xbf16, #tpu.memory_space<vmem>>, vector<16x1024xbf16>
    %c112_191 = arith.constant 112 : index
    %c0_192 = arith.constant 0 : index
    %133 = vector.load %arg9[%c112_191, %c0_192] : memref<144x1024xbf16, #tpu.memory_space<vmem>>, vector<16x1024xbf16>
    tpu.vector_store %arg9[%c112_191, %c0_192], %132 {strides = array<i32>} : memref<144x1024xbf16, #tpu.memory_space<vmem>>, vector<16x1024xbf16>,
    %c0_193 = arith.constant 0 : index
    %c139_194 = arith.constant 139 : index
    %134 = vector.load %arg8[%c0_193, %c139_194] : memref<16x1280xbf16, #tpu.memory_space<vmem>>, vector<16x1024xbf16>
    %c128_195 = arith.constant 128 : index
    %c0_196 = arith.constant 0 : index
    %135 = vector.load %arg9[%c128_195, %c0_196] : memref<144x1024xbf16, #tpu.memory_space<vmem>>, vector<16x1024xbf16>
    tpu.vector_store %arg9[%c128_195, %c0_196], %134 {strides = array<i32>} : memref<144x1024xbf16, #tpu.memory_space<vmem>>, vector<16x1024xbf16>,
    %c1_197 = arith.constant 1 : index
    %c0_198 = arith.constant 0 : index
    %c0_199 = arith.constant 0 : index
    %136 = vector.load %arg4[%c1_197, %c0_198, %c0_199] : memref<3x8x144xbf16, #tpu.memory_space<vmem>>, vector<1x8x144xbf16>
    %137 = vector.shape_cast %136 : vector<1x8x144xbf16> to vector<8x144xbf16>
    %c0_200 = arith.constant 0 : index
    %c0_201 = arith.constant 0 : index
    %138 = vector.load %arg9[%c0_200, %c0_201] : memref<144x1024xbf16, #tpu.memory_space<vmem>>, vector<144x1024xbf16>
    %cst_202 = arith.constant dense<0.000000e+00> : vector<8x1024xf32>
    %139 = tpu.matmul %137, %138, %cst_202 {dimension_numbers = #tpu.dot_dimension_numbers<[1], [0], [0], [1], [0, 0, 1, 1], [], []>} : vector<8x144xbf16>, vector<144x1024xbf16>, vector<8x1024xf32> -> vector<8x1024xf32>
    %140 = arith.addf %117, %139 : vector<8x1024xf32>
    %c0_203 = arith.constant 0 : index
    %c217_204 = arith.constant 217 : index
    %141 = vector.load %arg8[%c0_203, %c217_204] : memref<16x1280xbf16, #tpu.memory_space<vmem>>, vector<16x1024xbf16>
    %c0_205 = arith.constant 0 : index
    %c0_206 = arith.constant 0 : index
    %142 = vector.load %arg9[%c0_205, %c0_206] : memref<144x1024xbf16, #tpu.memory_space<vmem>>, vector<16x1024xbf16>
    tpu.vector_store %arg9[%c0_205, %c0_206], %141 {strides = array<i32>} : memref<144x1024xbf16, #tpu.memory_space<vmem>>, vector<16x1024xbf16>,
    %c0_207 = arith.constant 0 : index
    %c218_208 = arith.constant 218 : index
    %143 = vector.load %arg8[%c0_207, %c218_208] : memref<16x1280xbf16, #tpu.memory_space<vmem>>, vector<16x1024xbf16>
    %c16_209 = arith.constant 16 : index
    %c0_210 = arith.constant 0 : index
    %144 = vector.load %arg9[%c16_209, %c0_210] : memref<144x1024xbf16, #tpu.memory_space<vmem>>, vector<16x1024xbf16>
    tpu.vector_store %arg9[%c16_209, %c0_210], %143 {strides = array<i32>} : memref<144x1024xbf16, #tpu.memory_space<vmem>>, vector<16x1024xbf16>,
    %c0_211 = arith.constant 0 : index
    %c219_212 = arith.constant 219 : index
    %145 = vector.load %arg8[%c0_211, %c219_212] : memref<16x1280xbf16, #tpu.memory_space<vmem>>, vector<16x1024xbf16>
    %c32_213 = arith.constant 32 : index
    %c0_214 = arith.constant 0 : index
    %146 = vector.load %arg9[%c32_213, %c0_214] : memref<144x1024xbf16, #tpu.memory_space<vmem>>, vector<16x1024xbf16>
    tpu.vector_store %arg9[%c32_213, %c0_214], %145 {strides = array<i32>} : memref<144x1024xbf16, #tpu.memory_space<vmem>>, vector<16x1024xbf16>,
    %c0_215 = arith.constant 0 : index
    %c227_216 = arith.constant 227 : index
    %147 = vector.load %arg8[%c0_215, %c227_216] : memref<16x1280xbf16, #tpu.memory_space<vmem>>, vector<16x1024xbf16>
    %c48_217 = arith.constant 48 : index
    %c0_218 = arith.constant 0 : index
    %148 = vector.load %arg9[%c48_217, %c0_218] : memref<144x1024xbf16, #tpu.memory_space<vmem>>, vector<16x1024xbf16>
    tpu.vector_store %arg9[%c48_217, %c0_218], %147 {strides = array<i32>} : memref<144x1024xbf16, #tpu.memory_space<vmem>>, vector<16x1024xbf16>,
    %c0_219 = arith.constant 0 : index
    %c228_220 = arith.constant 228 : index
    %149 = vector.load %arg8[%c0_219, %c228_220] : memref<16x1280xbf16, #tpu.memory_space<vmem>>, vector<16x1024xbf16>
    %c64_221 = arith.constant 64 : index
    %c0_222 = arith.constant 0 : index
    %150 = vector.load %arg9[%c64_221, %c0_222] : memref<144x1024xbf16, #tpu.memory_space<vmem>>, vector<16x1024xbf16>
    tpu.vector_store %arg9[%c64_221, %c0_222], %149 {strides = array<i32>} : memref<144x1024xbf16, #tpu.memory_space<vmem>>, vector<16x1024xbf16>,
    %c0_223 = arith.constant 0 : index
    %c229_224 = arith.constant 229 : index
    %151 = vector.load %arg8[%c0_223, %c229_224] : memref<16x1280xbf16, #tpu.memory_space<vmem>>, vector<16x1024xbf16>
    %c80_225 = arith.constant 80 : index
    %c0_226 = arith.constant 0 : index
    %152 = vector.load %arg9[%c80_225, %c0_226] : memref<144x1024xbf16, #tpu.memory_space<vmem>>, vector<16x1024xbf16>
    tpu.vector_store %arg9[%c80_225, %c0_226], %151 {strides = array<i32>} : memref<144x1024xbf16, #tpu.memory_space<vmem>>, vector<16x1024xbf16>,
    %c0_227 = arith.constant 0 : index
    %c237_228 = arith.constant 237 : index
    %153 = vector.load %arg8[%c0_227, %c237_228] : memref<16x1280xbf16, #tpu.memory_space<vmem>>, vector<16x1024xbf16>
    %c96_229 = arith.constant 96 : index
    %c0_230 = arith.constant 0 : index
    %154 = vector.load %arg9[%c96_229, %c0_230] : memref<144x1024xbf16, #tpu.memory_space<vmem>>, vector<16x1024xbf16>
    tpu.vector_store %arg9[%c96_229, %c0_230], %153 {strides = array<i32>} : memref<144x1024xbf16, #tpu.memory_space<vmem>>, vector<16x1024xbf16>,
    %c0_231 = arith.constant 0 : index
    %c238_232 = arith.constant 238 : index
    %155 = vector.load %arg8[%c0_231, %c238_232] : memref<16x1280xbf16, #tpu.memory_space<vmem>>, vector<16x1024xbf16>
    %c112_233 = arith.constant 112 : index
    %c0_234 = arith.constant 0 : index
    %156 = vector.load %arg9[%c112_233, %c0_234] : memref<144x1024xbf16, #tpu.memory_space<vmem>>, vector<16x1024xbf16>
    tpu.vector_store %arg9[%c112_233, %c0_234], %155 {strides = array<i32>} : memref<144x1024xbf16, #tpu.memory_space<vmem>>, vector<16x1024xbf16>,
    %c0_235 = arith.constant 0 : index
    %c239_236 = arith.constant 239 : index
    %157 = vector.load %arg8[%c0_235, %c239_236] : memref<16x1280xbf16, #tpu.memory_space<vmem>>, vector<16x1024xbf16>
    %c128_237 = arith.constant 128 : index
    %c0_238 = arith.constant 0 : index
    %158 = vector.load %arg9[%c128_237, %c0_238] : memref<144x1024xbf16, #tpu.memory_space<vmem>>, vector<16x1024xbf16>
    tpu.vector_store %arg9[%c128_237, %c0_238], %157 {strides = array<i32>} : memref<144x1024xbf16, #tpu.memory_space<vmem>>, vector<16x1024xbf16>,
    %c2_239 = arith.constant 2 : index
    %c0_240 = arith.constant 0 : index
    %c0_241 = arith.constant 0 : index
    %159 = vector.load %arg4[%c2_239, %c0_240, %c0_241] : memref<3x8x144xbf16, #tpu.memory_space<vmem>>, vector<1x8x144xbf16>
    %160 = vector.shape_cast %159 : vector<1x8x144xbf16> to vector<8x144xbf16>
    %c0_242 = arith.constant 0 : index
    %c0_243 = arith.constant 0 : index
    %161 = vector.load %arg9[%c0_242, %c0_243] : memref<144x1024xbf16, #tpu.memory_space<vmem>>, vector<144x1024xbf16>
    %cst_244 = arith.constant dense<0.000000e+00> : vector<8x1024xf32>
    %162 = tpu.matmul %160, %161, %cst_244 {dimension_numbers = #tpu.dot_dimension_numbers<[1], [0], [0], [1], [0, 0, 1, 1], [], []>} : vector<8x144xbf16>, vector<144x1024xbf16>, vector<8x1024xf32> -> vector<8x1024xf32>
    %163 = arith.addf %140, %162 : vector<8x1024xf32>
    %cst_245 = arith.constant 0.000000e+00 : f32
    %164 = vector.broadcast %cst_245 : f32 to vector<8x1024xf32>
    %165 = arith.maximumf %163, %164 : vector<8x1024xf32>
    %c0_246 = arith.constant 0 : index
    %c0_247 = arith.constant 0 : index
    %c0_248 = arith.constant 0 : index
    %166 = vector.load %arg7[%c0_246, %c0_247, %c0_248] : memref<1x8x1024xf32, #tpu.memory_space<vmem>>, vector<1x8x1024xf32>
    %167 = vector.shape_cast %166 : vector<1x8x1024xf32> to vector<8x1024xf32>
    %168 = vector.shape_cast %165 : vector<8x1024xf32> to vector<1x8x1024xf32>
    tpu.vector_store %arg7[%c0_246, %c0_247, %c0_248], %168 {strides = array<i32>} : memref<1x8x1024xf32, #tpu.memory_space<vmem>>, vector<1x8x1024xf32>,
    return
  }
  func.func @transform_0(%arg0: i32) -> (i32, i32, i32, i32) {
    %c0_i32 = arith.constant 0 : i32
    %c0_i32_0 = arith.constant 0 : i32
    %c0_i32_1 = arith.constant 0 : i32
    %c0_i32_2 = arith.constant 0 : i32
    return %arg0, %c0_i32, %c0_i32_0, %c0_i32_1 : i32, i32, i32, i32
  }
  func.func @transform_1(%arg0: i32) -> (i32, i32, i32) {
    %c0_i32 = arith.constant 0 : i32
    %c0_i32_0 = arith.constant 0 : i32
    %c0_i32_1 = arith.constant 0 : i32
    %c0_i32_2 = arith.constant 0 : i32
    return %c0_i32, %c0_i32_0, %c0_i32_1 : i32, i32, i32
  }
  func.func @transform_2(%arg0: i32) -> (i32, i32) {
    %c0_i32 = arith.constant 0 : i32
    %c0_i32_0 = arith.constant 0 : i32
    %c0_i32_1 = arith.constant 0 : i32
    return %c0_i32, %c0_i32_0 : i32, i32
  }
  func.func @transform_3(%arg0: i32) -> (i32, i32, i32) {
    %c0_i32 = arith.constant 0 : i32
    %c0_i32_0 = arith.constant 0 : i32
    %c0_i32_1 = arith.constant 0 : i32
    %c0_i32_2 = arith.constant 0 : i32
    return %c0_i32, %c0_i32_0, %c0_i32_1 : i32, i32, i32
  }
  func.func @transform_4(%arg0: i32) -> (i32, i32) {
    %c0_i32 = arith.constant 0 : i32
    %c0_i32_0 = arith.constant 0 : i32
    %c0_i32_1 = arith.constant 0 : i32
    return %c0_i32, %c0_i32_0 : i32, i32
  }
  func.func @transform_5(%arg0: i32) -> (i32, i32) {
    %c0_i32 = arith.constant 0 : i32
    %c0_i32_0 = arith.constant 0 : i32
    %c0_i32_1 = arith.constant 0 : i32
    return %c0_i32, %c0_i32_0 : i32, i32
  }
  func.func @transform_6(%arg0: i32) -> (i32, i32, i32) {
    %c0_i32 = arith.constant 0 : i32
    %c0_i32_0 = arith.constant 0 : i32
    %c0_i32_1 = arith.constant 0 : i32
    return %arg0, %c0_i32, %c0_i32_0 : i32, i32, i32
  }
}

</mosaic_0001>

<llo_original>
// kernel: down_conv_block.1
$region0: #{down_conv_block.1}
  #allocation0 [shape = 'u32[]', space=smem, size = 0x4, offset = 0x4, fixed_abs, tag = 'smem constant byte address 0x4 - core index']
  #allocation1 [shape = 'u32[144,128]{1,0:T(1,128)}', space=vmem, size = 0x12000, scoped, tag = 'internal scratch']
  #allocation2 [shape = 'bf16[16,1280]{1,0:T(16,128)(2,1)}', space=vmem, size = 0xa000, scoped, tag = 'scratch operand']
  #allocation3 [shape = 'bf16[144,1024]{1,0:T(16,128)(2,1)}', space=vmem, size = 0x48000, scoped, tag = 'scratch operand']
  %s0 = inlined_call_operand.vmem [shape: f32[2,4,16,1024], index: 0, kind: input, shape index: {}]
  %s1 = inlined_call_operand.vmem [shape: bf16[3,8,144], index: 1, kind: input, shape index: {}]
  %s2 = inlined_call_operand.vmem [shape: f32[8,1024], index: 2, kind: input, shape index: {}]
  %s3 = inlined_call_operand.vmem [shape: bf16[3,8,144], index: 3, kind: input, shape index: {}]
  %s4 = inlined_call_operand.vmem [shape: f32[8,1024], index: 4, kind: input, shape index: {}]
  %s5 = inlined_call_operand.vmem [shape: f32[1,1024], index: 5, kind: input, shape index: {}]
  %s6 = inlined_call_operand.vmem [shape: f32[2,8,1024], index: 6, kind: output, shape index: {}]
  %s7 = sld [smem:[#allocation0]]
  $region57: #{down_conv_block.1} parent=0
    _
  %s9 = ssub.s32 1, %s7
  %s10 = scalar_select 0, %s9, %s7
  loop: start=0, step=1, limit=4
  $region2: #{down_conv_block.1} parent=0 // loop_pre_header
    _
  $region3: #{down_conv_block.1} parent=0 // loop_header
    %s12 = sphi 0, %s16
    %p13 = scmp.ge.s32.totalorder %s12, 4
    %s22 = sphi 0, %s24
    %s25 = sphi 0, %s22
    %s26 = sphi 0, %s25
    %s42 = sphi 0, %s26
    %s46 = sphi 0, %s46
    %s48 = sphi 0, %s46
    %s49 = sphi 0, %s48
    %s63 = sphi 0, %s49
    %s67 = sphi 0, %s67
    %s69 = sphi 0, %s67
    %s70 = sphi 0, %s69
    %s84 = sphi 0, %s70
    %s88 = sphi 0, %s88
    %s90 = sphi 0, %s88
    %s91 = sphi 0, %s90
    %s105 = sphi 0, %s91
    %s109 = sphi 0, %s109
    %s111 = sphi 0, %s109
    %s112 = sphi 0, %s111
    %s126 = sphi 0, %s112
    %s130 = sphi 0, %s130
    %s132 = sphi 0, %s130
    %s133 = sphi 0, %s132
    %s147 = sphi 0, %s133
    %s153 = sphi 0, %s155
    %s156 = sphi 0, %s153
    %s157 = sphi 0, %s156
    %s173 = sphi 0, %s157
  $region4: #{down_conv_block.1} parent=0 // loop_header_branch
    %15 = sbr.rel (%p13) target = $region8
  $region5: #{down_conv_block.1} parent=0 // loop_body
    %s17 = ssub.s32 %s12, 1
    %s18 = ssub.s32 %s12, 2
    %s19 = sadd.s32 %s12, 1
    %s20 = ssub.s32 %s12, %s19
    %p21 = scmp.eq.s32.totalorder %s20, 0
    %s23 = sadd.s32 %s22, 1
    %s24 = scalar_select %p21, %s22, %s23
    %p27 = pneg %p21
    %p28 = scmp.eq.s32.totalorder %s12, 1
    %p29 = por %p27, %p28
    %p30 = scmp.ne.s32.totalorder %s22, %s25
    %p31 = scmp.eq.s32.totalorder %s12, 0
    %p32 = por %p30, %p31
    %p33 = scmp.ne.s32.totalorder %s22, %s25
    %p34 = scmp.eq.s32.totalorder %s17, 1
    %p35 = por %p33, %p34
    %p36 = scmp.ne.s32.totalorder %s25, %s26
    %p37 = scmp.eq.s32.totalorder %s17, 0
    %p38 = por %p36, %p37
    %p39 = scmp.ne.s32.totalorder %s25, %s26
    %p40 = scmp.eq.s32.totalorder %s18, 1
    %p41 = por %p39, %p40
    %p43 = scmp.ne.s32.totalorder %s26, %s42
    %p44 = scmp.eq.s32.totalorder %s18, 0
    %p45 = por %p43, %p44
    %s47 = sadd.s32 %s46, 1
    %p50 = scmp.eq.s32.totalorder %s12, 1
    %p51 = scmp.ne.s32.totalorder %s46, %s48
    %p52 = scmp.eq.s32.totalorder %s12, 0
    %p53 = por %p51, %p52
    %p54 = scmp.ne.s32.totalorder %s46, %s48
    %p55 = scmp.eq.s32.totalorder %s17, 1
    %p56 = por %p54, %p55
    %p57 = scmp.ne.s32.totalorder %s48, %s49
    %p58 = scmp.eq.s32.totalorder %s17, 0
    %p59 = por %p57, %p58
    %p60 = scmp.ne.s32.totalorder %s48, %s49
    %p61 = scmp.eq.s32.totalorder %s18, 1
    %p62 = por %p60, %p61
    %p64 = scmp.ne.s32.totalorder %s49, %s63
    %p65 = scmp.eq.s32.totalorder %s18, 0
    %p66 = por %p64, %p65
    %s68 = sadd.s32 %s67, 1
    %p71 = scmp.eq.s32.totalorder %s12, 1
    %p72 = scmp.ne.s32.totalorder %s67, %s69
    %p73 = scmp.eq.s32.totalorder %s12, 0
    %p74 = por %p72, %p73
    %p75 = scmp.ne.s32.totalorder %s67, %s69
    %p76 = scmp.eq.s32.totalorder %s17, 1
    %p77 = por %p75, %p76
    %p78 = scmp.ne.s32.totalorder %s69, %s70
    %p79 = scmp.eq.s32.totalorder %s17, 0
    %p80 = por %p78, %p79
    %p81 = scmp.ne.s32.totalorder %s69, %s70
    %p82 = scmp.eq.s32.totalorder %s18, 1
    %p83 = por %p81, %p82
    %p85 = scmp.ne.s32.totalorder %s70, %s84
    %p86 = scmp.eq.s32.totalorder %s18, 0
    %p87 = por %p85, %p86
    %s89 = sadd.s32 %s88, 1
    %p92 = scmp.eq.s32.totalorder %s12, 1
    %p93 = scmp.ne.s32.totalorder %s88, %s90
    %p94 = scmp.eq.s32.totalorder %s12, 0
    %p95 = por %p93, %p94
    %p96 = scmp.ne.s32.totalorder %s88, %s90
    %p97 = scmp.eq.s32.totalorder %s17, 1
    %p98 = por %p96, %p97
    %p99 = scmp.ne.s32.totalorder %s90, %s91
    %p100 = scmp.eq.s32.totalorder %s17, 0
    %p101 = por %p99, %p100
    %p102 = scmp.ne.s32.totalorder %s90, %s91
    %p103 = scmp.eq.s32.totalorder %s18, 1
    %p104 = por %p102, %p103
    %p106 = scmp.ne.s32.totalorder %s91, %s105
    %p107 = scmp.eq.s32.totalorder %s18, 0
    %p108 = por %p106, %p107
    %s110 = sadd.s32 %s109, 1
    %p113 = scmp.eq.s32.totalorder %s12, 1
    %p114 = scmp.ne.s32.totalorder %s109, %s111
    %p115 = scmp.eq.s32.totalorder %s12, 0
    %p116 = por %p114, %p115
    %p117 = scmp.ne.s32.totalorder %s109, %s111
    %p118 = scmp.eq.s32.totalorder %s17, 1
    %p119 = por %p117, %p118
    %p120 = scmp.ne.s32.totalorder %s111, %s112
    %p121 = scmp.eq.s32.totalorder %s17, 0
    %p122 = por %p120, %p121
    %p123 = scmp.ne.s32.totalorder %s111, %s112
    %p124 = scmp.eq.s32.totalorder %s18, 1
    %p125 = por %p123, %p124
    %p127 = scmp.ne.s32.totalorder %s112, %s126
    %p128 = scmp.eq.s32.totalorder %s18, 0
    %p129 = por %p127, %p128
    %s131 = sadd.s32 %s130, 1
    %p134 = scmp.eq.s32.totalorder %s12, 1
    %p135 = scmp.ne.s32.totalorder %s130, %s132
    %p136 = scmp.eq.s32.totalorder %s12, 0
    %p137 = por %p135, %p136
    %p138 = scmp.ne.s32.totalorder %s130, %s132
    %p139 = scmp.eq.s32.totalorder %s17, 1
    %p140 = por %p138, %p139
    %p141 = scmp.ne.s32.totalorder %s132, %s133
    %p142 = scmp.eq.s32.totalorder %s17, 0
    %p143 = por %p141, %p142
    %p144 = scmp.ne.s32.totalorder %s132, %s133
    %p145 = scmp.eq.s32.totalorder %s18, 1
    %p146 = por %p144, %p145
    %p148 = scmp.ne.s32.totalorder %s133, %s147
    %p149 = scmp.eq.s32.totalorder %s18, 0
    %p150 = por %p148, %p149
    %s151 = ssub.s32 %s12, %s19
    %p152 = scmp.eq.s32.totalorder %s151, 0
    %s154 = sadd.s32 %s153, 1
    %s155 = scalar_select %p152, %s153, %s154
    %p158 = pneg %p152
    %p159 = scmp.eq.s32.totalorder %s12, 1
    %p160 = por %p158, %p159
    %p161 = scmp.ne.s32.totalorder %s153, %s156
    %p162 = scmp.eq.s32.totalorder %s12, 0
    %p163 = por %p161, %p162
    %p164 = scmp.ne.s32.totalorder %s153, %s156
    %p165 = scmp.eq.s32.totalorder %s17, 1
    %p166 = por %p164, %p165
    %p167 = scmp.ne.s32.totalorder %s156, %s157
    %p168 = scmp.eq.s32.totalorder %s17, 0
    %p169 = por %p167, %p168
    %p170 = scmp.ne.s32.totalorder %s156, %s157
    %p171 = scmp.eq.s32.totalorder %s18, 1
    %p172 = por %p170, %p171
    %p174 = scmp.ne.s32.totalorder %s157, %s173
    %p175 = scmp.eq.s32.totalorder %s18, 0
    %p176 = por %p174, %p175
    %p177 = scmp.le.s32.totalorder 1, %s12
    %p178 = scmp.lt.s32.totalorder %s12, 3
    %p179 = pnand %p177, %p178
    %p180 = pneg %p179
    // Predicated region
    $region9: #{down_conv_block.1} parent=5 // pred_check
      _
    $region10: #{down_conv_block.1} parent=5 // pred_check_branch
      %182 = sbr.rel (%p179) target = $region12
    $region11: #{down_conv_block.1} parent=5 // pred_region
      %s183 = ssub.s32 %s12, 1
      // Predicated region
      $region13: #{down_conv_block.1} parent=11 // pred_check
        %p184 = pneg %p59
      $region14: #{down_conv_block.1} parent=11 // pred_check_branch
        %186 = sbr.rel (%p184) target = $region16
      $region15: #{down_conv_block.1} parent=11 // pred_region
        _
      $region16: #{down_conv_block.1} parent=11 // pred_fallthru
        _
      // Predicated region
      $region17: #{down_conv_block.1} parent=11 // pred_check
        %p187 = pneg %p80
      $region18: #{down_conv_block.1} parent=11 // pred_check_branch
        %189 = sbr.rel (%p187) target = $region20
      $region19: #{down_conv_block.1} parent=11 // pred_region
        _
      $region20: #{down_conv_block.1} parent=11 // pred_fallthru
        _
      // Predicated region
      $region21: #{down_conv_block.1} parent=11 // pred_check
        %p190 = pneg %p101
      $region22: #{down_conv_block.1} parent=11 // pred_check_branch
        %192 = sbr.rel (%p190) target = $region24
      $region23: #{down_conv_block.1} parent=11 // pred_region
        _
      $region24: #{down_conv_block.1} parent=11 // pred_fallthru
        _
      // Predicated region
      $region25: #{down_conv_block.1} parent=11 // pred_check
        %p193 = pneg %p122
      $region26: #{down_conv_block.1} parent=11 // pred_check_branch
        %195 = sbr.rel (%p193) target = $region28
      $region27: #{down_conv_block.1} parent=11 // pred_region
        _
      $region28: #{down_conv_block.1} parent=11 // pred_fallthru
        _
      // Predicated region
      $region29: #{down_conv_block.1} parent=11 // pred_check
        %p196 = pneg %p143
      $region30: #{down_conv_block.1} parent=11 // pred_check_branch
        %198 = sbr.rel (%p196) target = $region32
      $region31: #{down_conv_block.1} parent=11 // pred_region
        _
      $region32: #{down_conv_block.1} parent=11 // pred_fallthru
        _
    $region12: #{down_conv_block.1} parent=5 // pred_fallthru
      _
    %p199 = scmp.lt.s32.totalorder %s12, 2
    // Predicated region
    $region33: #{down_conv_block.1} parent=5 // pred_check
      %p200 = pneg %p199
    $region34: #{down_conv_block.1} parent=5 // pred_check_branch
      %202 = sbr.rel (%p200) target = $region36
    $region35: #{down_conv_block.1} parent=5 // pred_region
      // Predicated region
      $region37: #{down_conv_block.1} parent=35 // pred_check
        %p203 = pneg %p32
      $region38: #{down_conv_block.1} parent=35 // pred_check_branch
        %205 = sbr.rel (%p203) target = $region40
      $region39: #{down_conv_block.1} parent=35 // pred_region
        %p206 = scmp.lt.s32.totalorder %s12, 1
        %s207 = scalar_select %p206, %s12, 1
        %s208 = smul.addr %s207, 64
        %s209 = smul.addr %s208, 8
        %s210 = scalar_lea.vmem %s0, %s209
      $region40: #{down_conv_block.1} parent=35 // pred_fallthru
        _
    $region36: #{down_conv_block.1} parent=5 // pred_fallthru
      _
    %p211 = scmp.le.s32.totalorder 1, %s12
    %p212 = scmp.lt.s32.totalorder %s12, 3
    %p213 = pnand %p211, %p212
    %p214 = pneg %p213
    // Predicated region
    $region41: #{down_conv_block.1} parent=5 // pred_check
      _
    $region42: #{down_conv_block.1} parent=5 // pred_check_branch
      %216 = sbr.rel (%p213) target = $region44
    $region43: #{down_conv_block.1} parent=5 // pred_region
      %s217 = ssub.s32 %s12, 1
      %p218 = scmp.lt.s32.totalorder %s17, 1
      %s219 = scalar_select %p218, %s17, 1
      %s220 = smul.addr %s219, 64
      %s221 = smul.addr %s220, 8
      %s222 = scalar_lea.vmem %s0, %s221
      %p223 = pneg %p38
      %p224 = pneg %p35
      %p225 = pneg %p59
      %p226 = pneg %p56
      %p227 = pneg %p80
      %p228 = pneg %p77
      %p229 = pneg %p101
      %p230 = pneg %p98
      %p231 = pneg %p122
      %p232 = pneg %p119
      %p233 = pneg %p143
      %p234 = pneg %p140
      %p235 = pneg %p169
      %p236 = pneg %p166
      %p237 = scmp.lt.s32.totalorder %s17, 1
      %s238 = scalar_select %p237, %s17, 1
      %s239 = smul.addr %s238, 8
      %s240 = smul.addr %s239, 8
      %s241 = scalar_lea.vmem %s6, %s240
      %p242 = scmp.lt.s32.totalorder %s17, 1
      %s243 = scalar_select %p242, %s17, 1
      %s244 = smul.addr %s243, 64
      %s245 = smul.addr %s244, 8
      %s246 = scalar_lea.vmem %s0, %s245
      %p247 = scmp.lt.s32.totalorder %s17, 1
      %s248 = scalar_select %p247, %s17, 1
      %s249 = smul.addr %s248, 8
      %s250 = smul.addr %s249, 8
      %s251 = scalar_lea.vmem %s6, %s250
      %v253 = vld [vmem:[%s246] sm:$0xff]
      %v254 = vld [vmem:[%s246 + $0x8] sm:$0xff]
      %v255 = vld [vmem:[%s246 + $0x10] sm:$0xff]
      %v256 = vld [vmem:[%s246 + $0x18] sm:$0xff]
      %v257 = vld [vmem:[%s246 + $0x20] sm:$0xff]
      %v258 = vld [vmem:[%s246 + $0x28] sm:$0xff]
      %v259 = vld [vmem:[%s246 + $0x30] sm:$0xff]
      %v260 = vld [vmem:[%s246 + $0x38] sm:$0xff]
      %v261 = vld [vmem:[%s246 + $0x40] sm:$0xff]
      %v262 = vld [vmem:[%s246 + $0x48] sm:$0xff]
      %v263 = vld [vmem:[%s246 + $0x50] sm:$0xff]
      %v264 = vld [vmem:[%s246 + $0x58] sm:$0xff]
      %v265 = vld [vmem:[%s246 + $0x60] sm:$0xff]
      %v266 = vld [vmem:[%s246 + $0x68] sm:$0xff]
      %v267 = vld [vmem:[%s246 + $0x70] sm:$0xff]
      %v268 = vld [vmem:[%s246 + $0x78] sm:$0xff]
      %s269 = scalar_lea.vmem %s246, 128
      %v270 = vld [vmem:[%s269] sm:$0xff]
      %v271 = vld [vmem:[%s269 + $0x8] sm:$0xff]
      %v272 = vld [vmem:[%s269 + $0x10] sm:$0xff]
      %v273 = vld [vmem:[%s269 + $0x18] sm:$0xff]
      %v274 = vld [vmem:[%s269 + $0x20] sm:$0xff]
      %v275 = vld [vmem:[%s269 + $0x28] sm:$0xff]
      %v276 = vld [vmem:[%s269 + $0x30] sm:$0xff]
      %v277 = vld [vmem:[%s269 + $0x38] sm:$0xff]
      %v278 = vld [vmem:[%s269 + $0x40] sm:$0xff]
      %v279 = vld [vmem:[%s269 + $0x48] sm:$0xff]
      %v280 = vld [vmem:[%s269 + $0x50] sm:$0xff]
      %v281 = vld [vmem:[%s269 + $0x58] sm:$0xff]
      %v282 = vld [vmem:[%s269 + $0x60] sm:$0xff]
      %v283 = vld [vmem:[%s269 + $0x68] sm:$0xff]
      %v284 = vld [vmem:[%s269 + $0x70] sm:$0xff]
      %v285 = vld [vmem:[%s269 + $0x78] sm:$0xff]
      %v286 = vmax.f32 %v253, %v270
      %v287 = vmax.f32 %v254, %v271
      %v288 = vmax.f32 %v255, %v272
      %v289 = vmax.f32 %v256, %v273
      %v290 = vmax.f32 %v257, %v274
      %v291 = vmax.f32 %v258, %v275
      %v292 = vmax.f32 %v259, %v276
      %v293 = vmax.f32 %v260, %v277
      %v294 = vmax.f32 %v261, %v278
      %v295 = vmax.f32 %v262, %v279
      %v296 = vmax.f32 %v263, %v280
      %v297 = vmax.f32 %v264, %v281
      %v298 = vmax.f32 %v265, %v282
      %v299 = vmax.f32 %v266, %v283
      %v300 = vmax.f32 %v267, %v284
      %v301 = vmax.f32 %v268, %v285
      %s302 = scalar_lea.vmem %s246, 256
      %v303 = vld [vmem:[%s302] sm:$0xff]
      %v304 = vld [vmem:[%s302 + $0x8] sm:$0xff]
      %v305 = vld [vmem:[%s302 + $0x10] sm:$0xff]
      %v306 = vld [vmem:[%s302 + $0x18] sm:$0xff]
      %v307 = vld [vmem:[%s302 + $0x20] sm:$0xff]
      %v308 = vld [vmem:[%s302 + $0x28] sm:$0xff]
      %v309 = vld [vmem:[%s302 + $0x30] sm:$0xff]
      %v310 = vld [vmem:[%s302 + $0x38] sm:$0xff]
      %v311 = vld [vmem:[%s302 + $0x40] sm:$0xff]
      %v312 = vld [vmem:[%s302 + $0x48] sm:$0xff]
      %v313 = vld [vmem:[%s302 + $0x50] sm:$0xff]
      %v314 = vld [vmem:[%s302 + $0x58] sm:$0xff]
      %v315 = vld [vmem:[%s302 + $0x60] sm:$0xff]
      %v316 = vld [vmem:[%s302 + $0x68] sm:$0xff]
      %v317 = vld [vmem:[%s302 + $0x70] sm:$0xff]
      %v318 = vld [vmem:[%s302 + $0x78] sm:$0xff]
      %v319 = vmax.f32 %v286, %v303
      %v320 = vmax.f32 %v287, %v304
      %v321 = vmax.f32 %v288, %v305
      %v322 = vmax.f32 %v289, %v306
      %v323 = vmax.f32 %v290, %v307
      %v324 = vmax.f32 %v291, %v308
      %v325 = vmax.f32 %v292, %v309
      %v326 = vmax.f32 %v293, %v310
      %v327 = vmax.f32 %v294, %v311
      %v328 = vmax.f32 %v295, %v312
      %v329 = vmax.f32 %v296, %v313
      %v330 = vmax.f32 %v297, %v314
      %v331 = vmax.f32 %v298, %v315
      %v332 = vmax.f32 %v299, %v316
      %v333 = vmax.f32 %v300, %v317
      %v334 = vmax.f32 %v301, %v318
      %s335 = scalar_lea.vmem %s246, 384
      %v336 = vld [vmem:[%s335] sm:$0xff]
      %v337 = vld [vmem:[%s335 + $0x8] sm:$0xff]
      %v338 = vld [vmem:[%s335 + $0x10] sm:$0xff]
      %v339 = vld [vmem:[%s335 + $0x18] sm:$0xff]
      %v340 = vld [vmem:[%s335 + $0x20] sm:$0xff]
      %v341 = vld [vmem:[%s335 + $0x28] sm:$0xff]
      %v342 = vld [vmem:[%s335 + $0x30] sm:$0xff]
      %v343 = vld [vmem:[%s335 + $0x38] sm:$0xff]
      %v344 = vld [vmem:[%s335 + $0x40] sm:$0xff]
      %v345 = vld [vmem:[%s335 + $0x48] sm:$0xff]
      %v346 = vld [vmem:[%s335 + $0x50] sm:$0xff]
      %v347 = vld [vmem:[%s335 + $0x58] sm:$0xff]
      %v348 = vld [vmem:[%s335 + $0x60] sm:$0xff]
      %v349 = vld [vmem:[%s335 + $0x68] sm:$0xff]
      %v350 = vld [vmem:[%s335 + $0x70] sm:$0xff]
      %v351 = vld [vmem:[%s335 + $0x78] sm:$0xff]
      %v352 = vmax.f32 %v319, %v336
      %v353 = vmax.f32 %v320, %v337
      %v354 = vmax.f32 %v321, %v338
      %v355 = vmax.f32 %v322, %v339
      %v356 = vmax.f32 %v323, %v340
      %v357 = vmax.f32 %v324, %v341
      %v358 = vmax.f32 %v325, %v342
      %v359 = vmax.f32 %v326, %v343
      %v360 = vmax.f32 %v327, %v344
      %v361 = vmax.f32 %v328, %v345
      %v362 = vmax.f32 %v329, %v346
      %v363 = vmax.f32 %v330, %v347
      %v364 = vmax.f32 %v331, %v348
      %v365 = vmax.f32 %v332, %v349
      %v366 = vmax.f32 %v333, %v350
      %v367 = vmax.f32 %v334, %v351
      %v368 = vld [vmem:[%s5] sm:$0xff]
      %369 = vst [vmem:[#allocation2] sm:$0xff] 0
      %370 = vst [vmem:[#allocation2 + $0x48] sm:$0xff] 0
      %v371 = vpack.c.bf16 %v360, %v352
      %v372 = vpack.c.bf16 %v361, %v353
      %v373 = vpack.c.bf16 %v362, %v354
      %v374 = vpack.c.bf16 %v363, %v355
      %v375 = vpack.c.bf16 %v364, %v356
      %v376 = vpack.c.bf16 %v365, %v357
      %v377 = vpack.c.bf16 %v366, %v358
      %v378 = vpack.c.bf16 %v367, %v359
      %379 = vst [vmem:[#allocation2 + $0x8] sm:$0xff] %v371
      %380 = vst [vmem:[#allocation2 + $0x10] sm:$0xff] %v372
      %381 = vst [vmem:[#allocation2 + $0x18] sm:$0xff] %v373
      %382 = vst [vmem:[#allocation2 + $0x20] sm:$0xff] %v374
      %383 = vst [vmem:[#allocation2 + $0x28] sm:$0xff] %v375
      %384 = vst [vmem:[#allocation2 + $0x30] sm:$0xff] %v376
      %385 = vst [vmem:[#allocation2 + $0x38] sm:$0xff] %v377
      %386 = vst [vmem:[#allocation2 + $0x40] sm:$0xff] %v378
      %v387 = vld [vmem:[%s2] sm:$0xff]
      %v388 = vld [vmem:[%s2 + $0x8] sm:$0xff]
      %v389 = vld [vmem:[%s2 + $0x10] sm:$0xff]
      %v390 = vld [vmem:[%s2 + $0x18] sm:$0xff]
      %v391 = vld [vmem:[%s2 + $0x20] sm:$0xff]
      %v392 = vld [vmem:[%s2 + $0x28] sm:$0xff]
      %v393 = vld [vmem:[%s2 + $0x30] sm:$0xff]
      %v394 = vld [vmem:[%s2 + $0x38] sm:$0xff]
      %v395 = vld [vmem:[#allocation2] sm:$0xff]
      %v396 = vld [vmem:[#allocation2 + $0x8] sm:$0xff]
      %v397 = vld [vmem:[#allocation2 + $0x10] sm:$0xff]
      %v398 = vld [vmem:[#allocation2 + $0x18] sm:$0xff]
      %v399 = vld [vmem:[#allocation2 + $0x20] sm:$0xff]
      %v400 = vld [vmem:[#allocation2 + $0x28] sm:$0xff]
      %v401 = vld [vmem:[#allocation2 + $0x30] sm:$0xff]
      %v402 = vld [vmem:[#allocation2 + $0x38] sm:$0xff]
      %v403 = vld [vmem:[#allocation2 + $0x40] sm:$0xff]
      %413 = vrot.lane.b32.xlu0 %v395, 111
      %v414 = vpop.permute.xlu0 %413
      %415 = vrot.lane.b32.xlu0 %v396, 111
      %v416 = vpop.permute.xlu0 %415
      %417 = vrot.lane.b32.xlu0 %v397, 111
      %v418 = vpop.permute.xlu0 %417
      %419 = vrot.lane.b32.xlu0 %v398, 111
      %v420 = vpop.permute.xlu0 %419
      %421 = vrot.lane.b32.xlu0 %v399, 111
      %v422 = vpop.permute.xlu0 %421
      %423 = vrot.lane.b32.xlu0 %v400, 111
      %v424 = vpop.permute.xlu0 %423
      %425 = vrot.lane.b32.xlu0 %v401, 111
      %v426 = vpop.permute.xlu0 %425
      %427 = vrot.lane.b32.xlu0 %v402, 111
      %v428 = vpop.permute.xlu0 %427
      %429 = vrot.lane.b32.xlu0 %v403, 111
      %v430 = vpop.permute.xlu0 %429
      %vm431 = vcmask 908288
      %v432 = vsel %vm431, %v414, %v416
      %v433 = vsel %vm431, %v416, %v418
      %v434 = vsel %vm431, %v418, %v420
      %v435 = vsel %vm431, %v420, %v422
      %v436 = vsel %vm431, %v422, %v424
      %v437 = vsel %vm431, %v424, %v426
      %v438 = vsel %vm431, %v426, %v428
      %v439 = vsel %vm431, %v428, %v430
      %448 = vst [vmem:[#allocation3] sm:$0xff] %v432
      %449 = vst [vmem:[#allocation3 + $0x8] sm:$0xff] %v433
      %450 = vst [vmem:[#allocation3 + $0x10] sm:$0xff] %v434
      %451 = vst [vmem:[#allocation3 + $0x18] sm:$0xff] %v435
      %452 = vst [vmem:[#allocation3 + $0x20] sm:$0xff] %v436
      %453 = vst [vmem:[#allocation3 + $0x28] sm:$0xff] %v437
      %454 = vst [vmem:[#allocation3 + $0x30] sm:$0xff] %v438
      %455 = vst [vmem:[#allocation3 + $0x38] sm:$0xff] %v439
      %v456 = vld [vmem:[#allocation2] sm:$0xff]
      %v457 = vld [vmem:[#allocation2 + $0x8] sm:$0xff]
      %v458 = vld [vmem:[#allocation2 + $0x10] sm:$0xff]
      %v459 = vld [vmem:[#allocation2 + $0x18] sm:$0xff]
      %v460 = vld [vmem:[#allocation2 + $0x20] sm:$0xff]
      %v461 = vld [vmem:[#allocation2 + $0x28] sm:$0xff]
      %v462 = vld [vmem:[#allocation2 + $0x30] sm:$0xff]
      %v463 = vld [vmem:[#allocation2 + $0x38] sm:$0xff]
      %v464 = vld [vmem:[#allocation2 + $0x40] sm:$0xff]
      %474 = vrot.lane.b32.xlu0 %v456, 110
      %v475 = vpop.permute.xlu0 %474
      %476 = vrot.lane.b32.xlu0 %v457, 110
      %v477 = vpop.permute.xlu0 %476
      %478 = vrot.lane.b32.xlu0 %v458, 110
      %v479 = vpop.permute.xlu0 %478
      %480 = vrot.lane.b32.xlu0 %v459, 110
      %v481 = vpop.permute.xlu0 %480
      %482 = vrot.lane.b32.xlu0 %v460, 110
      %v483 = vpop.permute.xlu0 %482
      %484 = vrot.lane.b32.xlu0 %v461, 110
      %v485 = vpop.permute.xlu0 %484
      %486 = vrot.lane.b32.xlu0 %v462, 110
      %v487 = vpop.permute.xlu0 %486
      %488 = vrot.lane.b32.xlu0 %v463, 110
      %v489 = vpop.permute.xlu0 %488
      %490 = vrot.lane.b32.xlu0 %v464, 110
      %v491 = vpop.permute.xlu0 %490
      %vm492 = vcmask 900096
      %v493 = vsel %vm492, %v475, %v477
      %v494 = vsel %vm492, %v477, %v479
      %v495 = vsel %vm492, %v479, %v481
      %v496 = vsel %vm492, %v481, %v483
      %v497 = vsel %vm492, %v483, %v485
      %v498 = vsel %vm492, %v485, %v487
      %v499 = vsel %vm492, %v487, %v489
      %v500 = vsel %vm492, %v489, %v491
      %509 = vst [vmem:[#allocation3 + $0x40] sm:$0xff] %v493
      %510 = vst [vmem:[#allocation3 + $0x48] sm:$0xff] %v494
      %511 = vst [vmem:[#allocation3 + $0x50] sm:$0xff] %v495
      %512 = vst [vmem:[#allocation3 + $0x58] sm:$0xff] %v496
      %513 = vst [vmem:[#allocation3 + $0x60] sm:$0xff] %v497
      %514 = vst [vmem:[#allocation3 + $0x68] sm:$0xff] %v498
      %515 = vst [vmem:[#allocation3 + $0x70] sm:$0xff] %v499
      %516 = vst [vmem:[#allocation3 + $0x78] sm:$0xff] %v500
      %v517 = vld [vmem:[#allocation2] sm:$0xff]
      %v518 = vld [vmem:[#allocation2 + $0x8] sm:$0xff]
      %v519 = vld [vmem:[#allocation2 + $0x10] sm:$0xff]
      %v520 = vld [vmem:[#allocation2 + $0x18] sm:$0xff]
      %v521 = vld [vmem:[#allocation2 + $0x20] sm:$0xff]
      %v522 = vld [vmem:[#allocation2 + $0x28] sm:$0xff]
      %v523 = vld [vmem:[#allocation2 + $0x30] sm:$0xff]
      %v524 = vld [vmem:[#allocation2 + $0x38] sm:$0xff]
      %v525 = vld [vmem:[#allocation2 + $0x40] sm:$0xff]
      %535 = vrot.lane.b32.xlu0 %v517, 109
      %v536 = vpop.permute.xlu0 %535
      %537 = vrot.lane.b32.xlu0 %v518, 109
      %v538 = vpop.permute.xlu0 %537
      %539 = vrot.lane.b32.xlu0 %v519, 109
      %v540 = vpop.permute.xlu0 %539
      %541 = vrot.lane.b32.xlu0 %v520, 109
      %v542 = vpop.permute.xlu0 %541
      %543 = vrot.lane.b32.xlu0 %v521, 109
      %v544 = vpop.permute.xlu0 %543
      %545 = vrot.lane.b32.xlu0 %v522, 109
      %v546 = vpop.permute.xlu0 %545
      %547 = vrot.lane.b32.xlu0 %v523, 109
      %v548 = vpop.permute.xlu0 %547
      %549 = vrot.lane.b32.xlu0 %v524, 109
      %v550 = vpop.permute.xlu0 %549
      %551 = vrot.lane.b32.xlu0 %v525, 109
      %v552 = vpop.permute.xlu0 %551
      %vm553 = vcmask 891904
      %v554 = vsel %vm553, %v536, %v538
      %v555 = vsel %vm553, %v538, %v540
      %v556 = vsel %vm553, %v540, %v542
      %v557 = vsel %vm553, %v542, %v544
      %v558 = vsel %vm553, %v544, %v546
      %v559 = vsel %vm553, %v546, %v548
      %v560 = vsel %vm553, %v548, %v550
      %v561 = vsel %vm553, %v550, %v552
      %570 = vst [vmem:[#allocation3 + $0x80] sm:$0xff] %v554
      %571 = vst [vmem:[#allocation3 + $0x88] sm:$0xff] %v555
      %572 = vst [vmem:[#allocation3 + $0x90] sm:$0xff] %v556
      %573 = vst [vmem:[#allocation3 + $0x98] sm:$0xff] %v557
      %574 = vst [vmem:[#allocation3 + $0xa0] sm:$0xff] %v558
      %575 = vst [vmem:[#allocation3 + $0xa8] sm:$0xff] %v559
      %576 = vst [vmem:[#allocation3 + $0xb0] sm:$0xff] %v560
      %577 = vst [vmem:[#allocation3 + $0xb8] sm:$0xff] %v561
      %v578 = vld [vmem:[#allocation2] sm:$0xff]
      %v579 = vld [vmem:[#allocation2 + $0x8] sm:$0xff]
      %v580 = vld [vmem:[#allocation2 + $0x10] sm:$0xff]
      %v581 = vld [vmem:[#allocation2 + $0x18] sm:$0xff]
      %v582 = vld [vmem:[#allocation2 + $0x20] sm:$0xff]
      %v583 = vld [vmem:[#allocation2 + $0x28] sm:$0xff]
      %v584 = vld [vmem:[#allocation2 + $0x30] sm:$0xff]
      %v585 = vld [vmem:[#allocation2 + $0x38] sm:$0xff]
      %v586 = vld [vmem:[#allocation2 + $0x40] sm:$0xff]
      %596 = vrot.lane.b32.xlu0 %v578, 101
      %v597 = vpop.permute.xlu0 %596
      %598 = vrot.lane.b32.xlu0 %v579, 101
      %v599 = vpop.permute.xlu0 %598
      %600 = vrot.lane.b32.xlu0 %v580, 101
      %v601 = vpop.permute.xlu0 %600
      %602 = vrot.lane.b32.xlu0 %v581, 101
      %v603 = vpop.permute.xlu0 %602
      %604 = vrot.lane.b32.xlu0 %v582, 101
      %v605 = vpop.permute.xlu0 %604
      %606 = vrot.lane.b32.xlu0 %v583, 101
      %v607 = vpop.permute.xlu0 %606
      %608 = vrot.lane.b32.xlu0 %v584, 101
      %v609 = vpop.permute.xlu0 %608
      %610 = vrot.lane.b32.xlu0 %v585, 101
      %v611 = vpop.permute.xlu0 %610
      %612 = vrot.lane.b32.xlu0 %v586, 101
      %v613 = vpop.permute.xlu0 %612
      %vm614 = vcmask 826368
      %v615 = vsel %vm614, %v597, %v599
      %v616 = vsel %vm614, %v599, %v601
      %v617 = vsel %vm614, %v601, %v603
      %v618 = vsel %vm614, %v603, %v605
      %v619 = vsel %vm614, %v605, %v607
      %v620 = vsel %vm614, %v607, %v609
      %v621 = vsel %vm614, %v609, %v611
      %v622 = vsel %vm614, %v611, %v613
      %631 = vst [vmem:[#allocation3 + $0xc0] sm:$0xff] %v615
      %632 = vst [vmem:[#allocation3 + $0xc8] sm:$0xff] %v616
      %633 = vst [vmem:[#allocation3 + $0xd0] sm:$0xff] %v617
      %634 = vst [vmem:[#allocation3 + $0xd8] sm:$0xff] %v618
      %635 = vst [vmem:[#allocation3 + $0xe0] sm:$0xff] %v619
      %636 = vst [vmem:[#allocation3 + $0xe8] sm:$0xff] %v620
      %637 = vst [vmem:[#allocation3 + $0xf0] sm:$0xff] %v621
      %638 = vst [vmem:[#allocation3 + $0xf8] sm:$0xff] %v622
      %v639 = vld [vmem:[#allocation2] sm:$0xff]
      %v640 = vld [vmem:[#allocation2 + $0x8] sm:$0xff]
      %v641 = vld [vmem:[#allocation2 + $0x10] sm:$0xff]
      %v642 = vld [vmem:[#allocation2 + $0x18] sm:$0xff]
      %v643 = vld [vmem:[#allocation2 + $0x20] sm:$0xff]
      %v644 = vld [vmem:[#allocation2 + $0x28] sm:$0xff]
      %v645 = vld [vmem:[#allocation2 + $0x30] sm:$0xff]
      %v646 = vld [vmem:[#allocation2 + $0x38] sm:$0xff]
      %v647 = vld [vmem:[#allocation2 + $0x40] sm:$0xff]
      %657 = vrot.lane.b32.xlu0 %v639, 100
      %v658 = vpop.permute.xlu0 %657
      %659 = vrot.lane.b32.xlu0 %v640, 100
      %v660 = vpop.permute.xlu0 %659
      %661 = vrot.lane.b32.xlu0 %v641, 100
      %v662 = vpop.permute.xlu0 %661
      %663 = vrot.lane.b32.xlu0 %v642, 100
      %v664 = vpop.permute.xlu0 %663
      %665 = vrot.lane.b32.xlu0 %v643, 100
      %v666 = vpop.permute.xlu0 %665
      %667 = vrot.lane.b32.xlu0 %v644, 100
      %v668 = vpop.permute.xlu0 %667
      %669 = vrot.lane.b32.xlu0 %v645, 100
      %v670 = vpop.permute.xlu0 %669
      %671 = vrot.lane.b32.xlu0 %v646, 100
      %v672 = vpop.permute.xlu0 %671
      %673 = vrot.lane.b32.xlu0 %v647, 100
      %v674 = vpop.permute.xlu0 %673
      %vm675 = vcmask 818176
      %v676 = vsel %vm675, %v658, %v660
      %v677 = vsel %vm675, %v660, %v662
      %v678 = vsel %vm675, %v662, %v664
      %v679 = vsel %vm675, %v664, %v666
      %v680 = vsel %vm675, %v666, %v668
      %v681 = vsel %vm675, %v668, %v670
      %v682 = vsel %vm675, %v670, %v672
      %v683 = vsel %vm675, %v672, %v674
      %692 = vst [vmem:[#allocation3 + $0x100] sm:$0xff] %v676
      %693 = vst [vmem:[#allocation3 + $0x108] sm:$0xff] %v677
      %694 = vst [vmem:[#allocation3 + $0x110] sm:$0xff] %v678
      %695 = vst [vmem:[#allocation3 + $0x118] sm:$0xff] %v679
      %696 = vst [vmem:[#allocation3 + $0x120] sm:$0xff] %v680
      %697 = vst [vmem:[#allocation3 + $0x128] sm:$0xff] %v681
      %698 = vst [vmem:[#allocation3 + $0x130] sm:$0xff] %v682
      %699 = vst [vmem:[#allocation3 + $0x138] sm:$0xff] %v683
      %v700 = vld [vmem:[#allocation2] sm:$0xff]
      %v701 = vld [vmem:[#allocation2 + $0x8] sm:$0xff]
      %v702 = vld [vmem:[#allocation2 + $0x10] sm:$0xff]
      %v703 = vld [vmem:[#allocation2 + $0x18] sm:$0xff]
      %v704 = vld [vmem:[#allocation2 + $0x20] sm:$0xff]
      %v705 = vld [vmem:[#allocation2 + $0x28] sm:$0xff]
      %v706 = vld [vmem:[#allocation2 + $0x30] sm:$0xff]
      %v707 = vld [vmem:[#allocation2 + $0x38] sm:$0xff]
      %v708 = vld [vmem:[#allocation2 + $0x40] sm:$0xff]
      %718 = vrot.lane.b32.xlu0 %v700, 99
      %v719 = vpop.permute.xlu0 %718
      %720 = vrot.lane.b32.xlu0 %v701, 99
      %v721 = vpop.permute.xlu0 %720
      %722 = vrot.lane.b32.xlu0 %v702, 99
      %v723 = vpop.permute.xlu0 %722
      %724 = vrot.lane.b32.xlu0 %v703, 99
      %v725 = vpop.permute.xlu0 %724
      %726 = vrot.lane.b32.xlu0 %v704, 99
      %v727 = vpop.permute.xlu0 %726
      %728 = vrot.lane.b32.xlu0 %v705, 99
      %v729 = vpop.permute.xlu0 %728
      %730 = vrot.lane.b32.xlu0 %v706, 99
      %v731 = vpop.permute.xlu0 %730
      %732 = vrot.lane.b32.xlu0 %v707, 99
      %v733 = vpop.permute.xlu0 %732
      %734 = vrot.lane.b32.xlu0 %v708, 99
      %v735 = vpop.permute.xlu0 %734
      %vm736 = vcmask 809984
      %v737 = vsel %vm736, %v719, %v721
      %v738 = vsel %vm736, %v721, %v723
      %v739 = vsel %vm736, %v723, %v725
      %v740 = vsel %vm736, %v725, %v727
      %v741 = vsel %vm736, %v727, %v729
      %v742 = vsel %vm736, %v729, %v731
      %v743 = vsel %vm736, %v731, %v733
      %v744 = vsel %vm736, %v733, %v735
      %753 = vst [vmem:[#allocation3 + $0x140] sm:$0xff] %v737
      %754 = vst [vmem:[#allocation3 + $0x148] sm:$0xff] %v738
      %755 = vst [vmem:[#allocation3 + $0x150] sm:$0xff] %v739
      %756 = vst [vmem:[#allocation3 + $0x158] sm:$0xff] %v740
      %757 = vst [vmem:[#allocation3 + $0x160] sm:$0xff] %v741
      %758 = vst [vmem:[#allocation3 + $0x168] sm:$0xff] %v742
      %759 = vst [vmem:[#allocation3 + $0x170] sm:$0xff] %v743
      %760 = vst [vmem:[#allocation3 + $0x178] sm:$0xff] %v744
      %v761 = vld [vmem:[#allocation2] sm:$0xff]
      %v762 = vld [vmem:[#allocation2 + $0x8] sm:$0xff]
      %v763 = vld [vmem:[#allocation2 + $0x10] sm:$0xff]
      %v764 = vld [vmem:[#allocation2 + $0x18] sm:$0xff]
      %v765 = vld [vmem:[#allocation2 + $0x20] sm:$0xff]
      %v766 = vld [vmem:[#allocation2 + $0x28] sm:$0xff]
      %v767 = vld [vmem:[#allocation2 + $0x30] sm:$0xff]
      %v768 = vld [vmem:[#allocation2 + $0x38] sm:$0xff]
      %v769 = vld [vmem:[#allocation2 + $0x40] sm:$0xff]
      %779 = vrot.lane.b32.xlu0 %v761, 91
      %v780 = vpop.permute.xlu0 %779
      %781 = vrot.lane.b32.xlu0 %v762, 91
      %v782 = vpop.permute.xlu0 %781
      %783 = vrot.lane.b32.xlu0 %v763, 91
      %v784 = vpop.permute.xlu0 %783
      %785 = vrot.lane.b32.xlu0 %v764, 91
      %v786 = vpop.permute.xlu0 %785
      %787 = vrot.lane.b32.xlu0 %v765, 91
      %v788 = vpop.permute.xlu0 %787
      %789 = vrot.lane.b32.xlu0 %v766, 91
      %v790 = vpop.permute.xlu0 %789
      %791 = vrot.lane.b32.xlu0 %v767, 91
      %v792 = vpop.permute.xlu0 %791
      %793 = vrot.lane.b32.xlu0 %v768, 91
      %v794 = vpop.permute.xlu0 %793
      %795 = vrot.lane.b32.xlu0 %v769, 91
      %v796 = vpop.permute.xlu0 %795
      %vm797 = vcmask 744448
      %v798 = vsel %vm797, %v780, %v782
      %v799 = vsel %vm797, %v782, %v784
      %v800 = vsel %vm797, %v784, %v786
      %v801 = vsel %vm797, %v786, %v788
      %v802 = vsel %vm797, %v788, %v790
      %v803 = vsel %vm797, %v790, %v792
      %v804 = vsel %vm797, %v792, %v794
      %v805 = vsel %vm797, %v794, %v796
      %814 = vst [vmem:[#allocation3 + $0x180] sm:$0xff] %v798
      %815 = vst [vmem:[#allocation3 + $0x188] sm:$0xff] %v799
      %816 = vst [vmem:[#allocation3 + $0x190] sm:$0xff] %v800
      %817 = vst [vmem:[#allocation3 + $0x198] sm:$0xff] %v801
      %818 = vst [vmem:[#allocation3 + $0x1a0] sm:$0xff] %v802
      %819 = vst [vmem:[#allocation3 + $0x1a8] sm:$0xff] %v803
      %820 = vst [vmem:[#allocation3 + $0x1b0] sm:$0xff] %v804
      %821 = vst [vmem:[#allocation3 + $0x1b8] sm:$0xff] %v805
      %v822 = vld [vmem:[#allocation2] sm:$0xff]
      %v823 = vld [vmem:[#allocation2 + $0x8] sm:$0xff]
      %v824 = vld [vmem:[#allocation2 + $0x10] sm:$0xff]
      %v825 = vld [vmem:[#allocation2 + $0x18] sm:$0xff]
      %v826 = vld [vmem:[#allocation2 + $0x20] sm:$0xff]
      %v827 = vld [vmem:[#allocation2 + $0x28] sm:$0xff]
      %v828 = vld [vmem:[#allocation2 + $0x30] sm:$0xff]
      %v829 = vld [vmem:[#allocation2 + $0x38] sm:$0xff]
      %v830 = vld [vmem:[#allocation2 + $0x40] sm:$0xff]
      %840 = vrot.lane.b32.xlu0 %v822, 90
      %v841 = vpop.permute.xlu0 %840
      %842 = vrot.lane.b32.xlu0 %v823, 90
      %v843 = vpop.permute.xlu0 %842
      %844 = vrot.lane.b32.xlu0 %v824, 90
      %v845 = vpop.permute.xlu0 %844
      %846 = vrot.lane.b32.xlu0 %v825, 90
      %v847 = vpop.permute.xlu0 %846
      %848 = vrot.lane.b32.xlu0 %v826, 90
      %v849 = vpop.permute.xlu0 %848
      %850 = vrot.lane.b32.xlu0 %v827, 90
      %v851 = vpop.permute.xlu0 %850
      %852 = vrot.lane.b32.xlu0 %v828, 90
      %v853 = vpop.permute.xlu0 %852
      %854 = vrot.lane.b32.xlu0 %v829, 90
      %v855 = vpop.permute.xlu0 %854
      %856 = vrot.lane.b32.xlu0 %v830, 90
      %v857 = vpop.permute.xlu0 %856
      %vm858 = vcmask 736256
      %v859 = vsel %vm858, %v841, %v843
      %v860 = vsel %vm858, %v843, %v845
      %v861 = vsel %vm858, %v845, %v847
      %v862 = vsel %vm858, %v847, %v849
      %v863 = vsel %vm858, %v849, %v851
      %v864 = vsel %vm858, %v851, %v853
      %v865 = vsel %vm858, %v853, %v855
      %v866 = vsel %vm858, %v855, %v857
      %875 = vst [vmem:[#allocation3 + $0x1c0] sm:$0xff] %v859
      %876 = vst [vmem:[#allocation3 + $0x1c8] sm:$0xff] %v860
      %877 = vst [vmem:[#allocation3 + $0x1d0] sm:$0xff] %v861
      %878 = vst [vmem:[#allocation3 + $0x1d8] sm:$0xff] %v862
      %879 = vst [vmem:[#allocation3 + $0x1e0] sm:$0xff] %v863
      %880 = vst [vmem:[#allocation3 + $0x1e8] sm:$0xff] %v864
      %881 = vst [vmem:[#allocation3 + $0x1f0] sm:$0xff] %v865
      %882 = vst [vmem:[#allocation3 + $0x1f8] sm:$0xff] %v866
      %v883 = vld [vmem:[#allocation2] sm:$0xff]
      %v884 = vld [vmem:[#allocation2 + $0x8] sm:$0xff]
      %v885 = vld [vmem:[#allocation2 + $0x10] sm:$0xff]
      %v886 = vld [vmem:[#allocation2 + $0x18] sm:$0xff]
      %v887 = vld [vmem:[#allocation2 + $0x20] sm:$0xff]
      %v888 = vld [vmem:[#allocation2 + $0x28] sm:$0xff]
      %v889 = vld [vmem:[#allocation2 + $0x30] sm:$0xff]
      %v890 = vld [vmem:[#allocation2 + $0x38] sm:$0xff]
      %v891 = vld [vmem:[#allocation2 + $0x40] sm:$0xff]
      %901 = vrot.lane.b32.xlu0 %v883, 89
      %v902 = vpop.permute.xlu0 %901
      %903 = vrot.lane.b32.xlu0 %v884, 89
      %v904 = vpop.permute.xlu0 %903
      %905 = vrot.lane.b32.xlu0 %v885, 89
      %v906 = vpop.permute.xlu0 %905
      %907 = vrot.lane.b32.xlu0 %v886, 89
      %v908 = vpop.permute.xlu0 %907
      %909 = vrot.lane.b32.xlu0 %v887, 89
      %v910 = vpop.permute.xlu0 %909
      %911 = vrot.lane.b32.xlu0 %v888, 89
      %v912 = vpop.permute.xlu0 %911
      %913 = vrot.lane.b32.xlu0 %v889, 89
      %v914 = vpop.permute.xlu0 %913
      %915 = vrot.lane.b32.xlu0 %v890, 89
      %v916 = vpop.permute.xlu0 %915
      %917 = vrot.lane.b32.xlu0 %v891, 89
      %v918 = vpop.permute.xlu0 %917
      %vm919 = vcmask 728064
      %v920 = vsel %vm919, %v902, %v904
      %v921 = vsel %vm919, %v904, %v906
      %v922 = vsel %vm919, %v906, %v908
      %v923 = vsel %vm919, %v908, %v910
      %v924 = vsel %vm919, %v910, %v912
      %v925 = vsel %vm919, %v912, %v914
      %v926 = vsel %vm919, %v914, %v916
      %v927 = vsel %vm919, %v916, %v918
      %936 = vst [vmem:[#allocation3 + $0x200] sm:$0xff] %v920
      %937 = vst [vmem:[#allocation3 + $0x208] sm:$0xff] %v921
      %938 = vst [vmem:[#allocation3 + $0x210] sm:$0xff] %v922
      %939 = vst [vmem:[#allocation3 + $0x218] sm:$0xff] %v923
      %940 = vst [vmem:[#allocation3 + $0x220] sm:$0xff] %v924
      %941 = vst [vmem:[#allocation3 + $0x228] sm:$0xff] %v925
      %942 = vst [vmem:[#allocation3 + $0x230] sm:$0xff] %v926
      %943 = vst [vmem:[#allocation3 + $0x238] sm:$0xff] %v927
      %v944 = vld [vmem:[%s1] sm:$0xff]
      %v945 = vld [vmem:[#allocation3] sm:$0xff]
      %v946 = vld [vmem:[#allocation3 + $0x8] sm:$0xff]
      %v947 = vld [vmem:[#allocation3 + $0x10] sm:$0xff]
      %v948 = vld [vmem:[#allocation3 + $0x18] sm:$0xff]
      %v949 = vld [vmem:[#allocation3 + $0x20] sm:$0xff]
      %v950 = vld [vmem:[#allocation3 + $0x28] sm:$0xff]
      %v951 = vld [vmem:[#allocation3 + $0x30] sm:$0xff]
      %v952 = vld [vmem:[#allocation3 + $0x38] sm:$0xff]
      %v953 = vld [vmem:[#allocation3 + $0x40] sm:$0xff]
      %v954 = vld [vmem:[#allocation3 + $0x48] sm:$0xff]
      %v955 = vld [vmem:[#allocation3 + $0x50] sm:$0xff]
      %v956 = vld [vmem:[#allocation3 + $0x58] sm:$0xff]
      %v957 = vld [vmem:[#allocation3 + $0x60] sm:$0xff]
      %v958 = vld [vmem:[#allocation3 + $0x68] sm:$0xff]
      %v959 = vld [vmem:[#allocation3 + $0x70] sm:$0xff]
      %v960 = vld [vmem:[#allocation3 + $0x78] sm:$0xff]
      %v961 = vld [vmem:[#allocation3 + $0x80] sm:$0xff]
      %v962 = vld [vmem:[#allocation3 + $0x88] sm:$0xff]
      %v963 = vld [vmem:[#allocation3 + $0x90] sm:$0xff]
      %v964 = vld [vmem:[#allocation3 + $0x98] sm:$0xff]
      %v965 = vld [vmem:[#allocation3 + $0xa0] sm:$0xff]
      %v966 = vld [vmem:[#allocation3 + $0xa8] sm:$0xff]
      %v967 = vld [vmem:[#allocation3 + $0xb0] sm:$0xff]
      %v968 = vld [vmem:[#allocation3 + $0xb8] sm:$0xff]
      %v969 = vld [vmem:[#allocation3 + $0xc0] sm:$0xff]
      %v970 = vld [vmem:[#allocation3 + $0xc8] sm:$0xff]
      %v971 = vld [vmem:[#allocation3 + $0xd0] sm:$0xff]
      %v972 = vld [vmem:[#allocation3 + $0xd8] sm:$0xff]
      %v973 = vld [vmem:[#allocation3 + $0xe0] sm:$0xff]
      %v974 = vld [vmem:[#allocation3 + $0xe8] sm:$0xff]
      %v975 = vld [vmem:[#allocation3 + $0xf0] sm:$0xff]
      %v976 = vld [vmem:[#allocation3 + $0xf8] sm:$0xff]
      %v977 = vld [vmem:[#allocation3 + $0x100] sm:$0xff]
      %v978 = vld [vmem:[#allocation3 + $0x108] sm:$0xff]
      %v979 = vld [vmem:[#allocation3 + $0x110] sm:$0xff]
      %v980 = vld [vmem:[#allocation3 + $0x118] sm:$0xff]
      %v981 = vld [vmem:[#allocation3 + $0x120] sm:$0xff]
      %v982 = vld [vmem:[#allocation3 + $0x128] sm:$0xff]
      %v983 = vld [vmem:[#allocation3 + $0x130] sm:$0xff]
      %v984 = vld [vmem:[#allocation3 + $0x138] sm:$0xff]
      %v985 = vld [vmem:[#allocation3 + $0x140] sm:$0xff]
      %v986 = vld [vmem:[#allocation3 + $0x148] sm:$0xff]
      %v987 = vld [vmem:[#allocation3 + $0x150] sm:$0xff]
      %v988 = vld [vmem:[#allocation3 + $0x158] sm:$0xff]
      %v989 = vld [vmem:[#allocation3 + $0x160] sm:$0xff]
      %v990 = vld [vmem:[#allocation3 + $0x168] sm:$0xff]
      %v991 = vld [vmem:[#allocation3 + $0x170] sm:$0xff]
      %v992 = vld [vmem:[#allocation3 + $0x178] sm:$0xff]
      %v993 = vld [vmem:[#allocation3 + $0x180] sm:$0xff]
      %v994 = vld [vmem:[#allocation3 + $0x188] sm:$0xff]
      %v995 = vld [vmem:[#allocation3 + $0x190] sm:$0xff]
      %v996 = vld [vmem:[#allocation3 + $0x198] sm:$0xff]
      %v997 = vld [vmem:[#allocation3 + $0x1a0] sm:$0xff]
      %v998 = vld [vmem:[#allocation3 + $0x1a8] sm:$0xff]
      %v999 = vld [vmem:[#allocation3 + $0x1b0] sm:$0xff]
      %v1000 = vld [vmem:[#allocation3 + $0x1b8] sm:$0xff]
      %v1001 = vld [vmem:[#allocation3 + $0x1c0] sm:$0xff]
      %v1002 = vld [vmem:[#allocation3 + $0x1c8] sm:$0xff]
      %v1003 = vld [vmem:[#allocation3 + $0x1d0] sm:$0xff]
      %v1004 = vld [vmem:[#allocation3 + $0x1d8] sm:$0xff]
      %v1005 = vld [vmem:[#allocation3 + $0x1e0] sm:$0xff]
      %v1006 = vld [vmem:[#allocation3 + $0x1e8] sm:$0xff]
      %v1007 = vld [vmem:[#allocation3 + $0x1f0] sm:$0xff]
      %v1008 = vld [vmem:[#allocation3 + $0x1f8] sm:$0xff]
      %v1009 = vld [vmem:[#allocation3 + $0x200] sm:$0xff]
      %v1010 = vld [vmem:[#allocation3 + $0x208] sm:$0xff]
      %v1011 = vld [vmem:[#allocation3 + $0x210] sm:$0xff]
      %v1012 = vld [vmem:[#allocation3 + $0x218] sm:$0xff]
      %v1013 = vld [vmem:[#allocation3 + $0x220] sm:$0xff]
      %v1014 = vld [vmem:[#allocation3 + $0x228] sm:$0xff]
      %v1015 = vld [vmem:[#allocation3 + $0x230] sm:$0xff]
      %v1016 = vld [vmem:[#allocation3 + $0x238] sm:$0xff]
      %v1018 = vunpack.c.l.b16 %v944
      %v1019 = vunpack.c.h.b16 %v944
      %v1020 = vpack.c.b16 %v1018, %v1018
      %v1021 = vpack.c.b16 %v1019, %v1019
      %vm1023 = vcmask 130048
      %v1025 = vsel %vm1023, %v1021, 0
      %1027 = vmatprep.subr.bf16.mxu0 %v946
      %1028 = vmatpush1.bf16.msra.mxu0 %v945
      %1029 = vmatprep.subr.bf16.mxu0 %v954
      %1030 = vmatpush1.bf16.msra.mxu0 %v953
      %1031 = vmatprep.subr.bf16.mxu0 %v962
      %1032 = vmatpush1.bf16.msra.mxu0 %v961
      %1033 = vmatprep.subr.bf16.mxu0 %v970
      %1034 = vmatpush1.bf16.msra.mxu0 %v969
      %1035 = vmatprep.subr.bf16.mxu0 %v978
      %1036 = vmatpush1.bf16.msra.mxu0 %v977
      %1037 = vmatprep.subr.bf16.mxu0 %v986
      %1038 = vmatpush1.bf16.msra.mxu0 %v985
      %1039 = vmatprep.subr.bf16.mxu0 %v994
      %1040 = vmatpush1.bf16.msra.mxu0 %v993
      %1041 = vmatprep.subr.bf16.mxu0 %v1002
      %1042 = vmatpush1.bf16.msra.mxu0 %v1001
      %1043 = vmatprep.subr.bf16.mxu0 %v1010
      %1044 = vmatpush1.bf16.msra.mxu0 %v1009
      %1045 = vmatprep.subr.bf16.mxu0 0
      %1046 = vmatpush1.bf16.msra.mxu0 0
      %1047 = vmatprep.subr.bf16.mxu0 0
      %1048 = vmatpush1.bf16.msra.mxu0 0
      %1049 = vmatprep.subr.bf16.mxu0 0
      %1050 = vmatpush1.bf16.msra.mxu0 0
      %1051 = vmatprep.subr.bf16.mxu0 0
      %1052 = vmatpush1.bf16.msra.mxu0 0
      %1053 = vmatprep.subr.bf16.mxu0 0
      %1054 = vmatpush1.bf16.msra.mxu0 0
      %1055 = vmatprep.subr.bf16.mxu0 0
      %1056 = vmatpush1.bf16.msra.mxu0 0
      %1057 = vmatprep.subr.bf16.mxu0 0
      %1058 = vmatpush1.bf16.msra.mxu0 0
      %1059 = vmatprep.mubr.bf16.mxu0 %v1025
      %1060 = vmatmul.mubr.bf16.gmra.mrb[0].mxu0 %v1020
      %v1061 = vpop.f32.mrb[0].mxu0
      %v1062 = vadd.f32 0.0, %v1061
      %v1063 = vpop.f32.mrb[0].mxu0
      %v1064 = vadd.f32 0.0, %v1063
      %v1065 = vpop.f32.mrb[0].mxu0
      %v1066 = vpop.f32.mrb[0].mxu0
      %1067 = vdwg.mxu0
      %1068 = vmatprep.subr.bf16.mxu0 %v948
      %1069 = vmatpush1.bf16.msra.mxu0 %v947
      %1070 = vmatprep.subr.bf16.mxu0 %v956
      %1071 = vmatpush1.bf16.msra.mxu0 %v955
      %1072 = vmatprep.subr.bf16.mxu0 %v964
      %1073 = vmatpush1.bf16.msra.mxu0 %v963
      %1074 = vmatprep.subr.bf16.mxu0 %v972
      %1075 = vmatpush1.bf16.msra.mxu0 %v971
      %1076 = vmatprep.subr.bf16.mxu0 %v980
      %1077 = vmatpush1.bf16.msra.mxu0 %v979
      %1078 = vmatprep.subr.bf16.mxu0 %v988
      %1079 = vmatpush1.bf16.msra.mxu0 %v987
      %1080 = vmatprep.subr.bf16.mxu0 %v996
      %1081 = vmatpush1.bf16.msra.mxu0 %v995
      %1082 = vmatprep.subr.bf16.mxu0 %v1004
      %1083 = vmatpush1.bf16.msra.mxu0 %v1003
      %1084 = vmatprep.subr.bf16.mxu0 %v1012
      %1085 = vmatpush1.bf16.msra.mxu0 %v1011
      %1086 = vmatprep.subr.bf16.mxu0 0
      %1087 = vmatpush1.bf16.msra.mxu0 0
      %1088 = vmatprep.subr.bf16.mxu0 0
      %1089 = vmatpush1.bf16.msra.mxu0 0
      %1090 = vmatprep.subr.bf16.mxu0 0
      %1091 = vmatpush1.bf16.msra.mxu0 0
      %1092 = vmatprep.subr.bf16.mxu0 0
      %1093 = vmatpush1.bf16.msra.mxu0 0
      %1094 = vmatprep.subr.bf16.mxu0 0
      %1095 = vmatpush1.bf16.msra.mxu0 0
      %1096 = vmatprep.subr.bf16.mxu0 0
      %1097 = vmatpush1.bf16.msra.mxu0 0
      %1098 = vmatprep.subr.bf16.mxu0 0
      %1099 = vmatpush1.bf16.msra.mxu0 0
      %1100 = vmatprep.mubr.bf16.mxu0 %v1025
      %1101 = vmatmul.mubr.bf16.gmra.mrb[0].mxu0 %v1020
      %v1102 = vpop.f32.mrb[0].mxu0
      %v1103 = vadd.f32 0.0, %v1102
      %v1104 = vpop.f32.mrb[0].mxu0
      %v1105 = vadd.f32 0.0, %v1104
      %v1106 = vpop.f32.mrb[0].mxu0
      %v1107 = vpop.f32.mrb[0].mxu0
      %1108 = vdwg.mxu0
      %1109 = vmatprep.subr.bf16.mxu0 %v950
      %1110 = vmatpush1.bf16.msra.mxu0 %v949
      %1111 = vmatprep.subr.bf16.mxu0 %v958
      %1112 = vmatpush1.bf16.msra.mxu0 %v957
      %1113 = vmatprep.subr.bf16.mxu0 %v966
      %1114 = vmatpush1.bf16.msra.mxu0 %v965
      %1115 = vmatprep.subr.bf16.mxu0 %v974
      %1116 = vmatpush1.bf16.msra.mxu0 %v973
      %1117 = vmatprep.subr.bf16.mxu0 %v982
      %1118 = vmatpush1.bf16.msra.mxu0 %v981
      %1119 = vmatprep.subr.bf16.mxu0 %v990
      %1120 = vmatpush1.bf16.msra.mxu0 %v989
      %1121 = vmatprep.subr.bf16.mxu0 %v998
      %1122 = vmatpush1.bf16.msra.mxu0 %v997
      %1123 = vmatprep.subr.bf16.mxu0 %v1006
      %1124 = vmatpush1.bf16.msra.mxu0 %v1005
      %1125 = vmatprep.subr.bf16.mxu0 %v1014
      %1126 = vmatpush1.bf16.msra.mxu0 %v1013
      %1127 = vmatprep.subr.bf16.mxu0 0
      %1128 = vmatpush1.bf16.msra.mxu0 0
      %1129 = vmatprep.subr.bf16.mxu0 0
      %1130 = vmatpush1.bf16.msra.mxu0 0
      %1131 = vmatprep.subr.bf16.mxu0 0
      %1132 = vmatpush1.bf16.msra.mxu0 0
      %1133 = vmatprep.subr.bf16.mxu0 0
      %1134 = vmatpush1.bf16.msra.mxu0 0
      %1135 = vmatprep.subr.bf16.mxu0 0
      %1136 = vmatpush1.bf16.msra.mxu0 0
      %1137 = vmatprep.subr.bf16.mxu0 0
      %1138 = vmatpush1.bf16.msra.mxu0 0
      %1139 = vmatprep.subr.bf16.mxu0 0
      %1140 = vmatpush1.bf16.msra.mxu0 0
      %1141 = vmatprep.mubr.bf16.mxu0 %v1025
      %1142 = vmatmul.mubr.bf16.gmra.mrb[0].mxu0 %v1020
      %v1143 = vpop.f32.mrb[0].mxu0
      %v1144 = vadd.f32 0.0, %v1143
      %v1145 = vpop.f32.mrb[0].mxu0
      %v1146 = vadd.f32 0.0, %v1145
      %v1147 = vpop.f32.mrb[0].mxu0
      %v1148 = vpop.f32.mrb[0].mxu0
      %1149 = vdwg.mxu0
      %1150 = vmatprep.subr.bf16.mxu0 %v952
      %1151 = vmatpush1.bf16.msra.mxu0 %v951
      %1152 = vmatprep.subr.bf16.mxu0 %v960
      %1153 = vmatpush1.bf16.msra.mxu0 %v959
      %1154 = vmatprep.subr.bf16.mxu0 %v968
      %1155 = vmatpush1.bf16.msra.mxu0 %v967
      %1156 = vmatprep.subr.bf16.mxu0 %v976
      %1157 = vmatpush1.bf16.msra.mxu0 %v975
      %1158 = vmatprep.subr.bf16.mxu0 %v984
      %1159 = vmatpush1.bf16.msra.mxu0 %v983
      %1160 = vmatprep.subr.bf16.mxu0 %v992
      %1161 = vmatpush1.bf16.msra.mxu0 %v991
      %1162 = vmatprep.subr.bf16.mxu0 %v1000
      %1163 = vmatpush1.bf16.msra.mxu0 %v999
      %1164 = vmatprep.subr.bf16.mxu0 %v1008
      %1165 = vmatpush1.bf16.msra.mxu0 %v1007
      %1166 = vmatprep.subr.bf16.mxu0 %v1016
      %1167 = vmatpush1.bf16.msra.mxu0 %v1015
      %1168 = vmatprep.subr.bf16.mxu0 0
      %1169 = vmatpush1.bf16.msra.mxu0 0
      %1170 = vmatprep.subr.bf16.mxu0 0
      %1171 = vmatpush1.bf16.msra.mxu0 0
      %1172 = vmatprep.subr.bf16.mxu0 0
      %1173 = vmatpush1.bf16.msra.mxu0 0
      %1174 = vmatprep.subr.bf16.mxu0 0
      %1175 = vmatpush1.bf16.msra.mxu0 0
      %1176 = vmatprep.subr.bf16.mxu0 0
      %1177 = vmatpush1.bf16.msra.mxu0 0
      %1178 = vmatprep.subr.bf16.mxu0 0
      %1179 = vmatpush1.bf16.msra.mxu0 0
      %1180 = vmatprep.subr.bf16.mxu0 0
      %1181 = vmatpush1.bf16.msra.mxu0 0
      %1182 = vmatprep.mubr.bf16.mxu0 %v1025
      %1183 = vmatmul.mubr.bf16.gmra.mrb[0].mxu0 %v1020
      %v1184 = vpop.f32.mrb[0].mxu0
      %v1185 = vadd.f32 0.0, %v1184
      %v1186 = vpop.f32.mrb[0].mxu0
      %v1187 = vadd.f32 0.0, %v1186
      %v1188 = vpop.f32.mrb[0].mxu0
      %v1189 = vpop.f32.mrb[0].mxu0
      %1190 = vdwg.mxu0
      %v1191 = vadd.f32 %v387, %v1062
      %v1192 = vadd.f32 %v388, %v1064
      %v1193 = vadd.f32 %v389, %v1103
      %v1194 = vadd.f32 %v390, %v1105
      %v1195 = vadd.f32 %v391, %v1144
      %v1196 = vadd.f32 %v392, %v1146
      %v1197 = vadd.f32 %v393, %v1185
      %v1198 = vadd.f32 %v394, %v1187
      %v1199 = vld [vmem:[#allocation2] sm:$0xff]
      %v1200 = vld [vmem:[#allocation2 + $0x8] sm:$0xff]
      %v1201 = vld [vmem:[#allocation2 + $0x10] sm:$0xff]
      %v1202 = vld [vmem:[#allocation2 + $0x18] sm:$0xff]
      %v1203 = vld [vmem:[#allocation2 + $0x20] sm:$0xff]
      %v1204 = vld [vmem:[#allocation2 + $0x28] sm:$0xff]
      %v1205 = vld [vmem:[#allocation2 + $0x30] sm:$0xff]
      %v1206 = vld [vmem:[#allocation2 + $0x38] sm:$0xff]
      %v1207 = vld [vmem:[#allocation2 + $0x40] sm:$0xff]
      %1217 = vrot.lane.b32.xlu0 %v1199, 11
      %v1218 = vpop.permute.xlu0 %1217
      %1219 = vrot.lane.b32.xlu0 %v1200, 11
      %v1220 = vpop.permute.xlu0 %1219
      %1221 = vrot.lane.b32.xlu0 %v1201, 11
      %v1222 = vpop.permute.xlu0 %1221
      %1223 = vrot.lane.b32.xlu0 %v1202, 11
      %v1224 = vpop.permute.xlu0 %1223
      %1225 = vrot.lane.b32.xlu0 %v1203, 11
      %v1226 = vpop.permute.xlu0 %1225
      %1227 = vrot.lane.b32.xlu0 %v1204, 11
      %v1228 = vpop.permute.xlu0 %1227
      %1229 = vrot.lane.b32.xlu0 %v1205, 11
      %v1230 = vpop.permute.xlu0 %1229
      %1231 = vrot.lane.b32.xlu0 %v1206, 11
      %v1232 = vpop.permute.xlu0 %1231
      %1233 = vrot.lane.b32.xlu0 %v1207, 11
      %v1234 = vpop.permute.xlu0 %1233
      %vm1235 = vcmask 89088
      %v1236 = vsel %vm1235, %v1218, %v1220
      %v1237 = vsel %vm1235, %v1220, %v1222
      %v1238 = vsel %vm1235, %v1222, %v1224
      %v1239 = vsel %vm1235, %v1224, %v1226
      %v1240 = vsel %vm1235, %v1226, %v1228
      %v1241 = vsel %vm1235, %v1228, %v1230
      %v1242 = vsel %vm1235, %v1230, %v1232
      %v1243 = vsel %vm1235, %v1232, %v1234
      %1252 = vst [vmem:[#allocation3] sm:$0xff] %v1236
      %1253 = vst [vmem:[#allocation3 + $0x8] sm:$0xff] %v1237
      %1254 = vst [vmem:[#allocation3 + $0x10] sm:$0xff] %v1238
      %1255 = vst [vmem:[#allocation3 + $0x18] sm:$0xff] %v1239
      %1256 = vst [vmem:[#allocation3 + $0x20] sm:$0xff] %v1240
      %1257 = vst [vmem:[#allocation3 + $0x28] sm:$0xff] %v1241
      %1258 = vst [vmem:[#allocation3 + $0x30] sm:$0xff] %v1242
      %1259 = vst [vmem:[#allocation3 + $0x38] sm:$0xff] %v1243
      %v1260 = vld [vmem:[#allocation2] sm:$0xff]
      %v1261 = vld [vmem:[#allocation2 + $0x8] sm:$0xff]
      %v1262 = vld [vmem:[#allocation2 + $0x10] sm:$0xff]
      %v1263 = vld [vmem:[#allocation2 + $0x18] sm:$0xff]
      %v1264 = vld [vmem:[#allocation2 + $0x20] sm:$0xff]
      %v1265 = vld [vmem:[#allocation2 + $0x28] sm:$0xff]
      %v1266 = vld [vmem:[#allocation2 + $0x30] sm:$0xff]
      %v1267 = vld [vmem:[#allocation2 + $0x38] sm:$0xff]
      %v1268 = vld [vmem:[#allocation2 + $0x40] sm:$0xff]
      %1278 = vrot.lane.b32.xlu0 %v1260, 10
      %v1279 = vpop.permute.xlu0 %1278
      %1280 = vrot.lane.b32.xlu0 %v1261, 10
      %v1281 = vpop.permute.xlu0 %1280
      %1282 = vrot.lane.b32.xlu0 %v1262, 10
      %v1283 = vpop.permute.xlu0 %1282
      %1284 = vrot.lane.b32.xlu0 %v1263, 10
      %v1285 = vpop.permute.xlu0 %1284
      %1286 = vrot.lane.b32.xlu0 %v1264, 10
      %v1287 = vpop.permute.xlu0 %1286
      %1288 = vrot.lane.b32.xlu0 %v1265, 10
      %v1289 = vpop.permute.xlu0 %1288
      %1290 = vrot.lane.b32.xlu0 %v1266, 10
      %v1291 = vpop.permute.xlu0 %1290
      %1292 = vrot.lane.b32.xlu0 %v1267, 10
      %v1293 = vpop.permute.xlu0 %1292
      %1294 = vrot.lane.b32.xlu0 %v1268, 10
      %v1295 = vpop.permute.xlu0 %1294
      %vm1296 = vcmask 80896
      %v1297 = vsel %vm1296, %v1279, %v1281
      %v1298 = vsel %vm1296, %v1281, %v1283
      %v1299 = vsel %vm1296, %v1283, %v1285
      %v1300 = vsel %vm1296, %v1285, %v1287
      %v1301 = vsel %vm1296, %v1287, %v1289
      %v1302 = vsel %vm1296, %v1289, %v1291
      %v1303 = vsel %vm1296, %v1291, %v1293
      %v1304 = vsel %vm1296, %v1293, %v1295
      %1313 = vst [vmem:[#allocation3 + $0x40] sm:$0xff] %v1297
      %1314 = vst [vmem:[#allocation3 + $0x48] sm:$0xff] %v1298
      %1315 = vst [vmem:[#allocation3 + $0x50] sm:$0xff] %v1299
      %1316 = vst [vmem:[#allocation3 + $0x58] sm:$0xff] %v1300
      %1317 = vst [vmem:[#allocation3 + $0x60] sm:$0xff] %v1301
      %1318 = vst [vmem:[#allocation3 + $0x68] sm:$0xff] %v1302
      %1319 = vst [vmem:[#allocation3 + $0x70] sm:$0xff] %v1303
      %1320 = vst [vmem:[#allocation3 + $0x78] sm:$0xff] %v1304
      %v1321 = vld [vmem:[#allocation2] sm:$0xff]
      %v1322 = vld [vmem:[#allocation2 + $0x8] sm:$0xff]
      %v1323 = vld [vmem:[#allocation2 + $0x10] sm:$0xff]
      %v1324 = vld [vmem:[#allocation2 + $0x18] sm:$0xff]
      %v1325 = vld [vmem:[#allocation2 + $0x20] sm:$0xff]
      %v1326 = vld [vmem:[#allocation2 + $0x28] sm:$0xff]
      %v1327 = vld [vmem:[#allocation2 + $0x30] sm:$0xff]
      %v1328 = vld [vmem:[#allocation2 + $0x38] sm:$0xff]
      %v1329 = vld [vmem:[#allocation2 + $0x40] sm:$0xff]
      %1339 = vrot.lane.b32.xlu0 %v1321, 9
      %v1340 = vpop.permute.xlu0 %1339
      %1341 = vrot.lane.b32.xlu0 %v1322, 9
      %v1342 = vpop.permute.xlu0 %1341
      %1343 = vrot.lane.b32.xlu0 %v1323, 9
      %v1344 = vpop.permute.xlu0 %1343
      %1345 = vrot.lane.b32.xlu0 %v1324, 9
      %v1346 = vpop.permute.xlu0 %1345
      %1347 = vrot.lane.b32.xlu0 %v1325, 9
      %v1348 = vpop.permute.xlu0 %1347
      %1349 = vrot.lane.b32.xlu0 %v1326, 9
      %v1350 = vpop.permute.xlu0 %1349
      %1351 = vrot.lane.b32.xlu0 %v1327, 9
      %v1352 = vpop.permute.xlu0 %1351
      %1353 = vrot.lane.b32.xlu0 %v1328, 9
      %v1354 = vpop.permute.xlu0 %1353
      %1355 = vrot.lane.b32.xlu0 %v1329, 9
      %v1356 = vpop.permute.xlu0 %1355
      %vm1357 = vcmask 72704
      %v1358 = vsel %vm1357, %v1340, %v1342
      %v1359 = vsel %vm1357, %v1342, %v1344
      %v1360 = vsel %vm1357, %v1344, %v1346
      %v1361 = vsel %vm1357, %v1346, %v1348
      %v1362 = vsel %vm1357, %v1348, %v1350
      %v1363 = vsel %vm1357, %v1350, %v1352
      %v1364 = vsel %vm1357, %v1352, %v1354
      %v1365 = vsel %vm1357, %v1354, %v1356
      %1374 = vst [vmem:[#allocation3 + $0x80] sm:$0xff] %v1358
      %1375 = vst [vmem:[#allocation3 + $0x88] sm:$0xff] %v1359
      %1376 = vst [vmem:[#allocation3 + $0x90] sm:$0xff] %v1360
      %1377 = vst [vmem:[#allocation3 + $0x98] sm:$0xff] %v1361
      %1378 = vst [vmem:[#allocation3 + $0xa0] sm:$0xff] %v1362
      %1379 = vst [vmem:[#allocation3 + $0xa8] sm:$0xff] %v1363
      %1380 = vst [vmem:[#allocation3 + $0xb0] sm:$0xff] %v1364
      %1381 = vst [vmem:[#allocation3 + $0xb8] sm:$0xff] %v1365
      %v1382 = vld [vmem:[#allocation2] sm:$0xff]
      %v1383 = vld [vmem:[#allocation2 + $0x8] sm:$0xff]
      %v1384 = vld [vmem:[#allocation2 + $0x10] sm:$0xff]
      %v1385 = vld [vmem:[#allocation2 + $0x18] sm:$0xff]
      %v1386 = vld [vmem:[#allocation2 + $0x20] sm:$0xff]
      %v1387 = vld [vmem:[#allocation2 + $0x28] sm:$0xff]
      %v1388 = vld [vmem:[#allocation2 + $0x30] sm:$0xff]
      %v1389 = vld [vmem:[#allocation2 + $0x38] sm:$0xff]
      %v1390 = vld [vmem:[#allocation2 + $0x40] sm:$0xff]
      %1400 = vrot.lane.b32.xlu0 %v1382, 1
      %v1401 = vpop.permute.xlu0 %1400
      %1402 = vrot.lane.b32.xlu0 %v1383, 1
      %v1403 = vpop.permute.xlu0 %1402
      %1404 = vrot.lane.b32.xlu0 %v1384, 1
      %v1405 = vpop.permute.xlu0 %1404
      %1406 = vrot.lane.b32.xlu0 %v1385, 1
      %v1407 = vpop.permute.xlu0 %1406
      %1408 = vrot.lane.b32.xlu0 %v1386, 1
      %v1409 = vpop.permute.xlu0 %1408
      %1410 = vrot.lane.b32.xlu0 %v1387, 1
      %v1411 = vpop.permute.xlu0 %1410
      %1412 = vrot.lane.b32.xlu0 %v1388, 1
      %v1413 = vpop.permute.xlu0 %1412
      %1414 = vrot.lane.b32.xlu0 %v1389, 1
      %v1415 = vpop.permute.xlu0 %1414
      %1416 = vrot.lane.b32.xlu0 %v1390, 1
      %v1417 = vpop.permute.xlu0 %1416
      %vm1418 = vcmask 7168
      %v1419 = vsel %vm1418, %v1401, %v1403
      %v1420 = vsel %vm1418, %v1403, %v1405
      %v1421 = vsel %vm1418, %v1405, %v1407
      %v1422 = vsel %vm1418, %v1407, %v1409
      %v1423 = vsel %vm1418, %v1409, %v1411
      %v1424 = vsel %vm1418, %v1411, %v1413
      %v1425 = vsel %vm1418, %v1413, %v1415
      %v1426 = vsel %vm1418, %v1415, %v1417
      %1435 = vst [vmem:[#allocation3 + $0xc0] sm:$0xff] %v1419
      %1436 = vst [vmem:[#allocation3 + $0xc8] sm:$0xff] %v1420
      %1437 = vst [vmem:[#allocation3 + $0xd0] sm:$0xff] %v1421
      %1438 = vst [vmem:[#allocation3 + $0xd8] sm:$0xff] %v1422
      %1439 = vst [vmem:[#allocation3 + $0xe0] sm:$0xff] %v1423
      %1440 = vst [vmem:[#allocation3 + $0xe8] sm:$0xff] %v1424
      %1441 = vst [vmem:[#allocation3 + $0xf0] sm:$0xff] %v1425
      %1442 = vst [vmem:[#allocation3 + $0xf8] sm:$0xff] %v1426
      %v1443 = vld [vmem:[#allocation2 + $0x8] sm:$0xff]
      %v1444 = vld [vmem:[#allocation2 + $0x10] sm:$0xff]
      %v1445 = vld [vmem:[#allocation2 + $0x18] sm:$0xff]
      %v1446 = vld [vmem:[#allocation2 + $0x20] sm:$0xff]
      %v1447 = vld [vmem:[#allocation2 + $0x28] sm:$0xff]
      %v1448 = vld [vmem:[#allocation2 + $0x30] sm:$0xff]
      %v1449 = vld [vmem:[#allocation2 + $0x38] sm:$0xff]
      %v1450 = vld [vmem:[#allocation2 + $0x40] sm:$0xff]
      %1451 = vst [vmem:[#allocation3 + $0x100] sm:$0xff] %v1443
      %1452 = vst [vmem:[#allocation3 + $0x108] sm:$0xff] %v1444
      %1453 = vst [vmem:[#allocation3 + $0x110] sm:$0xff] %v1445
      %1454 = vst [vmem:[#allocation3 + $0x118] sm:$0xff] %v1446
      %1455 = vst [vmem:[#allocation3 + $0x120] sm:$0xff] %v1447
      %1456 = vst [vmem:[#allocation3 + $0x128] sm:$0xff] %v1448
      %1457 = vst [vmem:[#allocation3 + $0x130] sm:$0xff] %v1449
      %1458 = vst [vmem:[#allocation3 + $0x138] sm:$0xff] %v1450
      %v1459 = vld [vmem:[#allocation2 + $0x8] sm:$0xff]
      %v1460 = vld [vmem:[#allocation2 + $0x10] sm:$0xff]
      %v1461 = vld [vmem:[#allocation2 + $0x18] sm:$0xff]
      %v1462 = vld [vmem:[#allocation2 + $0x20] sm:$0xff]
      %v1463 = vld [vmem:[#allocation2 + $0x28] sm:$0xff]
      %v1464 = vld [vmem:[#allocation2 + $0x30] sm:$0xff]
      %v1465 = vld [vmem:[#allocation2 + $0x38] sm:$0xff]
      %v1466 = vld [vmem:[#allocation2 + $0x40] sm:$0xff]
      %v1467 = vld [vmem:[#allocation2 + $0x48] sm:$0xff]
      %1477 = vrot.lane.b32.xlu0 %v1459, 127
      %v1478 = vpop.permute.xlu0 %1477
      %1479 = vrot.lane.b32.xlu0 %v1460, 127
      %v1480 = vpop.permute.xlu0 %1479
      %1481 = vrot.lane.b32.xlu0 %v1461, 127
      %v1482 = vpop.permute.xlu0 %1481
      %1483 = vrot.lane.b32.xlu0 %v1462, 127
      %v1484 = vpop.permute.xlu0 %1483
      %1485 = vrot.lane.b32.xlu0 %v1463, 127
      %v1486 = vpop.permute.xlu0 %1485
      %1487 = vrot.lane.b32.xlu0 %v1464, 127
      %v1488 = vpop.permute.xlu0 %1487
      %1489 = vrot.lane.b32.xlu0 %v1465, 127
      %v1490 = vpop.permute.xlu0 %1489
      %1491 = vrot.lane.b32.xlu0 %v1466, 127
      %v1492 = vpop.permute.xlu0 %1491
      %1493 = vrot.lane.b32.xlu0 %v1467, 127
      %v1494 = vpop.permute.xlu0 %1493
      %vm1495 = vcmask 1039360
      %v1496 = vsel %vm1495, %v1478, %v1480
      %v1497 = vsel %vm1495, %v1480, %v1482
      %v1498 = vsel %vm1495, %v1482, %v1484
      %v1499 = vsel %vm1495, %v1484, %v1486
      %v1500 = vsel %vm1495, %v1486, %v1488
      %v1501 = vsel %vm1495, %v1488, %v1490
      %v1502 = vsel %vm1495, %v1490, %v1492
      %v1503 = vsel %vm1495, %v1492, %v1494
      %1512 = vst [vmem:[#allocation3 + $0x140] sm:$0xff] %v1496
      %1513 = vst [vmem:[#allocation3 + $0x148] sm:$0xff] %v1497
      %1514 = vst [vmem:[#allocation3 + $0x150] sm:$0xff] %v1498
      %1515 = vst [vmem:[#allocation3 + $0x158] sm:$0xff] %v1499
      %1516 = vst [vmem:[#allocation3 + $0x160] sm:$0xff] %v1500
      %1517 = vst [vmem:[#allocation3 + $0x168] sm:$0xff] %v1501
      %1518 = vst [vmem:[#allocation3 + $0x170] sm:$0xff] %v1502
      %1519 = vst [vmem:[#allocation3 + $0x178] sm:$0xff] %v1503
      %v1520 = vld [vmem:[#allocation2 + $0x8] sm:$0xff]
      %v1521 = vld [vmem:[#allocation2 + $0x10] sm:$0xff]
      %v1522 = vld [vmem:[#allocation2 + $0x18] sm:$0xff]
      %v1523 = vld [vmem:[#allocation2 + $0x20] sm:$0xff]
      %v1524 = vld [vmem:[#allocation2 + $0x28] sm:$0xff]
      %v1525 = vld [vmem:[#allocation2 + $0x30] sm:$0xff]
      %v1526 = vld [vmem:[#allocation2 + $0x38] sm:$0xff]
      %v1527 = vld [vmem:[#allocation2 + $0x40] sm:$0xff]
      %v1528 = vld [vmem:[#allocation2 + $0x48] sm:$0xff]
      %1538 = vrot.lane.b32.xlu0 %v1520, 119
      %v1539 = vpop.permute.xlu0 %1538
      %1540 = vrot.lane.b32.xlu0 %v1521, 119
      %v1541 = vpop.permute.xlu0 %1540
      %1542 = vrot.lane.b32.xlu0 %v1522, 119
      %v1543 = vpop.permute.xlu0 %1542
      %1544 = vrot.lane.b32.xlu0 %v1523, 119
      %v1545 = vpop.permute.xlu0 %1544
      %1546 = vrot.lane.b32.xlu0 %v1524, 119
      %v1547 = vpop.permute.xlu0 %1546
      %1548 = vrot.lane.b32.xlu0 %v1525, 119
      %v1549 = vpop.permute.xlu0 %1548
      %1550 = vrot.lane.b32.xlu0 %v1526, 119
      %v1551 = vpop.permute.xlu0 %1550
      %1552 = vrot.lane.b32.xlu0 %v1527, 119
      %v1553 = vpop.permute.xlu0 %1552
      %1554 = vrot.lane.b32.xlu0 %v1528, 119
      %v1555 = vpop.permute.xlu0 %1554
      %vm1556 = vcmask 973824
      %v1557 = vsel %vm1556, %v1539, %v1541
      %v1558 = vsel %vm1556, %v1541, %v1543
      %v1559 = vsel %vm1556, %v1543, %v1545
      %v1560 = vsel %vm1556, %v1545, %v1547
      %v1561 = vsel %vm1556, %v1547, %v1549
      %v1562 = vsel %vm1556, %v1549, %v1551
      %v1563 = vsel %vm1556, %v1551, %v1553
      %v1564 = vsel %vm1556, %v1553, %v1555
      %1573 = vst [vmem:[#allocation3 + $0x180] sm:$0xff] %v1557
      %1574 = vst [vmem:[#allocation3 + $0x188] sm:$0xff] %v1558
      %1575 = vst [vmem:[#allocation3 + $0x190] sm:$0xff] %v1559
      %1576 = vst [vmem:[#allocation3 + $0x198] sm:$0xff] %v1560
      %1577 = vst [vmem:[#allocation3 + $0x1a0] sm:$0xff] %v1561
      %1578 = vst [vmem:[#allocation3 + $0x1a8] sm:$0xff] %v1562
      %1579 = vst [vmem:[#allocation3 + $0x1b0] sm:$0xff] %v1563
      %1580 = vst [vmem:[#allocation3 + $0x1b8] sm:$0xff] %v1564
      %v1581 = vld [vmem:[#allocation2 + $0x8] sm:$0xff]
      %v1582 = vld [vmem:[#allocation2 + $0x10] sm:$0xff]
      %v1583 = vld [vmem:[#allocation2 + $0x18] sm:$0xff]
      %v1584 = vld [vmem:[#allocation2 + $0x20] sm:$0xff]
      %v1585 = vld [vmem:[#allocation2 + $0x28] sm:$0xff]
      %v1586 = vld [vmem:[#allocation2 + $0x30] sm:$0xff]
      %v1587 = vld [vmem:[#allocation2 + $0x38] sm:$0xff]
      %v1588 = vld [vmem:[#allocation2 + $0x40] sm:$0xff]
      %v1589 = vld [vmem:[#allocation2 + $0x48] sm:$0xff]
      %1599 = vrot.lane.b32.xlu0 %v1581, 118
      %v1600 = vpop.permute.xlu0 %1599
      %1601 = vrot.lane.b32.xlu0 %v1582, 118
      %v1602 = vpop.permute.xlu0 %1601
      %1603 = vrot.lane.b32.xlu0 %v1583, 118
      %v1604 = vpop.permute.xlu0 %1603
      %1605 = vrot.lane.b32.xlu0 %v1584, 118
      %v1606 = vpop.permute.xlu0 %1605
      %1607 = vrot.lane.b32.xlu0 %v1585, 118
      %v1608 = vpop.permute.xlu0 %1607
      %1609 = vrot.lane.b32.xlu0 %v1586, 118
      %v1610 = vpop.permute.xlu0 %1609
      %1611 = vrot.lane.b32.xlu0 %v1587, 118
      %v1612 = vpop.permute.xlu0 %1611
      %1613 = vrot.lane.b32.xlu0 %v1588, 118
      %v1614 = vpop.permute.xlu0 %1613
      %1615 = vrot.lane.b32.xlu0 %v1589, 118
      %v1616 = vpop.permute.xlu0 %1615
      %vm1617 = vcmask 965632
      %v1618 = vsel %vm1617, %v1600, %v1602
      %v1619 = vsel %vm1617, %v1602, %v1604
      %v1620 = vsel %vm1617, %v1604, %v1606
      %v1621 = vsel %vm1617, %v1606, %v1608
      %v1622 = vsel %vm1617, %v1608, %v1610
      %v1623 = vsel %vm1617, %v1610, %v1612
      %v1624 = vsel %vm1617, %v1612, %v1614
      %v1625 = vsel %vm1617, %v1614, %v1616
      %1634 = vst [vmem:[#allocation3 + $0x1c0] sm:$0xff] %v1618
      %1635 = vst [vmem:[#allocation3 + $0x1c8] sm:$0xff] %v1619
      %1636 = vst [vmem:[#allocation3 + $0x1d0] sm:$0xff] %v1620
      %1637 = vst [vmem:[#allocation3 + $0x1d8] sm:$0xff] %v1621
      %1638 = vst [vmem:[#allocation3 + $0x1e0] sm:$0xff] %v1622
      %1639 = vst [vmem:[#allocation3 + $0x1e8] sm:$0xff] %v1623
      %1640 = vst [vmem:[#allocation3 + $0x1f0] sm:$0xff] %v1624
      %1641 = vst [vmem:[#allocation3 + $0x1f8] sm:$0xff] %v1625
      %v1642 = vld [vmem:[#allocation2 + $0x8] sm:$0xff]
      %v1643 = vld [vmem:[#allocation2 + $0x10] sm:$0xff]
      %v1644 = vld [vmem:[#allocation2 + $0x18] sm:$0xff]
      %v1645 = vld [vmem:[#allocation2 + $0x20] sm:$0xff]
      %v1646 = vld [vmem:[#allocation2 + $0x28] sm:$0xff]
      %v1647 = vld [vmem:[#allocation2 + $0x30] sm:$0xff]
      %v1648 = vld [vmem:[#allocation2 + $0x38] sm:$0xff]
      %v1649 = vld [vmem:[#allocation2 + $0x40] sm:$0xff]
      %v1650 = vld [vmem:[#allocation2 + $0x48] sm:$0xff]
      %1660 = vrot.lane.b32.xlu0 %v1642, 117
      %v1661 = vpop.permute.xlu0 %1660
      %1662 = vrot.lane.b32.xlu0 %v1643, 117
      %v1663 = vpop.permute.xlu0 %1662
      %1664 = vrot.lane.b32.xlu0 %v1644, 117
      %v1665 = vpop.permute.xlu0 %1664
      %1666 = vrot.lane.b32.xlu0 %v1645, 117
      %v1667 = vpop.permute.xlu0 %1666
      %1668 = vrot.lane.b32.xlu0 %v1646, 117
      %v1669 = vpop.permute.xlu0 %1668
      %1670 = vrot.lane.b32.xlu0 %v1647, 117
      %v1671 = vpop.permute.xlu0 %1670
      %1672 = vrot.lane.b32.xlu0 %v1648, 117
      %v1673 = vpop.permute.xlu0 %1672
      %1674 = vrot.lane.b32.xlu0 %v1649, 117
      %v1675 = vpop.permute.xlu0 %1674
      %1676 = vrot.lane.b32.xlu0 %v1650, 117
      %v1677 = vpop.permute.xlu0 %1676
      %vm1678 = vcmask 957440
      %v1679 = vsel %vm1678, %v1661, %v1663
      %v1680 = vsel %vm1678, %v1663, %v1665
      %v1681 = vsel %vm1678, %v1665, %v1667
      %v1682 = vsel %vm1678, %v1667, %v1669
      %v1683 = vsel %vm1678, %v1669, %v1671
      %v1684 = vsel %vm1678, %v1671, %v1673
      %v1685 = vsel %vm1678, %v1673, %v1675
      %v1686 = vsel %vm1678, %v1675, %v1677
      %1695 = vst [vmem:[#allocation3 + $0x200] sm:$0xff] %v1679
      %1696 = vst [vmem:[#allocation3 + $0x208] sm:$0xff] %v1680
      %1697 = vst [vmem:[#allocation3 + $0x210] sm:$0xff] %v1681
      %1698 = vst [vmem:[#allocation3 + $0x218] sm:$0xff] %v1682
      %1699 = vst [vmem:[#allocation3 + $0x220] sm:$0xff] %v1683
      %1700 = vst [vmem:[#allocation3 + $0x228] sm:$0xff] %v1684
      %1701 = vst [vmem:[#allocation3 + $0x230] sm:$0xff] %v1685
      %1702 = vst [vmem:[#allocation3 + $0x238] sm:$0xff] %v1686
      %s1703 = scalar_lea.vmem %s1, 8
      %v1704 = vld [vmem:[%s1703] sm:$0xff]
      %v1705 = vld [vmem:[#allocation3] sm:$0xff]
      %v1706 = vld [vmem:[#allocation3 + $0x8] sm:$0xff]
      %v1707 = vld [vmem:[#allocation3 + $0x10] sm:$0xff]
      %v1708 = vld [vmem:[#allocation3 + $0x18] sm:$0xff]
      %v1709 = vld [vmem:[#allocation3 + $0x20] sm:$0xff]
      %v1710 = vld [vmem:[#allocation3 + $0x28] sm:$0xff]
      %v1711 = vld [vmem:[#allocation3 + $0x30] sm:$0xff]
      %v1712 = vld [vmem:[#allocation3 + $0x38] sm:$0xff]
      %v1713 = vld [vmem:[#allocation3 + $0x40] sm:$0xff]
      %v1714 = vld [vmem:[#allocation3 + $0x48] sm:$0xff]
      %v1715 = vld [vmem:[#allocation3 + $0x50] sm:$0xff]
      %v1716 = vld [vmem:[#allocation3 + $0x58] sm:$0xff]
      %v1717 = vld [vmem:[#allocation3 + $0x60] sm:$0xff]
      %v1718 = vld [vmem:[#allocation3 + $0x68] sm:$0xff]
      %v1719 = vld [vmem:[#allocation3 + $0x70] sm:$0xff]
      %v1720 = vld [vmem:[#allocation3 + $0x78] sm:$0xff]
      %v1721 = vld [vmem:[#allocation3 + $0x80] sm:$0xff]
      %v1722 = vld [vmem:[#allocation3 + $0x88] sm:$0xff]
      %v1723 = vld [vmem:[#allocation3 + $0x90] sm:$0xff]
      %v1724 = vld [vmem:[#allocation3 + $0x98] sm:$0xff]
      %v1725 = vld [vmem:[#allocation3 + $0xa0] sm:$0xff]
      %v1726 = vld [vmem:[#allocation3 + $0xa8] sm:$0xff]
      %v1727 = vld [vmem:[#allocation3 + $0xb0] sm:$0xff]
      %v1728 = vld [vmem:[#allocation3 + $0xb8] sm:$0xff]
      %v1729 = vld [vmem:[#allocation3 + $0xc0] sm:$0xff]
      %v1730 = vld [vmem:[#allocation3 + $0xc8] sm:$0xff]
      %v1731 = vld [vmem:[#allocation3 + $0xd0] sm:$0xff]
      %v1732 = vld [vmem:[#allocation3 + $0xd8] sm:$0xff]
      %v1733 = vld [vmem:[#allocation3 + $0xe0] sm:$0xff]
      %v1734 = vld [vmem:[#allocation3 + $0xe8] sm:$0xff]
      %v1735 = vld [vmem:[#allocation3 + $0xf0] sm:$0xff]
      %v1736 = vld [vmem:[#allocation3 + $0xf8] sm:$0xff]
      %v1737 = vld [vmem:[#allocation3 + $0x100] sm:$0xff]
      %v1738 = vld [vmem:[#allocation3 + $0x108] sm:$0xff]
      %v1739 = vld [vmem:[#allocation3 + $0x110] sm:$0xff]
      %v1740 = vld [vmem:[#allocation3 + $0x118] sm:$0xff]
      %v1741 = vld [vmem:[#allocation3 + $0x120] sm:$0xff]
      %v1742 = vld [vmem:[#allocation3 + $0x128] sm:$0xff]
      %v1743 = vld [vmem:[#allocation3 + $0x130] sm:$0xff]
      %v1744 = vld [vmem:[#allocation3 + $0x138] sm:$0xff]
      %v1745 = vld [vmem:[#allocation3 + $0x140] sm:$0xff]
      %v1746 = vld [vmem:[#allocation3 + $0x148] sm:$0xff]
      %v1747 = vld [vmem:[#allocation3 + $0x150] sm:$0xff]
      %v1748 = vld [vmem:[#allocation3 + $0x158] sm:$0xff]
      %v1749 = vld [vmem:[#allocation3 + $0x160] sm:$0xff]
      %v1750 = vld [vmem:[#allocation3 + $0x168] sm:$0xff]
      %v1751 = vld [vmem:[#allocation3 + $0x170] sm:$0xff]
      %v1752 = vld [vmem:[#allocation3 + $0x178] sm:$0xff]
      %v1753 = vld [vmem:[#allocation3 + $0x180] sm:$0xff]
      %v1754 = vld [vmem:[#allocation3 + $0x188] sm:$0xff]
      %v1755 = vld [vmem:[#allocation3 + $0x190] sm:$0xff]
      %v1756 = vld [vmem:[#allocation3 + $0x198] sm:$0xff]
      %v1757 = vld [vmem:[#allocation3 + $0x1a0] sm:$0xff]
      %v1758 = vld [vmem:[#allocation3 + $0x1a8] sm:$0xff]
      %v1759 = vld [vmem:[#allocation3 + $0x1b0] sm:$0xff]
      %v1760 = vld [vmem:[#allocation3 + $0x1b8] sm:$0xff]
      %v1761 = vld [vmem:[#allocation3 + $0x1c0] sm:$0xff]
      %v1762 = vld [vmem:[#allocation3 + $0x1c8] sm:$0xff]
      %v1763 = vld [vmem:[#allocation3 + $0x1d0] sm:$0xff]
      %v1764 = vld [vmem:[#allocation3 + $0x1d8] sm:$0xff]
      %v1765 = vld [vmem:[#allocation3 + $0x1e0] sm:$0xff]
      %v1766 = vld [vmem:[#allocation3 + $0x1e8] sm:$0xff]
      %v1767 = vld [vmem:[#allocation3 + $0x1f0] sm:$0xff]
      %v1768 = vld [vmem:[#allocation3 + $0x1f8] sm:$0xff]
      %v1769 = vld [vmem:[#allocation3 + $0x200] sm:$0xff]
      %v1770 = vld [vmem:[#allocation3 + $0x208] sm:$0xff]
      %v1771 = vld [vmem:[#allocation3 + $0x210] sm:$0xff]
      %v1772 = vld [vmem:[#allocation3 + $0x218] sm:$0xff]
      %v1773 = vld [vmem:[#allocation3 + $0x220] sm:$0xff]
      %v1774 = vld [vmem:[#allocation3 + $0x228] sm:$0xff]
      %v1775 = vld [vmem:[#allocation3 + $0x230] sm:$0xff]
      %v1776 = vld [vmem:[#allocation3 + $0x238] sm:$0xff]
      %v1778 = vunpack.c.l.b16 %v1704
      %v1779 = vunpack.c.h.b16 %v1704
      %v1780 = vpack.c.b16 %v1778, %v1778
      %v1781 = vpack.c.b16 %v1779, %v1779
      %v1784 = vsel %vm1023, %v1781, 0
      %1786 = vmatprep.subr.bf16.mxu0 %v1706
      %1787 = vmatpush1.bf16.msra.mxu0 %v1705
      %1788 = vmatprep.subr.bf16.mxu0 %v1714
      %1789 = vmatpush1.bf16.msra.mxu0 %v1713
      %1790 = vmatprep.subr.bf16.mxu0 %v1722
      %1791 = vmatpush1.bf16.msra.mxu0 %v1721
      %1792 = vmatprep.subr.bf16.mxu0 %v1730
      %1793 = vmatpush1.bf16.msra.mxu0 %v1729
      %1794 = vmatprep.subr.bf16.mxu0 %v1738
      %1795 = vmatpush1.bf16.msra.mxu0 %v1737
      %1796 = vmatprep.subr.bf16.mxu0 %v1746
      %1797 = vmatpush1.bf16.msra.mxu0 %v1745
      %1798 = vmatprep.subr.bf16.mxu0 %v1754
      %1799 = vmatpush1.bf16.msra.mxu0 %v1753
      %1800 = vmatprep.subr.bf16.mxu0 %v1762
      %1801 = vmatpush1.bf16.msra.mxu0 %v1761
      %1802 = vmatprep.subr.bf16.mxu0 %v1770
      %1803 = vmatpush1.bf16.msra.mxu0 %v1769
      %1804 = vmatprep.subr.bf16.mxu0 0
      %1805 = vmatpush1.bf16.msra.mxu0 0
      %1806 = vmatprep.subr.bf16.mxu0 0
      %1807 = vmatpush1.bf16.msra.mxu0 0
      %1808 = vmatprep.subr.bf16.mxu0 0
      %1809 = vmatpush1.bf16.msra.mxu0 0
      %1810 = vmatprep.subr.bf16.mxu0 0
      %1811 = vmatpush1.bf16.msra.mxu0 0
      %1812 = vmatprep.subr.bf16.mxu0 0
      %1813 = vmatpush1.bf16.msra.mxu0 0
      %1814 = vmatprep.subr.bf16.mxu0 0
      %1815 = vmatpush1.bf16.msra.mxu0 0
      %1816 = vmatprep.subr.bf16.mxu0 0
      %1817 = vmatpush1.bf16.msra.mxu0 0
      %1818 = vmatprep.mubr.bf16.mxu0 %v1784
      %1819 = vmatmul.mubr.bf16.gmra.mrb[0].mxu0 %v1780
      %v1820 = vpop.f32.mrb[0].mxu0
      %v1821 = vadd.f32 0.0, %v1820
      %v1822 = vpop.f32.mrb[0].mxu0
      %v1823 = vadd.f32 0.0, %v1822
      %v1824 = vpop.f32.mrb[0].mxu0
      %v1825 = vpop.f32.mrb[0].mxu0
      %1826 = vdwg.mxu0
      %1827 = vmatprep.subr.bf16.mxu0 %v1708
      %1828 = vmatpush1.bf16.msra.mxu0 %v1707
      %1829 = vmatprep.subr.bf16.mxu0 %v1716
      %1830 = vmatpush1.bf16.msra.mxu0 %v1715
      %1831 = vmatprep.subr.bf16.mxu0 %v1724
      %1832 = vmatpush1.bf16.msra.mxu0 %v1723
      %1833 = vmatprep.subr.bf16.mxu0 %v1732
      %1834 = vmatpush1.bf16.msra.mxu0 %v1731
      %1835 = vmatprep.subr.bf16.mxu0 %v1740
      %1836 = vmatpush1.bf16.msra.mxu0 %v1739
      %1837 = vmatprep.subr.bf16.mxu0 %v1748
      %1838 = vmatpush1.bf16.msra.mxu0 %v1747
      %1839 = vmatprep.subr.bf16.mxu0 %v1756
      %1840 = vmatpush1.bf16.msra.mxu0 %v1755
      %1841 = vmatprep.subr.bf16.mxu0 %v1764
      %1842 = vmatpush1.bf16.msra.mxu0 %v1763
      %1843 = vmatprep.subr.bf16.mxu0 %v1772
      %1844 = vmatpush1.bf16.msra.mxu0 %v1771
      %1845 = vmatprep.subr.bf16.mxu0 0
      %1846 = vmatpush1.bf16.msra.mxu0 0
      %1847 = vmatprep.subr.bf16.mxu0 0
      %1848 = vmatpush1.bf16.msra.mxu0 0
      %1849 = vmatprep.subr.bf16.mxu0 0
      %1850 = vmatpush1.bf16.msra.mxu0 0
      %1851 = vmatprep.subr.bf16.mxu0 0
      %1852 = vmatpush1.bf16.msra.mxu0 0
      %1853 = vmatprep.subr.bf16.mxu0 0
      %1854 = vmatpush1.bf16.msra.mxu0 0
      %1855 = vmatprep.subr.bf16.mxu0 0
      %1856 = vmatpush1.bf16.msra.mxu0 0
      %1857 = vmatprep.subr.bf16.mxu0 0
      %1858 = vmatpush1.bf16.msra.mxu0 0
      %1859 = vmatprep.mubr.bf16.mxu0 %v1784
      %1860 = vmatmul.mubr.bf16.gmra.mrb[0].mxu0 %v1780
      %v1861 = vpop.f32.mrb[0].mxu0
      %v1862 = vadd.f32 0.0, %v1861
      %v1863 = vpop.f32.mrb[0].mxu0
      %v1864 = vadd.f32 0.0, %v1863
      %v1865 = vpop.f32.mrb[0].mxu0
      %v1866 = vpop.f32.mrb[0].mxu0
      %1867 = vdwg.mxu0
      %1868 = vmatprep.subr.bf16.mxu0 %v1710
      %1869 = vmatpush1.bf16.msra.mxu0 %v1709
      %1870 = vmatprep.subr.bf16.mxu0 %v1718
      %1871 = vmatpush1.bf16.msra.mxu0 %v1717
      %1872 = vmatprep.subr.bf16.mxu0 %v1726
      %1873 = vmatpush1.bf16.msra.mxu0 %v1725
      %1874 = vmatprep.subr.bf16.mxu0 %v1734
      %1875 = vmatpush1.bf16.msra.mxu0 %v1733
      %1876 = vmatprep.subr.bf16.mxu0 %v1742
      %1877 = vmatpush1.bf16.msra.mxu0 %v1741
      %1878 = vmatprep.subr.bf16.mxu0 %v1750
      %1879 = vmatpush1.bf16.msra.mxu0 %v1749
      %1880 = vmatprep.subr.bf16.mxu0 %v1758
      %1881 = vmatpush1.bf16.msra.mxu0 %v1757
      %1882 = vmatprep.subr.bf16.mxu0 %v1766
      %1883 = vmatpush1.bf16.msra.mxu0 %v1765
      %1884 = vmatprep.subr.bf16.mxu0 %v1774
      %1885 = vmatpush1.bf16.msra.mxu0 %v1773
      %1886 = vmatprep.subr.bf16.mxu0 0
      %1887 = vmatpush1.bf16.msra.mxu0 0
      %1888 = vmatprep.subr.bf16.mxu0 0
      %1889 = vmatpush1.bf16.msra.mxu0 0
      %1890 = vmatprep.subr.bf16.mxu0 0
      %1891 = vmatpush1.bf16.msra.mxu0 0
      %1892 = vmatprep.subr.bf16.mxu0 0
      %1893 = vmatpush1.bf16.msra.mxu0 0
      %1894 = vmatprep.subr.bf16.mxu0 0
      %1895 = vmatpush1.bf16.msra.mxu0 0
      %1896 = vmatprep.subr.bf16.mxu0 0
      %1897 = vmatpush1.bf16.msra.mxu0 0
      %1898 = vmatprep.subr.bf16.mxu0 0
      %1899 = vmatpush1.bf16.msra.mxu0 0
      %1900 = vmatprep.mubr.bf16.mxu0 %v1784
      %1901 = vmatmul.mubr.bf16.gmra.mrb[0].mxu0 %v1780
      %v1902 = vpop.f32.mrb[0].mxu0
      %v1903 = vadd.f32 0.0, %v1902
      %v1904 = vpop.f32.mrb[0].mxu0
      %v1905 = vadd.f32 0.0, %v1904
      %v1906 = vpop.f32.mrb[0].mxu0
      %v1907 = vpop.f32.mrb[0].mxu0
      %1908 = vdwg.mxu0
      %1909 = vmatprep.subr.bf16.mxu0 %v1712
      %1910 = vmatpush1.bf16.msra.mxu0 %v1711
      %1911 = vmatprep.subr.bf16.mxu0 %v1720
      %1912 = vmatpush1.bf16.msra.mxu0 %v1719
      %1913 = vmatprep.subr.bf16.mxu0 %v1728
      %1914 = vmatpush1.bf16.msra.mxu0 %v1727
      %1915 = vmatprep.subr.bf16.mxu0 %v1736
      %1916 = vmatpush1.bf16.msra.mxu0 %v1735
      %1917 = vmatprep.subr.bf16.mxu0 %v1744
      %1918 = vmatpush1.bf16.msra.mxu0 %v1743
      %1919 = vmatprep.subr.bf16.mxu0 %v1752
      %1920 = vmatpush1.bf16.msra.mxu0 %v1751
      %1921 = vmatprep.subr.bf16.mxu0 %v1760
      %1922 = vmatpush1.bf16.msra.mxu0 %v1759
      %1923 = vmatprep.subr.bf16.mxu0 %v1768
      %1924 = vmatpush1.bf16.msra.mxu0 %v1767
      %1925 = vmatprep.subr.bf16.mxu0 %v1776
      %1926 = vmatpush1.bf16.msra.mxu0 %v1775
      %1927 = vmatprep.subr.bf16.mxu0 0
      %1928 = vmatpush1.bf16.msra.mxu0 0
      %1929 = vmatprep.subr.bf16.mxu0 0
      %1930 = vmatpush1.bf16.msra.mxu0 0
      %1931 = vmatprep.subr.bf16.mxu0 0
      %1932 = vmatpush1.bf16.msra.mxu0 0
      %1933 = vmatprep.subr.bf16.mxu0 0
      %1934 = vmatpush1.bf16.msra.mxu0 0
      %1935 = vmatprep.subr.bf16.mxu0 0
      %1936 = vmatpush1.bf16.msra.mxu0 0
      %1937 = vmatprep.subr.bf16.mxu0 0
      %1938 = vmatpush1.bf16.msra.mxu0 0
      %1939 = vmatprep.subr.bf16.mxu0 0
      %1940 = vmatpush1.bf16.msra.mxu0 0
      %1941 = vmatprep.mubr.bf16.mxu0 %v1784
      %1942 = vmatmul.mubr.bf16.gmra.mrb[0].mxu0 %v1780
      %v1943 = vpop.f32.mrb[0].mxu0
      %v1944 = vadd.f32 0.0, %v1943
      %v1945 = vpop.f32.mrb[0].mxu0
      %v1946 = vadd.f32 0.0, %v1945
      %v1947 = vpop.f32.mrb[0].mxu0
      %v1948 = vpop.f32.mrb[0].mxu0
      %1949 = vdwg.mxu0
      %v1950 = vadd.f32 %v1191, %v1821
      %v1951 = vadd.f32 %v1192, %v1823
      %v1952 = vadd.f32 %v1193, %v1862
      %v1953 = vadd.f32 %v1194, %v1864
      %v1954 = vadd.f32 %v1195, %v1903
      %v1955 = vadd.f32 %v1196, %v1905
      %v1956 = vadd.f32 %v1197, %v1944
      %v1957 = vadd.f32 %v1198, %v1946
      %v1958 = vld [vmem:[#allocation2 + $0x8] sm:$0xff]
      %v1959 = vld [vmem:[#allocation2 + $0x10] sm:$0xff]
      %v1960 = vld [vmem:[#allocation2 + $0x18] sm:$0xff]
      %v1961 = vld [vmem:[#allocation2 + $0x20] sm:$0xff]
      %v1962 = vld [vmem:[#allocation2 + $0x28] sm:$0xff]
      %v1963 = vld [vmem:[#allocation2 + $0x30] sm:$0xff]
      %v1964 = vld [vmem:[#allocation2 + $0x38] sm:$0xff]
      %v1965 = vld [vmem:[#allocation2 + $0x40] sm:$0xff]
      %v1966 = vld [vmem:[#allocation2 + $0x48] sm:$0xff]
      %1976 = vrot.lane.b32.xlu0 %v1958, 39
      %v1977 = vpop.permute.xlu0 %1976
      %1978 = vrot.lane.b32.xlu0 %v1959, 39
      %v1979 = vpop.permute.xlu0 %1978
      %1980 = vrot.lane.b32.xlu0 %v1960, 39
      %v1981 = vpop.permute.xlu0 %1980
      %1982 = vrot.lane.b32.xlu0 %v1961, 39
      %v1983 = vpop.permute.xlu0 %1982
      %1984 = vrot.lane.b32.xlu0 %v1962, 39
      %v1985 = vpop.permute.xlu0 %1984
      %1986 = vrot.lane.b32.xlu0 %v1963, 39
      %v1987 = vpop.permute.xlu0 %1986
      %1988 = vrot.lane.b32.xlu0 %v1964, 39
      %v1989 = vpop.permute.xlu0 %1988
      %1990 = vrot.lane.b32.xlu0 %v1965, 39
      %v1991 = vpop.permute.xlu0 %1990
      %1992 = vrot.lane.b32.xlu0 %v1966, 39
      %v1993 = vpop.permute.xlu0 %1992
      %vm1994 = vcmask 318464
      %v1995 = vsel %vm1994, %v1977, %v1979
      %v1996 = vsel %vm1994, %v1979, %v1981
      %v1997 = vsel %vm1994, %v1981, %v1983
      %v1998 = vsel %vm1994, %v1983, %v1985
      %v1999 = vsel %vm1994, %v1985, %v1987
      %v2000 = vsel %vm1994, %v1987, %v1989
      %v2001 = vsel %vm1994, %v1989, %v1991
      %v2002 = vsel %vm1994, %v1991, %v1993
      %2011 = vst [vmem:[#allocation3] sm:$0xff] %v1995
      %2012 = vst [vmem:[#allocation3 + $0x8] sm:$0xff] %v1996
      %2013 = vst [vmem:[#allocation3 + $0x10] sm:$0xff] %v1997
      %2014 = vst [vmem:[#allocation3 + $0x18] sm:$0xff] %v1998
      %2015 = vst [vmem:[#allocation3 + $0x20] sm:$0xff] %v1999
      %2016 = vst [vmem:[#allocation3 + $0x28] sm:$0xff] %v2000
      %2017 = vst [vmem:[#allocation3 + $0x30] sm:$0xff] %v2001
      %2018 = vst [vmem:[#allocation3 + $0x38] sm:$0xff] %v2002
      %v2019 = vld [vmem:[#allocation2 + $0x8] sm:$0xff]
      %v2020 = vld [vmem:[#allocation2 + $0x10] sm:$0xff]
      %v2021 = vld [vmem:[#allocation2 + $0x18] sm:$0xff]
      %v2022 = vld [vmem:[#allocation2 + $0x20] sm:$0xff]
      %v2023 = vld [vmem:[#allocation2 + $0x28] sm:$0xff]
      %v2024 = vld [vmem:[#allocation2 + $0x30] sm:$0xff]
      %v2025 = vld [vmem:[#allocation2 + $0x38] sm:$0xff]
      %v2026 = vld [vmem:[#allocation2 + $0x40] sm:$0xff]
      %v2027 = vld [vmem:[#allocation2 + $0x48] sm:$0xff]
      %2037 = vrot.lane.b32.xlu0 %v2019, 38
      %v2038 = vpop.permute.xlu0 %2037
      %2039 = vrot.lane.b32.xlu0 %v2020, 38
      %v2040 = vpop.permute.xlu0 %2039
      %2041 = vrot.lane.b32.xlu0 %v2021, 38
      %v2042 = vpop.permute.xlu0 %2041
      %2043 = vrot.lane.b32.xlu0 %v2022, 38
      %v2044 = vpop.permute.xlu0 %2043
      %2045 = vrot.lane.b32.xlu0 %v2023, 38
      %v2046 = vpop.permute.xlu0 %2045
      %2047 = vrot.lane.b32.xlu0 %v2024, 38
      %v2048 = vpop.permute.xlu0 %2047
      %2049 = vrot.lane.b32.xlu0 %v2025, 38
      %v2050 = vpop.permute.xlu0 %2049
      %2051 = vrot.lane.b32.xlu0 %v2026, 38
      %v2052 = vpop.permute.xlu0 %2051
      %2053 = vrot.lane.b32.xlu0 %v2027, 38
      %v2054 = vpop.permute.xlu0 %2053
      %vm2055 = vcmask 310272
      %v2056 = vsel %vm2055, %v2038, %v2040
      %v2057 = vsel %vm2055, %v2040, %v2042
      %v2058 = vsel %vm2055, %v2042, %v2044
      %v2059 = vsel %vm2055, %v2044, %v2046
      %v2060 = vsel %vm2055, %v2046, %v2048
      %v2061 = vsel %vm2055, %v2048, %v2050
      %v2062 = vsel %vm2055, %v2050, %v2052
      %v2063 = vsel %vm2055, %v2052, %v2054
      %2072 = vst [vmem:[#allocation3 + $0x40] sm:$0xff] %v2056
      %2073 = vst [vmem:[#allocation3 + $0x48] sm:$0xff] %v2057
      %2074 = vst [vmem:[#allocation3 + $0x50] sm:$0xff] %v2058
      %2075 = vst [vmem:[#allocation3 + $0x58] sm:$0xff] %v2059
      %2076 = vst [vmem:[#allocation3 + $0x60] sm:$0xff] %v2060
      %2077 = vst [vmem:[#allocation3 + $0x68] sm:$0xff] %v2061
      %2078 = vst [vmem:[#allocation3 + $0x70] sm:$0xff] %v2062
      %2079 = vst [vmem:[#allocation3 + $0x78] sm:$0xff] %v2063
      %v2080 = vld [vmem:[#allocation2 + $0x8] sm:$0xff]
      %v2081 = vld [vmem:[#allocation2 + $0x10] sm:$0xff]
      %v2082 = vld [vmem:[#allocation2 + $0x18] sm:$0xff]
      %v2083 = vld [vmem:[#allocation2 + $0x20] sm:$0xff]
      %v2084 = vld [vmem:[#allocation2 + $0x28] sm:$0xff]
      %v2085 = vld [vmem:[#allocation2 + $0x30] sm:$0xff]
      %v2086 = vld [vmem:[#allocation2 + $0x38] sm:$0xff]
      %v2087 = vld [vmem:[#allocation2 + $0x40] sm:$0xff]
      %v2088 = vld [vmem:[#allocation2 + $0x48] sm:$0xff]
      %2098 = vrot.lane.b32.xlu0 %v2080, 37
      %v2099 = vpop.permute.xlu0 %2098
      %2100 = vrot.lane.b32.xlu0 %v2081, 37
      %v2101 = vpop.permute.xlu0 %2100
      %2102 = vrot.lane.b32.xlu0 %v2082, 37
      %v2103 = vpop.permute.xlu0 %2102
      %2104 = vrot.lane.b32.xlu0 %v2083, 37
      %v2105 = vpop.permute.xlu0 %2104
      %2106 = vrot.lane.b32.xlu0 %v2084, 37
      %v2107 = vpop.permute.xlu0 %2106
      %2108 = vrot.lane.b32.xlu0 %v2085, 37
      %v2109 = vpop.permute.xlu0 %2108
      %2110 = vrot.lane.b32.xlu0 %v2086, 37
      %v2111 = vpop.permute.xlu0 %2110
      %2112 = vrot.lane.b32.xlu0 %v2087, 37
      %v2113 = vpop.permute.xlu0 %2112
      %2114 = vrot.lane.b32.xlu0 %v2088, 37
      %v2115 = vpop.permute.xlu0 %2114
      %vm2116 = vcmask 302080
      %v2117 = vsel %vm2116, %v2099, %v2101
      %v2118 = vsel %vm2116, %v2101, %v2103
      %v2119 = vsel %vm2116, %v2103, %v2105
      %v2120 = vsel %vm2116, %v2105, %v2107
      %v2121 = vsel %vm2116, %v2107, %v2109
      %v2122 = vsel %vm2116, %v2109, %v2111
      %v2123 = vsel %vm2116, %v2111, %v2113
      %v2124 = vsel %vm2116, %v2113, %v2115
      %2133 = vst [vmem:[#allocation3 + $0x80] sm:$0xff] %v2117
      %2134 = vst [vmem:[#allocation3 + $0x88] sm:$0xff] %v2118
      %2135 = vst [vmem:[#allocation3 + $0x90] sm:$0xff] %v2119
      %2136 = vst [vmem:[#allocation3 + $0x98] sm:$0xff] %v2120
      %2137 = vst [vmem:[#allocation3 + $0xa0] sm:$0xff] %v2121
      %2138 = vst [vmem:[#allocation3 + $0xa8] sm:$0xff] %v2122
      %2139 = vst [vmem:[#allocation3 + $0xb0] sm:$0xff] %v2123
      %2140 = vst [vmem:[#allocation3 + $0xb8] sm:$0xff] %v2124
      %v2141 = vld [vmem:[#allocation2 + $0x8] sm:$0xff]
      %v2142 = vld [vmem:[#allocation2 + $0x10] sm:$0xff]
      %v2143 = vld [vmem:[#allocation2 + $0x18] sm:$0xff]
      %v2144 = vld [vmem:[#allocation2 + $0x20] sm:$0xff]
      %v2145 = vld [vmem:[#allocation2 + $0x28] sm:$0xff]
      %v2146 = vld [vmem:[#allocation2 + $0x30] sm:$0xff]
      %v2147 = vld [vmem:[#allocation2 + $0x38] sm:$0xff]
      %v2148 = vld [vmem:[#allocation2 + $0x40] sm:$0xff]
      %v2149 = vld [vmem:[#allocation2 + $0x48] sm:$0xff]
      %2159 = vrot.lane.b32.xlu0 %v2141, 29
      %v2160 = vpop.permute.xlu0 %2159
      %2161 = vrot.lane.b32.xlu0 %v2142, 29
      %v2162 = vpop.permute.xlu0 %2161
      %2163 = vrot.lane.b32.xlu0 %v2143, 29
      %v2164 = vpop.permute.xlu0 %2163
      %2165 = vrot.lane.b32.xlu0 %v2144, 29
      %v2166 = vpop.permute.xlu0 %2165
      %2167 = vrot.lane.b32.xlu0 %v2145, 29
      %v2168 = vpop.permute.xlu0 %2167
      %2169 = vrot.lane.b32.xlu0 %v2146, 29
      %v2170 = vpop.permute.xlu0 %2169
      %2171 = vrot.lane.b32.xlu0 %v2147, 29
      %v2172 = vpop.permute.xlu0 %2171
      %2173 = vrot.lane.b32.xlu0 %v2148, 29
      %v2174 = vpop.permute.xlu0 %2173
      %2175 = vrot.lane.b32.xlu0 %v2149, 29
      %v2176 = vpop.permute.xlu0 %2175
      %vm2177 = vcmask 236544
      %v2178 = vsel %vm2177, %v2160, %v2162
      %v2179 = vsel %vm2177, %v2162, %v2164
      %v2180 = vsel %vm2177, %v2164, %v2166
      %v2181 = vsel %vm2177, %v2166, %v2168
      %v2182 = vsel %vm2177, %v2168, %v2170
      %v2183 = vsel %vm2177, %v2170, %v2172
      %v2184 = vsel %vm2177, %v2172, %v2174
      %v2185 = vsel %vm2177, %v2174, %v2176
      %2194 = vst [vmem:[#allocation3 + $0xc0] sm:$0xff] %v2178
      %2195 = vst [vmem:[#allocation3 + $0xc8] sm:$0xff] %v2179
      %2196 = vst [vmem:[#allocation3 + $0xd0] sm:$0xff] %v2180
      %2197 = vst [vmem:[#allocation3 + $0xd8] sm:$0xff] %v2181
      %2198 = vst [vmem:[#allocation3 + $0xe0] sm:$0xff] %v2182
      %2199 = vst [vmem:[#allocation3 + $0xe8] sm:$0xff] %v2183
      %2200 = vst [vmem:[#allocation3 + $0xf0] sm:$0xff] %v2184
      %2201 = vst [vmem:[#allocation3 + $0xf8] sm:$0xff] %v2185
      %v2202 = vld [vmem:[#allocation2 + $0x8] sm:$0xff]
      %v2203 = vld [vmem:[#allocation2 + $0x10] sm:$0xff]
      %v2204 = vld [vmem:[#allocation2 + $0x18] sm:$0xff]
      %v2205 = vld [vmem:[#allocation2 + $0x20] sm:$0xff]
      %v2206 = vld [vmem:[#allocation2 + $0x28] sm:$0xff]
      %v2207 = vld [vmem:[#allocation2 + $0x30] sm:$0xff]
      %v2208 = vld [vmem:[#allocation2 + $0x38] sm:$0xff]
      %v2209 = vld [vmem:[#allocation2 + $0x40] sm:$0xff]
      %v2210 = vld [vmem:[#allocation2 + $0x48] sm:$0xff]
      %2220 = vrot.lane.b32.xlu0 %v2202, 28
      %v2221 = vpop.permute.xlu0 %2220
      %2222 = vrot.lane.b32.xlu0 %v2203, 28
      %v2223 = vpop.permute.xlu0 %2222
      %2224 = vrot.lane.b32.xlu0 %v2204, 28
      %v2225 = vpop.permute.xlu0 %2224
      %2226 = vrot.lane.b32.xlu0 %v2205, 28
      %v2227 = vpop.permute.xlu0 %2226
      %2228 = vrot.lane.b32.xlu0 %v2206, 28
      %v2229 = vpop.permute.xlu0 %2228
      %2230 = vrot.lane.b32.xlu0 %v2207, 28
      %v2231 = vpop.permute.xlu0 %2230
      %2232 = vrot.lane.b32.xlu0 %v2208, 28
      %v2233 = vpop.permute.xlu0 %2232
      %2234 = vrot.lane.b32.xlu0 %v2209, 28
      %v2235 = vpop.permute.xlu0 %2234
      %2236 = vrot.lane.b32.xlu0 %v2210, 28
      %v2237 = vpop.permute.xlu0 %2236
      %vm2238 = vcmask 228352
      %v2239 = vsel %vm2238, %v2221, %v2223
      %v2240 = vsel %vm2238, %v2223, %v2225
      %v2241 = vsel %vm2238, %v2225, %v2227
      %v2242 = vsel %vm2238, %v2227, %v2229
      %v2243 = vsel %vm2238, %v2229, %v2231
      %v2244 = vsel %vm2238, %v2231, %v2233
      %v2245 = vsel %vm2238, %v2233, %v2235
      %v2246 = vsel %vm2238, %v2235, %v2237
      %2255 = vst [vmem:[#allocation3 + $0x100] sm:$0xff] %v2239
      %2256 = vst [vmem:[#allocation3 + $0x108] sm:$0xff] %v2240
      %2257 = vst [vmem:[#allocation3 + $0x110] sm:$0xff] %v2241
      %2258 = vst [vmem:[#allocation3 + $0x118] sm:$0xff] %v2242
      %2259 = vst [vmem:[#allocation3 + $0x120] sm:$0xff] %v2243
      %2260 = vst [vmem:[#allocation3 + $0x128] sm:$0xff] %v2244
      %2261 = vst [vmem:[#allocation3 + $0x130] sm:$0xff] %v2245
      %2262 = vst [vmem:[#allocation3 + $0x138] sm:$0xff] %v2246
      %v2263 = vld [vmem:[#allocation2 + $0x8] sm:$0xff]
      %v2264 = vld [vmem:[#allocation2 + $0x10] sm:$0xff]
      %v2265 = vld [vmem:[#allocation2 + $0x18] sm:$0xff]
      %v2266 = vld [vmem:[#allocation2 + $0x20] sm:$0xff]
      %v2267 = vld [vmem:[#allocation2 + $0x28] sm:$0xff]
      %v2268 = vld [vmem:[#allocation2 + $0x30] sm:$0xff]
      %v2269 = vld [vmem:[#allocation2 + $0x38] sm:$0xff]
      %v2270 = vld [vmem:[#allocation2 + $0x40] sm:$0xff]
      %v2271 = vld [vmem:[#allocation2 + $0x48] sm:$0xff]
      %2281 = vrot.lane.b32.xlu0 %v2263, 27
      %v2282 = vpop.permute.xlu0 %2281
      %2283 = vrot.lane.b32.xlu0 %v2264, 27
      %v2284 = vpop.permute.xlu0 %2283
      %2285 = vrot.lane.b32.xlu0 %v2265, 27
      %v2286 = vpop.permute.xlu0 %2285
      %2287 = vrot.lane.b32.xlu0 %v2266, 27
      %v2288 = vpop.permute.xlu0 %2287
      %2289 = vrot.lane.b32.xlu0 %v2267, 27
      %v2290 = vpop.permute.xlu0 %2289
      %2291 = vrot.lane.b32.xlu0 %v2268, 27
      %v2292 = vpop.permute.xlu0 %2291
      %2293 = vrot.lane.b32.xlu0 %v2269, 27
      %v2294 = vpop.permute.xlu0 %2293
      %2295 = vrot.lane.b32.xlu0 %v2270, 27
      %v2296 = vpop.permute.xlu0 %2295
      %2297 = vrot.lane.b32.xlu0 %v2271, 27
      %v2298 = vpop.permute.xlu0 %2297
      %vm2299 = vcmask 220160
      %v2300 = vsel %vm2299, %v2282, %v2284
      %v2301 = vsel %vm2299, %v2284, %v2286
      %v2302 = vsel %vm2299, %v2286, %v2288
      %v2303 = vsel %vm2299, %v2288, %v2290
      %v2304 = vsel %vm2299, %v2290, %v2292
      %v2305 = vsel %vm2299, %v2292, %v2294
      %v2306 = vsel %vm2299, %v2294, %v2296
      %v2307 = vsel %vm2299, %v2296, %v2298
      %2316 = vst [vmem:[#allocation3 + $0x140] sm:$0xff] %v2300
      %2317 = vst [vmem:[#allocation3 + $0x148] sm:$0xff] %v2301
      %2318 = vst [vmem:[#allocation3 + $0x150] sm:$0xff] %v2302
      %2319 = vst [vmem:[#allocation3 + $0x158] sm:$0xff] %v2303
      %2320 = vst [vmem:[#allocation3 + $0x160] sm:$0xff] %v2304
      %2321 = vst [vmem:[#allocation3 + $0x168] sm:$0xff] %v2305
      %2322 = vst [vmem:[#allocation3 + $0x170] sm:$0xff] %v2306
      %2323 = vst [vmem:[#allocation3 + $0x178] sm:$0xff] %v2307
      %v2324 = vld [vmem:[#allocation2 + $0x8] sm:$0xff]
      %v2325 = vld [vmem:[#allocation2 + $0x10] sm:$0xff]
      %v2326 = vld [vmem:[#allocation2 + $0x18] sm:$0xff]
      %v2327 = vld [vmem:[#allocation2 + $0x20] sm:$0xff]
      %v2328 = vld [vmem:[#allocation2 + $0x28] sm:$0xff]
      %v2329 = vld [vmem:[#allocation2 + $0x30] sm:$0xff]
      %v2330 = vld [vmem:[#allocation2 + $0x38] sm:$0xff]
      %v2331 = vld [vmem:[#allocation2 + $0x40] sm:$0xff]
      %v2332 = vld [vmem:[#allocation2 + $0x48] sm:$0xff]
      %2342 = vrot.lane.b32.xlu0 %v2324, 19
      %v2343 = vpop.permute.xlu0 %2342
      %2344 = vrot.lane.b32.xlu0 %v2325, 19
      %v2345 = vpop.permute.xlu0 %2344
      %2346 = vrot.lane.b32.xlu0 %v2326, 19
      %v2347 = vpop.permute.xlu0 %2346
      %2348 = vrot.lane.b32.xlu0 %v2327, 19
      %v2349 = vpop.permute.xlu0 %2348
      %2350 = vrot.lane.b32.xlu0 %v2328, 19
      %v2351 = vpop.permute.xlu0 %2350
      %2352 = vrot.lane.b32.xlu0 %v2329, 19
      %v2353 = vpop.permute.xlu0 %2352
      %2354 = vrot.lane.b32.xlu0 %v2330, 19
      %v2355 = vpop.permute.xlu0 %2354
      %2356 = vrot.lane.b32.xlu0 %v2331, 19
      %v2357 = vpop.permute.xlu0 %2356
      %2358 = vrot.lane.b32.xlu0 %v2332, 19
      %v2359 = vpop.permute.xlu0 %2358
      %vm2360 = vcmask 154624
      %v2361 = vsel %vm2360, %v2343, %v2345
      %v2362 = vsel %vm2360, %v2345, %v2347
      %v2363 = vsel %vm2360, %v2347, %v2349
      %v2364 = vsel %vm2360, %v2349, %v2351
      %v2365 = vsel %vm2360, %v2351, %v2353
      %v2366 = vsel %vm2360, %v2353, %v2355
      %v2367 = vsel %vm2360, %v2355, %v2357
      %v2368 = vsel %vm2360, %v2357, %v2359
      %2377 = vst [vmem:[#allocation3 + $0x180] sm:$0xff] %v2361
      %2378 = vst [vmem:[#allocation3 + $0x188] sm:$0xff] %v2362
      %2379 = vst [vmem:[#allocation3 + $0x190] sm:$0xff] %v2363
      %2380 = vst [vmem:[#allocation3 + $0x198] sm:$0xff] %v2364
      %2381 = vst [vmem:[#allocation3 + $0x1a0] sm:$0xff] %v2365
      %2382 = vst [vmem:[#allocation3 + $0x1a8] sm:$0xff] %v2366
      %2383 = vst [vmem:[#allocation3 + $0x1b0] sm:$0xff] %v2367
      %2384 = vst [vmem:[#allocation3 + $0x1b8] sm:$0xff] %v2368
      %v2385 = vld [vmem:[#allocation2 + $0x8] sm:$0xff]
      %v2386 = vld [vmem:[#allocation2 + $0x10] sm:$0xff]
      %v2387 = vld [vmem:[#allocation2 + $0x18] sm:$0xff]
      %v2388 = vld [vmem:[#allocation2 + $0x20] sm:$0xff]
      %v2389 = vld [vmem:[#allocation2 + $0x28] sm:$0xff]
      %v2390 = vld [vmem:[#allocation2 + $0x30] sm:$0xff]
      %v2391 = vld [vmem:[#allocation2 + $0x38] sm:$0xff]
      %v2392 = vld [vmem:[#allocation2 + $0x40] sm:$0xff]
      %v2393 = vld [vmem:[#allocation2 + $0x48] sm:$0xff]
      %2403 = vrot.lane.b32.xlu0 %v2385, 18
      %v2404 = vpop.permute.xlu0 %2403
      %2405 = vrot.lane.b32.xlu0 %v2386, 18
      %v2406 = vpop.permute.xlu0 %2405
      %2407 = vrot.lane.b32.xlu0 %v2387, 18
      %v2408 = vpop.permute.xlu0 %2407
      %2409 = vrot.lane.b32.xlu0 %v2388, 18
      %v2410 = vpop.permute.xlu0 %2409
      %2411 = vrot.lane.b32.xlu0 %v2389, 18
      %v2412 = vpop.permute.xlu0 %2411
      %2413 = vrot.lane.b32.xlu0 %v2390, 18
      %v2414 = vpop.permute.xlu0 %2413
      %2415 = vrot.lane.b32.xlu0 %v2391, 18
      %v2416 = vpop.permute.xlu0 %2415
      %2417 = vrot.lane.b32.xlu0 %v2392, 18
      %v2418 = vpop.permute.xlu0 %2417
      %2419 = vrot.lane.b32.xlu0 %v2393, 18
      %v2420 = vpop.permute.xlu0 %2419
      %vm2421 = vcmask 146432
      %v2422 = vsel %vm2421, %v2404, %v2406
      %v2423 = vsel %vm2421, %v2406, %v2408
      %v2424 = vsel %vm2421, %v2408, %v2410
      %v2425 = vsel %vm2421, %v2410, %v2412
      %v2426 = vsel %vm2421, %v2412, %v2414
      %v2427 = vsel %vm2421, %v2414, %v2416
      %v2428 = vsel %vm2421, %v2416, %v2418
      %v2429 = vsel %vm2421, %v2418, %v2420
      %2438 = vst [vmem:[#allocation3 + $0x1c0] sm:$0xff] %v2422
      %2439 = vst [vmem:[#allocation3 + $0x1c8] sm:$0xff] %v2423
      %2440 = vst [vmem:[#allocation3 + $0x1d0] sm:$0xff] %v2424
      %2441 = vst [vmem:[#allocation3 + $0x1d8] sm:$0xff] %v2425
      %2442 = vst [vmem:[#allocation3 + $0x1e0] sm:$0xff] %v2426
      %2443 = vst [vmem:[#allocation3 + $0x1e8] sm:$0xff] %v2427
      %2444 = vst [vmem:[#allocation3 + $0x1f0] sm:$0xff] %v2428
      %2445 = vst [vmem:[#allocation3 + $0x1f8] sm:$0xff] %v2429
      %v2446 = vld [vmem:[#allocation2 + $0x8] sm:$0xff]
      %v2447 = vld [vmem:[#allocation2 + $0x10] sm:$0xff]
      %v2448 = vld [vmem:[#allocation2 + $0x18] sm:$0xff]
      %v2449 = vld [vmem:[#allocation2 + $0x20] sm:$0xff]
      %v2450 = vld [vmem:[#allocation2 + $0x28] sm:$0xff]
      %v2451 = vld [vmem:[#allocation2 + $0x30] sm:$0xff]
      %v2452 = vld [vmem:[#allocation2 + $0x38] sm:$0xff]
      %v2453 = vld [vmem:[#allocation2 + $0x40] sm:$0xff]
      %v2454 = vld [vmem:[#allocation2 + $0x48] sm:$0xff]
      %2464 = vrot.lane.b32.xlu0 %v2446, 17
      %v2465 = vpop.permute.xlu0 %2464
      %2466 = vrot.lane.b32.xlu0 %v2447, 17
      %v2467 = vpop.permute.xlu0 %2466
      %2468 = vrot.lane.b32.xlu0 %v2448, 17
      %v2469 = vpop.permute.xlu0 %2468
      %2470 = vrot.lane.b32.xlu0 %v2449, 17
      %v2471 = vpop.permute.xlu0 %2470
      %2472 = vrot.lane.b32.xlu0 %v2450, 17
      %v2473 = vpop.permute.xlu0 %2472
      %2474 = vrot.lane.b32.xlu0 %v2451, 17
      %v2475 = vpop.permute.xlu0 %2474
      %2476 = vrot.lane.b32.xlu0 %v2452, 17
      %v2477 = vpop.permute.xlu0 %2476
      %2478 = vrot.lane.b32.xlu0 %v2453, 17
      %v2479 = vpop.permute.xlu0 %2478
      %2480 = vrot.lane.b32.xlu0 %v2454, 17
      %v2481 = vpop.permute.xlu0 %2480
      %vm2482 = vcmask 138240
      %v2483 = vsel %vm2482, %v2465, %v2467
      %v2484 = vsel %vm2482, %v2467, %v2469
      %v2485 = vsel %vm2482, %v2469, %v2471
      %v2486 = vsel %vm2482, %v2471, %v2473
      %v2487 = vsel %vm2482, %v2473, %v2475
      %v2488 = vsel %vm2482, %v2475, %v2477
      %v2489 = vsel %vm2482, %v2477, %v2479
      %v2490 = vsel %vm2482, %v2479, %v2481
      %2499 = vst [vmem:[#allocation3 + $0x200] sm:$0xff] %v2483
      %2500 = vst [vmem:[#allocation3 + $0x208] sm:$0xff] %v2484
      %2501 = vst [vmem:[#allocation3 + $0x210] sm:$0xff] %v2485
      %2502 = vst [vmem:[#allocation3 + $0x218] sm:$0xff] %v2486
      %2503 = vst [vmem:[#allocation3 + $0x220] sm:$0xff] %v2487
      %2504 = vst [vmem:[#allocation3 + $0x228] sm:$0xff] %v2488
      %2505 = vst [vmem:[#allocation3 + $0x230] sm:$0xff] %v2489
      %2506 = vst [vmem:[#allocation3 + $0x238] sm:$0xff] %v2490
      %s2507 = scalar_lea.vmem %s1, 16
      %v2508 = vld [vmem:[%s2507] sm:$0xff]
      %v2509 = vld [vmem:[#allocation3] sm:$0xff]
      %v2510 = vld [vmem:[#allocation3 + $0x8] sm:$0xff]
      %v2511 = vld [vmem:[#allocation3 + $0x10] sm:$0xff]
      %v2512 = vld [vmem:[#allocation3 + $0x18] sm:$0xff]
      %v2513 = vld [vmem:[#allocation3 + $0x20] sm:$0xff]
      %v2514 = vld [vmem:[#allocation3 + $0x28] sm:$0xff]
      %v2515 = vld [vmem:[#allocation3 + $0x30] sm:$0xff]
      %v2516 = vld [vmem:[#allocation3 + $0x38] sm:$0xff]
      %v2517 = vld [vmem:[#allocation3 + $0x40] sm:$0xff]
      %v2518 = vld [vmem:[#allocation3 + $0x48] sm:$0xff]
      %v2519 = vld [vmem:[#allocation3 + $0x50] sm:$0xff]
      %v2520 = vld [vmem:[#allocation3 + $0x58] sm:$0xff]
      %v2521 = vld [vmem:[#allocation3 + $0x60] sm:$0xff]
      %v2522 = vld [vmem:[#allocation3 + $0x68] sm:$0xff]
      %v2523 = vld [vmem:[#allocation3 + $0x70] sm:$0xff]
      %v2524 = vld [vmem:[#allocation3 + $0x78] sm:$0xff]
      %v2525 = vld [vmem:[#allocation3 + $0x80] sm:$0xff]
      %v2526 = vld [vmem:[#allocation3 + $0x88] sm:$0xff]
      %v2527 = vld [vmem:[#allocation3 + $0x90] sm:$0xff]
      %v2528 = vld [vmem:[#allocation3 + $0x98] sm:$0xff]
      %v2529 = vld [vmem:[#allocation3 + $0xa0] sm:$0xff]
      %v2530 = vld [vmem:[#allocation3 + $0xa8] sm:$0xff]
      %v2531 = vld [vmem:[#allocation3 + $0xb0] sm:$0xff]
      %v2532 = vld [vmem:[#allocation3 + $0xb8] sm:$0xff]
      %v2533 = vld [vmem:[#allocation3 + $0xc0] sm:$0xff]
      %v2534 = vld [vmem:[#allocation3 + $0xc8] sm:$0xff]
      %v2535 = vld [vmem:[#allocation3 + $0xd0] sm:$0xff]
      %v2536 = vld [vmem:[#allocation3 + $0xd8] sm:$0xff]
      %v2537 = vld [vmem:[#allocation3 + $0xe0] sm:$0xff]
      %v2538 = vld [vmem:[#allocation3 + $0xe8] sm:$0xff]
      %v2539 = vld [vmem:[#allocation3 + $0xf0] sm:$0xff]
      %v2540 = vld [vmem:[#allocation3 + $0xf8] sm:$0xff]
      %v2541 = vld [vmem:[#allocation3 + $0x100] sm:$0xff]
      %v2542 = vld [vmem:[#allocation3 + $0x108] sm:$0xff]
      %v2543 = vld [vmem:[#allocation3 + $0x110] sm:$0xff]
      %v2544 = vld [vmem:[#allocation3 + $0x118] sm:$0xff]
      %v2545 = vld [vmem:[#allocation3 + $0x120] sm:$0xff]
      %v2546 = vld [vmem:[#allocation3 + $0x128] sm:$0xff]
      %v2547 = vld [vmem:[#allocation3 + $0x130] sm:$0xff]
      %v2548 = vld [vmem:[#allocation3 + $0x138] sm:$0xff]
      %v2549 = vld [vmem:[#allocation3 + $0x140] sm:$0xff]
      %v2550 = vld [vmem:[#allocation3 + $0x148] sm:$0xff]
      %v2551 = vld [vmem:[#allocation3 + $0x150] sm:$0xff]
      %v2552 = vld [vmem:[#allocation3 + $0x158] sm:$0xff]
      %v2553 = vld [vmem:[#allocation3 + $0x160] sm:$0xff]
      %v2554 = vld [vmem:[#allocation3 + $0x168] sm:$0xff]
      %v2555 = vld [vmem:[#allocation3 + $0x170] sm:$0xff]
      %v2556 = vld [vmem:[#allocation3 + $0x178] sm:$0xff]
      %v2557 = vld [vmem:[#allocation3 + $0x180] sm:$0xff]
      %v2558 = vld [vmem:[#allocation3 + $0x188] sm:$0xff]
      %v2559 = vld [vmem:[#allocation3 + $0x190] sm:$0xff]
      %v2560 = vld [vmem:[#allocation3 + $0x198] sm:$0xff]
      %v2561 = vld [vmem:[#allocation3 + $0x1a0] sm:$0xff]
      %v2562 = vld [vmem:[#allocation3 + $0x1a8] sm:$0xff]
      %v2563 = vld [vmem:[#allocation3 + $0x1b0] sm:$0xff]
      %v2564 = vld [vmem:[#allocation3 + $0x1b8] sm:$0xff]
      %v2565 = vld [vmem:[#allocation3 + $0x1c0] sm:$0xff]
      %v2566 = vld [vmem:[#allocation3 + $0x1c8] sm:$0xff]
      %v2567 = vld [vmem:[#allocation3 + $0x1d0] sm:$0xff]
      %v2568 = vld [vmem:[#allocation3 + $0x1d8] sm:$0xff]
      %v2569 = vld [vmem:[#allocation3 + $0x1e0] sm:$0xff]
      %v2570 = vld [vmem:[#allocation3 + $0x1e8] sm:$0xff]
      %v2571 = vld [vmem:[#allocation3 + $0x1f0] sm:$0xff]
      %v2572 = vld [vmem:[#allocation3 + $0x1f8] sm:$0xff]
      %v2573 = vld [vmem:[#allocation3 + $0x200] sm:$0xff]
      %v2574 = vld [vmem:[#allocation3 + $0x208] sm:$0xff]
      %v2575 = vld [vmem:[#allocation3 + $0x210] sm:$0xff]
      %v2576 = vld [vmem:[#allocation3 + $0x218] sm:$0xff]
      %v2577 = vld [vmem:[#allocation3 + $0x220] sm:$0xff]
      %v2578 = vld [vmem:[#allocation3 + $0x228] sm:$0xff]
      %v2579 = vld [vmem:[#allocation3 + $0x230] sm:$0xff]
      %v2580 = vld [vmem:[#allocation3 + $0x238] sm:$0xff]
      %v2582 = vunpack.c.l.b16 %v2508
      %v2583 = vunpack.c.h.b16 %v2508
      %v2584 = vpack.c.b16 %v2582, %v2582
      %v2585 = vpack.c.b16 %v2583, %v2583
      %v2588 = vsel %vm1023, %v2585, 0
      %2590 = vmatprep.subr.bf16.mxu0 %v2510
      %2591 = vmatpush1.bf16.msra.mxu0 %v2509
      %2592 = vmatprep.subr.bf16.mxu0 %v2518
      %2593 = vmatpush1.bf16.msra.mxu0 %v2517
      %2594 = vmatprep.subr.bf16.mxu0 %v2526
      %2595 = vmatpush1.bf16.msra.mxu0 %v2525
      %2596 = vmatprep.subr.bf16.mxu0 %v2534
      %2597 = vmatpush1.bf16.msra.mxu0 %v2533
      %2598 = vmatprep.subr.bf16.mxu0 %v2542
      %2599 = vmatpush1.bf16.msra.mxu0 %v2541
      %2600 = vmatprep.subr.bf16.mxu0 %v2550
      %2601 = vmatpush1.bf16.msra.mxu0 %v2549
      %2602 = vmatprep.subr.bf16.mxu0 %v2558
      %2603 = vmatpush1.bf16.msra.mxu0 %v2557
      %2604 = vmatprep.subr.bf16.mxu0 %v2566
      %2605 = vmatpush1.bf16.msra.mxu0 %v2565
      %2606 = vmatprep.subr.bf16.mxu0 %v2574
      %2607 = vmatpush1.bf16.msra.mxu0 %v2573
      %2608 = vmatprep.subr.bf16.mxu0 0
      %2609 = vmatpush1.bf16.msra.mxu0 0
      %2610 = vmatprep.subr.bf16.mxu0 0
      %2611 = vmatpush1.bf16.msra.mxu0 0
      %2612 = vmatprep.subr.bf16.mxu0 0
      %2613 = vmatpush1.bf16.msra.mxu0 0
      %2614 = vmatprep.subr.bf16.mxu0 0
      %2615 = vmatpush1.bf16.msra.mxu0 0
      %2616 = vmatprep.subr.bf16.mxu0 0
      %2617 = vmatpush1.bf16.msra.mxu0 0
      %2618 = vmatprep.subr.bf16.mxu0 0
      %2619 = vmatpush1.bf16.msra.mxu0 0
      %2620 = vmatprep.subr.bf16.mxu0 0
      %2621 = vmatpush1.bf16.msra.mxu0 0
      %2622 = vmatprep.mubr.bf16.mxu0 %v2588
      %2623 = vmatmul.mubr.bf16.gmra.mrb[0].mxu0 %v2584
      %v2624 = vpop.f32.mrb[0].mxu0
      %v2625 = vadd.f32 0.0, %v2624
      %v2626 = vpop.f32.mrb[0].mxu0
      %v2627 = vadd.f32 0.0, %v2626
      %v2628 = vpop.f32.mrb[0].mxu0
      %v2629 = vpop.f32.mrb[0].mxu0
      %2630 = vdwg.mxu0
      %2631 = vmatprep.subr.bf16.mxu0 %v2512
      %2632 = vmatpush1.bf16.msra.mxu0 %v2511
      %2633 = vmatprep.subr.bf16.mxu0 %v2520
      %2634 = vmatpush1.bf16.msra.mxu0 %v2519
      %2635 = vmatprep.subr.bf16.mxu0 %v2528
      %2636 = vmatpush1.bf16.msra.mxu0 %v2527
      %2637 = vmatprep.subr.bf16.mxu0 %v2536
      %2638 = vmatpush1.bf16.msra.mxu0 %v2535
      %2639 = vmatprep.subr.bf16.mxu0 %v2544
      %2640 = vmatpush1.bf16.msra.mxu0 %v2543
      %2641 = vmatprep.subr.bf16.mxu0 %v2552
      %2642 = vmatpush1.bf16.msra.mxu0 %v2551
      %2643 = vmatprep.subr.bf16.mxu0 %v2560
      %2644 = vmatpush1.bf16.msra.mxu0 %v2559
      %2645 = vmatprep.subr.bf16.mxu0 %v2568
      %2646 = vmatpush1.bf16.msra.mxu0 %v2567
      %2647 = vmatprep.subr.bf16.mxu0 %v2576
      %2648 = vmatpush1.bf16.msra.mxu0 %v2575
      %2649 = vmatprep.subr.bf16.mxu0 0
      %2650 = vmatpush1.bf16.msra.mxu0 0
      %2651 = vmatprep.subr.bf16.mxu0 0
      %2652 = vmatpush1.bf16.msra.mxu0 0
      %2653 = vmatprep.subr.bf16.mxu0 0
      %2654 = vmatpush1.bf16.msra.mxu0 0
      %2655 = vmatprep.subr.bf16.mxu0 0
      %2656 = vmatpush1.bf16.msra.mxu0 0
      %2657 = vmatprep.subr.bf16.mxu0 0
      %2658 = vmatpush1.bf16.msra.mxu0 0
      %2659 = vmatprep.subr.bf16.mxu0 0
      %2660 = vmatpush1.bf16.msra.mxu0 0
      %2661 = vmatprep.subr.bf16.mxu0 0
      %2662 = vmatpush1.bf16.msra.mxu0 0
      %2663 = vmatprep.mubr.bf16.mxu0 %v2588
      %2664 = vmatmul.mubr.bf16.gmra.mrb[0].mxu0 %v2584
      %v2665 = vpop.f32.mrb[0].mxu0
      %v2666 = vadd.f32 0.0, %v2665
      %v2667 = vpop.f32.mrb[0].mxu0
      %v2668 = vadd.f32 0.0, %v2667
      %v2669 = vpop.f32.mrb[0].mxu0
      %v2670 = vpop.f32.mrb[0].mxu0
      %2671 = vdwg.mxu0
      %2672 = vmatprep.subr.bf16.mxu0 %v2514
      %2673 = vmatpush1.bf16.msra.mxu0 %v2513
      %2674 = vmatprep.subr.bf16.mxu0 %v2522
      %2675 = vmatpush1.bf16.msra.mxu0 %v2521
      %2676 = vmatprep.subr.bf16.mxu0 %v2530
      %2677 = vmatpush1.bf16.msra.mxu0 %v2529
      %2678 = vmatprep.subr.bf16.mxu0 %v2538
      %2679 = vmatpush1.bf16.msra.mxu0 %v2537
      %2680 = vmatprep.subr.bf16.mxu0 %v2546
      %2681 = vmatpush1.bf16.msra.mxu0 %v2545
      %2682 = vmatprep.subr.bf16.mxu0 %v2554
      %2683 = vmatpush1.bf16.msra.mxu0 %v2553
      %2684 = vmatprep.subr.bf16.mxu0 %v2562
      %2685 = vmatpush1.bf16.msra.mxu0 %v2561
      %2686 = vmatprep.subr.bf16.mxu0 %v2570
      %2687 = vmatpush1.bf16.msra.mxu0 %v2569
      %2688 = vmatprep.subr.bf16.mxu0 %v2578
      %2689 = vmatpush1.bf16.msra.mxu0 %v2577
      %2690 = vmatprep.subr.bf16.mxu0 0
      %2691 = vmatpush1.bf16.msra.mxu0 0
      %2692 = vmatprep.subr.bf16.mxu0 0
      %2693 = vmatpush1.bf16.msra.mxu0 0
      %2694 = vmatprep.subr.bf16.mxu0 0
      %2695 = vmatpush1.bf16.msra.mxu0 0
      %2696 = vmatprep.subr.bf16.mxu0 0
      %2697 = vmatpush1.bf16.msra.mxu0 0
      %2698 = vmatprep.subr.bf16.mxu0 0
      %2699 = vmatpush1.bf16.msra.mxu0 0
      %2700 = vmatprep.subr.bf16.mxu0 0
      %2701 = vmatpush1.bf16.msra.mxu0 0
      %2702 = vmatprep.subr.bf16.mxu0 0
      %2703 = vmatpush1.bf16.msra.mxu0 0
      %2704 = vmatprep.mubr.bf16.mxu0 %v2588
      %2705 = vmatmul.mubr.bf16.gmra.mrb[0].mxu0 %v2584
      %v2706 = vpop.f32.mrb[0].mxu0
      %v2707 = vadd.f32 0.0, %v2706
      %v2708 = vpop.f32.mrb[0].mxu0
      %v2709 = vadd.f32 0.0, %v2708
      %v2710 = vpop.f32.mrb[0].mxu0
      %v2711 = vpop.f32.mrb[0].mxu0
      %2712 = vdwg.mxu0
      %2713 = vmatprep.subr.bf16.mxu0 %v2516
      %2714 = vmatpush1.bf16.msra.mxu0 %v2515
      %2715 = vmatprep.subr.bf16.mxu0 %v2524
      %2716 = vmatpush1.bf16.msra.mxu0 %v2523
      %2717 = vmatprep.subr.bf16.mxu0 %v2532
      %2718 = vmatpush1.bf16.msra.mxu0 %v2531
      %2719 = vmatprep.subr.bf16.mxu0 %v2540
      %2720 = vmatpush1.bf16.msra.mxu0 %v2539
      %2721 = vmatprep.subr.bf16.mxu0 %v2548
      %2722 = vmatpush1.bf16.msra.mxu0 %v2547
      %2723 = vmatprep.subr.bf16.mxu0 %v2556
      %2724 = vmatpush1.bf16.msra.mxu0 %v2555
      %2725 = vmatprep.subr.bf16.mxu0 %v2564
      %2726 = vmatpush1.bf16.msra.mxu0 %v2563
      %2727 = vmatprep.subr.bf16.mxu0 %v2572
      %2728 = vmatpush1.bf16.msra.mxu0 %v2571
      %2729 = vmatprep.subr.bf16.mxu0 %v2580
      %2730 = vmatpush1.bf16.msra.mxu0 %v2579
      %2731 = vmatprep.subr.bf16.mxu0 0
      %2732 = vmatpush1.bf16.msra.mxu0 0
      %2733 = vmatprep.subr.bf16.mxu0 0
      %2734 = vmatpush1.bf16.msra.mxu0 0
      %2735 = vmatprep.subr.bf16.mxu0 0
      %2736 = vmatpush1.bf16.msra.mxu0 0
      %2737 = vmatprep.subr.bf16.mxu0 0
      %2738 = vmatpush1.bf16.msra.mxu0 0
      %2739 = vmatprep.subr.bf16.mxu0 0
      %2740 = vmatpush1.bf16.msra.mxu0 0
      %2741 = vmatprep.subr.bf16.mxu0 0
      %2742 = vmatpush1.bf16.msra.mxu0 0
      %2743 = vmatprep.subr.bf16.mxu0 0
      %2744 = vmatpush1.bf16.msra.mxu0 0
      %2745 = vmatprep.mubr.bf16.mxu0 %v2588
      %2746 = vmatmul.mubr.bf16.gmra.mrb[0].mxu0 %v2584
      %v2747 = vpop.f32.mrb[0].mxu0
      %v2748 = vadd.f32 0.0, %v2747
      %v2749 = vpop.f32.mrb[0].mxu0
      %v2750 = vadd.f32 0.0, %v2749
      %v2751 = vpop.f32.mrb[0].mxu0
      %v2752 = vpop.f32.mrb[0].mxu0
      %2753 = vdwg.mxu0
      %v2754 = vadd.f32 %v1950, %v2625
      %v2755 = vadd.f32 %v1951, %v2627
      %v2756 = vadd.f32 %v1952, %v2666
      %v2757 = vadd.f32 %v1953, %v2668
      %v2758 = vadd.f32 %v1954, %v2707
      %v2759 = vadd.f32 %v1955, %v2709
      %v2760 = vadd.f32 %v1956, %v2748
      %v2761 = vadd.f32 %v1957, %v2750
      %v2762 = vmax.f32 %v2754, 0.0
      %v2763 = vmax.f32 %v2755, 0.0
      %v2764 = vmax.f32 %v2756, 0.0
      %v2765 = vmax.f32 %v2757, 0.0
      %v2766 = vmax.f32 %v2758, 0.0
      %v2767 = vmax.f32 %v2759, 0.0
      %v2768 = vmax.f32 %v2760, 0.0
      %v2769 = vmax.f32 %v2761, 0.0
      %v2771 = vlaneseq
      %v2772 = vshrl.u32 %v2771, 7
      %v2773 = vsub.s32 0, %v2772
      %v2774 = vrot.slane %v368, %v2773
      %v2775 = vlaneseq
      %v2776 = vshrl.u32 %v2775, 7
      %v2777 = vsub.s32 1, %v2776
      %v2778 = vrot.slane %v368, %v2777
      %v2779 = vlaneseq
      %v2780 = vshrl.u32 %v2779, 7
      %v2781 = vsub.s32 2, %v2780
      %v2782 = vrot.slane %v368, %v2781
      %v2783 = vlaneseq
      %v2784 = vshrl.u32 %v2783, 7
      %v2785 = vsub.s32 3, %v2784
      %v2786 = vrot.slane %v368, %v2785
      %v2787 = vlaneseq
      %v2788 = vshrl.u32 %v2787, 7
      %v2789 = vsub.s32 4, %v2788
      %v2790 = vrot.slane %v368, %v2789
      %v2791 = vlaneseq
      %v2792 = vshrl.u32 %v2791, 7
      %v2793 = vsub.s32 5, %v2792
      %v2794 = vrot.slane %v368, %v2793
      %v2795 = vlaneseq
      %v2796 = vshrl.u32 %v2795, 7
      %v2797 = vsub.s32 6, %v2796
      %v2798 = vrot.slane %v368, %v2797
      %v2799 = vlaneseq
      %v2800 = vshrl.u32 %v2799, 7
      %v2801 = vsub.s32 7, %v2800
      %v2802 = vrot.slane %v368, %v2801
      %v2811 = vmul.f32 %v2762, %v2774
      %v2812 = vmul.f32 %v2763, %v2778
      %v2813 = vmul.f32 %v2764, %v2782
      %v2814 = vmul.f32 %v2765, %v2786
      %v2815 = vmul.f32 %v2766, %v2790
      %v2816 = vmul.f32 %v2767, %v2794
      %v2817 = vmul.f32 %v2768, %v2798
      %v2818 = vmul.f32 %v2769, %v2802
      %v2819 = vpack.c.bf16 %v2811, %v2811
      %v2820 = vpack.c.bf16 %v2812, %v2812
      %v2821 = vpack.c.bf16 %v2813, %v2813
      %v2822 = vpack.c.bf16 %v2814, %v2814
      %v2823 = vpack.c.bf16 %v2815, %v2815
      %v2824 = vpack.c.bf16 %v2816, %v2816
      %v2825 = vpack.c.bf16 %v2817, %v2817
      %v2826 = vpack.c.bf16 %v2818, %v2818
      %2827 = vst [vmem:[#allocation2 + $0x8] sm:$0xf] %v2819
      %2828 = vst [vmem:[#allocation2 + $0x10] sm:$0xf] %v2820
      %2829 = vst [vmem:[#allocation2 + $0x18] sm:$0xf] %v2821
      %2830 = vst [vmem:[#allocation2 + $0x20] sm:$0xf] %v2822
      %2831 = vst [vmem:[#allocation2 + $0x28] sm:$0xf] %v2823
      %2832 = vst [vmem:[#allocation2 + $0x30] sm:$0xf] %v2824
      %2833 = vst [vmem:[#allocation2 + $0x38] sm:$0xf] %v2825
      %2834 = vst [vmem:[#allocation2 + $0x40] sm:$0xf] %v2826
      %v2835 = vld [vmem:[%s4] sm:$0xff]
      %v2836 = vld [vmem:[%s4 + $0x8] sm:$0xff]
      %v2837 = vld [vmem:[%s4 + $0x10] sm:$0xff]
      %v2838 = vld [vmem:[%s4 + $0x18] sm:$0xff]
      %v2839 = vld [vmem:[%s4 + $0x20] sm:$0xff]
      %v2840 = vld [vmem:[%s4 + $0x28] sm:$0xff]
      %v2841 = vld [vmem:[%s4 + $0x30] sm:$0xff]
      %v2842 = vld [vmem:[%s4 + $0x38] sm:$0xff]
      %v2843 = vld [vmem:[#allocation2] sm:$0xff]
      %v2844 = vld [vmem:[#allocation2 + $0x8] sm:$0xff]
      %v2845 = vld [vmem:[#allocation2 + $0x10] sm:$0xff]
      %v2846 = vld [vmem:[#allocation2 + $0x18] sm:$0xff]
      %v2847 = vld [vmem:[#allocation2 + $0x20] sm:$0xff]
      %v2848 = vld [vmem:[#allocation2 + $0x28] sm:$0xff]
      %v2849 = vld [vmem:[#allocation2 + $0x30] sm:$0xff]
      %v2850 = vld [vmem:[#allocation2 + $0x38] sm:$0xff]
      %v2851 = vld [vmem:[#allocation2 + $0x40] sm:$0xff]
      %2861 = vrot.lane.b32.xlu0 %v2843, 111
      %v2862 = vpop.permute.xlu0 %2861
      %2863 = vrot.lane.b32.xlu0 %v2844, 111
      %v2864 = vpop.permute.xlu0 %2863
      %2865 = vrot.lane.b32.xlu0 %v2845, 111
      %v2866 = vpop.permute.xlu0 %2865
      %2867 = vrot.lane.b32.xlu0 %v2846, 111
      %v2868 = vpop.permute.xlu0 %2867
      %2869 = vrot.lane.b32.xlu0 %v2847, 111
      %v2870 = vpop.permute.xlu0 %2869
      %2871 = vrot.lane.b32.xlu0 %v2848, 111
      %v2872 = vpop.permute.xlu0 %2871
      %2873 = vrot.lane.b32.xlu0 %v2849, 111
      %v2874 = vpop.permute.xlu0 %2873
      %2875 = vrot.lane.b32.xlu0 %v2850, 111
      %v2876 = vpop.permute.xlu0 %2875
      %2877 = vrot.lane.b32.xlu0 %v2851, 111
      %v2878 = vpop.permute.xlu0 %2877
      %v2879 = vsel %vm431, %v2862, %v2864
      %v2880 = vsel %vm431, %v2864, %v2866
      %v2881 = vsel %vm431, %v2866, %v2868
      %v2882 = vsel %vm431, %v2868, %v2870
      %v2883 = vsel %vm431, %v2870, %v2872
      %v2884 = vsel %vm431, %v2872, %v2874
      %v2885 = vsel %vm431, %v2874, %v2876
      %v2886 = vsel %vm431, %v2876, %v2878
      %2895 = vst [vmem:[#allocation3] sm:$0xff] %v2879
      %2896 = vst [vmem:[#allocation3 + $0x8] sm:$0xff] %v2880
      %2897 = vst [vmem:[#allocation3 + $0x10] sm:$0xff] %v2881
      %2898 = vst [vmem:[#allocation3 + $0x18] sm:$0xff] %v2882
      %2899 = vst [vmem:[#allocation3 + $0x20] sm:$0xff] %v2883
      %2900 = vst [vmem:[#allocation3 + $0x28] sm:$0xff] %v2884
      %2901 = vst [vmem:[#allocation3 + $0x30] sm:$0xff] %v2885
      %2902 = vst [vmem:[#allocation3 + $0x38] sm:$0xff] %v2886
      %v2903 = vld [vmem:[#allocation2] sm:$0xff]
      %v2904 = vld [vmem:[#allocation2 + $0x8] sm:$0xff]
      %v2905 = vld [vmem:[#allocation2 + $0x10] sm:$0xff]
      %v2906 = vld [vmem:[#allocation2 + $0x18] sm:$0xff]
      %v2907 = vld [vmem:[#allocation2 + $0x20] sm:$0xff]
      %v2908 = vld [vmem:[#allocation2 + $0x28] sm:$0xff]
      %v2909 = vld [vmem:[#allocation2 + $0x30] sm:$0xff]
      %v2910 = vld [vmem:[#allocation2 + $0x38] sm:$0xff]
      %v2911 = vld [vmem:[#allocation2 + $0x40] sm:$0xff]
      %2921 = vrot.lane.b32.xlu0 %v2903, 110
      %v2922 = vpop.permute.xlu0 %2921
      %2923 = vrot.lane.b32.xlu0 %v2904, 110
      %v2924 = vpop.permute.xlu0 %2923
      %2925 = vrot.lane.b32.xlu0 %v2905, 110
      %v2926 = vpop.permute.xlu0 %2925
      %2927 = vrot.lane.b32.xlu0 %v2906, 110
      %v2928 = vpop.permute.xlu0 %2927
      %2929 = vrot.lane.b32.xlu0 %v2907, 110
      %v2930 = vpop.permute.xlu0 %2929
      %2931 = vrot.lane.b32.xlu0 %v2908, 110
      %v2932 = vpop.permute.xlu0 %2931
      %2933 = vrot.lane.b32.xlu0 %v2909, 110
      %v2934 = vpop.permute.xlu0 %2933
      %2935 = vrot.lane.b32.xlu0 %v2910, 110
      %v2936 = vpop.permute.xlu0 %2935
      %2937 = vrot.lane.b32.xlu0 %v2911, 110
      %v2938 = vpop.permute.xlu0 %2937
      %v2939 = vsel %vm492, %v2922, %v2924
      %v2940 = vsel %vm492, %v2924, %v2926
      %v2941 = vsel %vm492, %v2926, %v2928
      %v2942 = vsel %vm492, %v2928, %v2930
      %v2943 = vsel %vm492, %v2930, %v2932
      %v2944 = vsel %vm492, %v2932, %v2934
      %v2945 = vsel %vm492, %v2934, %v2936
      %v2946 = vsel %vm492, %v2936, %v2938
      %2955 = vst [vmem:[#allocation3 + $0x40] sm:$0xff] %v2939
      %2956 = vst [vmem:[#allocation3 + $0x48] sm:$0xff] %v2940
      %2957 = vst [vmem:[#allocation3 + $0x50] sm:$0xff] %v2941
      %2958 = vst [vmem:[#allocation3 + $0x58] sm:$0xff] %v2942
      %2959 = vst [vmem:[#allocation3 + $0x60] sm:$0xff] %v2943
      %2960 = vst [vmem:[#allocation3 + $0x68] sm:$0xff] %v2944
      %2961 = vst [vmem:[#allocation3 + $0x70] sm:$0xff] %v2945
      %2962 = vst [vmem:[#allocation3 + $0x78] sm:$0xff] %v2946
      %v2963 = vld [vmem:[#allocation2] sm:$0xff]
      %v2964 = vld [vmem:[#allocation2 + $0x8] sm:$0xff]
      %v2965 = vld [vmem:[#allocation2 + $0x10] sm:$0xff]
      %v2966 = vld [vmem:[#allocation2 + $0x18] sm:$0xff]
      %v2967 = vld [vmem:[#allocation2 + $0x20] sm:$0xff]
      %v2968 = vld [vmem:[#allocation2 + $0x28] sm:$0xff]
      %v2969 = vld [vmem:[#allocation2 + $0x30] sm:$0xff]
      %v2970 = vld [vmem:[#allocation2 + $0x38] sm:$0xff]
      %v2971 = vld [vmem:[#allocation2 + $0x40] sm:$0xff]
      %2981 = vrot.lane.b32.xlu0 %v2963, 109
      %v2982 = vpop.permute.xlu0 %2981
      %2983 = vrot.lane.b32.xlu0 %v2964, 109
      %v2984 = vpop.permute.xlu0 %2983
      %2985 = vrot.lane.b32.xlu0 %v2965, 109
      %v2986 = vpop.permute.xlu0 %2985
      %2987 = vrot.lane.b32.xlu0 %v2966, 109
      %v2988 = vpop.permute.xlu0 %2987
      %2989 = vrot.lane.b32.xlu0 %v2967, 109
      %v2990 = vpop.permute.xlu0 %2989
      %2991 = vrot.lane.b32.xlu0 %v2968, 109
      %v2992 = vpop.permute.xlu0 %2991
      %2993 = vrot.lane.b32.xlu0 %v2969, 109
      %v2994 = vpop.permute.xlu0 %2993
      %2995 = vrot.lane.b32.xlu0 %v2970, 109
      %v2996 = vpop.permute.xlu0 %2995
      %2997 = vrot.lane.b32.xlu0 %v2971, 109
      %v2998 = vpop.permute.xlu0 %2997
      %v2999 = vsel %vm553, %v2982, %v2984
      %v3000 = vsel %vm553, %v2984, %v2986
      %v3001 = vsel %vm553, %v2986, %v2988
      %v3002 = vsel %vm553, %v2988, %v2990
      %v3003 = vsel %vm553, %v2990, %v2992
      %v3004 = vsel %vm553, %v2992, %v2994
      %v3005 = vsel %vm553, %v2994, %v2996
      %v3006 = vsel %vm553, %v2996, %v2998
      %3015 = vst [vmem:[#allocation3 + $0x80] sm:$0xff] %v2999
      %3016 = vst [vmem:[#allocation3 + $0x88] sm:$0xff] %v3000
      %3017 = vst [vmem:[#allocation3 + $0x90] sm:$0xff] %v3001
      %3018 = vst [vmem:[#allocation3 + $0x98] sm:$0xff] %v3002
      %3019 = vst [vmem:[#allocation3 + $0xa0] sm:$0xff] %v3003
      %3020 = vst [vmem:[#allocation3 + $0xa8] sm:$0xff] %v3004
      %3021 = vst [vmem:[#allocation3 + $0xb0] sm:$0xff] %v3005
      %3022 = vst [vmem:[#allocation3 + $0xb8] sm:$0xff] %v3006
      %v3023 = vld [vmem:[#allocation2] sm:$0xff]
      %v3024 = vld [vmem:[#allocation2 + $0x8] sm:$0xff]
      %v3025 = vld [vmem:[#allocation2 + $0x10] sm:$0xff]
      %v3026 = vld [vmem:[#allocation2 + $0x18] sm:$0xff]
      %v3027 = vld [vmem:[#allocation2 + $0x20] sm:$0xff]
      %v3028 = vld [vmem:[#allocation2 + $0x28] sm:$0xff]
      %v3029 = vld [vmem:[#allocation2 + $0x30] sm:$0xff]
      %v3030 = vld [vmem:[#allocation2 + $0x38] sm:$0xff]
      %v3031 = vld [vmem:[#allocation2 + $0x40] sm:$0xff]
      %3041 = vrot.lane.b32.xlu0 %v3023, 101
      %v3042 = vpop.permute.xlu0 %3041
      %3043 = vrot.lane.b32.xlu0 %v3024, 101
      %v3044 = vpop.permute.xlu0 %3043
      %3045 = vrot.lane.b32.xlu0 %v3025, 101
      %v3046 = vpop.permute.xlu0 %3045
      %3047 = vrot.lane.b32.xlu0 %v3026, 101
      %v3048 = vpop.permute.xlu0 %3047
      %3049 = vrot.lane.b32.xlu0 %v3027, 101
      %v3050 = vpop.permute.xlu0 %3049
      %3051 = vrot.lane.b32.xlu0 %v3028, 101
      %v3052 = vpop.permute.xlu0 %3051
      %3053 = vrot.lane.b32.xlu0 %v3029, 101
      %v3054 = vpop.permute.xlu0 %3053
      %3055 = vrot.lane.b32.xlu0 %v3030, 101
      %v3056 = vpop.permute.xlu0 %3055
      %3057 = vrot.lane.b32.xlu0 %v3031, 101
      %v3058 = vpop.permute.xlu0 %3057
      %v3059 = vsel %vm614, %v3042, %v3044
      %v3060 = vsel %vm614, %v3044, %v3046
      %v3061 = vsel %vm614, %v3046, %v3048
      %v3062 = vsel %vm614, %v3048, %v3050
      %v3063 = vsel %vm614, %v3050, %v3052
      %v3064 = vsel %vm614, %v3052, %v3054
      %v3065 = vsel %vm614, %v3054, %v3056
      %v3066 = vsel %vm614, %v3056, %v3058
      %3075 = vst [vmem:[#allocation3 + $0xc0] sm:$0xff] %v3059
      %3076 = vst [vmem:[#allocation3 + $0xc8] sm:$0xff] %v3060
      %3077 = vst [vmem:[#allocation3 + $0xd0] sm:$0xff] %v3061
      %3078 = vst [vmem:[#allocation3 + $0xd8] sm:$0xff] %v3062
      %3079 = vst [vmem:[#allocation3 + $0xe0] sm:$0xff] %v3063
      %3080 = vst [vmem:[#allocation3 + $0xe8] sm:$0xff] %v3064
      %3081 = vst [vmem:[#allocation3 + $0xf0] sm:$0xff] %v3065
      %3082 = vst [vmem:[#allocation3 + $0xf8] sm:$0xff] %v3066
      %v3083 = vld [vmem:[#allocation2] sm:$0xff]
      %v3084 = vld [vmem:[#allocation2 + $0x8] sm:$0xff]
      %v3085 = vld [vmem:[#allocation2 + $0x10] sm:$0xff]
      %v3086 = vld [vmem:[#allocation2 + $0x18] sm:$0xff]
      %v3087 = vld [vmem:[#allocation2 + $0x20] sm:$0xff]
      %v3088 = vld [vmem:[#allocation2 + $0x28] sm:$0xff]
      %v3089 = vld [vmem:[#allocation2 + $0x30] sm:$0xff]
      %v3090 = vld [vmem:[#allocation2 + $0x38] sm:$0xff]
      %v3091 = vld [vmem:[#allocation2 + $0x40] sm:$0xff]
      %3101 = vrot.lane.b32.xlu0 %v3083, 100
      %v3102 = vpop.permute.xlu0 %3101
      %3103 = vrot.lane.b32.xlu0 %v3084, 100
      %v3104 = vpop.permute.xlu0 %3103
      %3105 = vrot.lane.b32.xlu0 %v3085, 100
      %v3106 = vpop.permute.xlu0 %3105
      %3107 = vrot.lane.b32.xlu0 %v3086, 100
      %v3108 = vpop.permute.xlu0 %3107
      %3109 = vrot.lane.b32.xlu0 %v3087, 100
      %v3110 = vpop.permute.xlu0 %3109
      %3111 = vrot.lane.b32.xlu0 %v3088, 100
      %v3112 = vpop.permute.xlu0 %3111
      %3113 = vrot.lane.b32.xlu0 %v3089, 100
      %v3114 = vpop.permute.xlu0 %3113
      %3115 = vrot.lane.b32.xlu0 %v3090, 100
      %v3116 = vpop.permute.xlu0 %3115
      %3117 = vrot.lane.b32.xlu0 %v3091, 100
      %v3118 = vpop.permute.xlu0 %3117
      %v3119 = vsel %vm675, %v3102, %v3104
      %v3120 = vsel %vm675, %v3104, %v3106
      %v3121 = vsel %vm675, %v3106, %v3108
      %v3122 = vsel %vm675, %v3108, %v3110
      %v3123 = vsel %vm675, %v3110, %v3112
      %v3124 = vsel %vm675, %v3112, %v3114
      %v3125 = vsel %vm675, %v3114, %v3116
      %v3126 = vsel %vm675, %v3116, %v3118
      %3135 = vst [vmem:[#allocation3 + $0x100] sm:$0xff] %v3119
      %3136 = vst [vmem:[#allocation3 + $0x108] sm:$0xff] %v3120
      %3137 = vst [vmem:[#allocation3 + $0x110] sm:$0xff] %v3121
      %3138 = vst [vmem:[#allocation3 + $0x118] sm:$0xff] %v3122
      %3139 = vst [vmem:[#allocation3 + $0x120] sm:$0xff] %v3123
      %3140 = vst [vmem:[#allocation3 + $0x128] sm:$0xff] %v3124
      %3141 = vst [vmem:[#allocation3 + $0x130] sm:$0xff] %v3125
      %3142 = vst [vmem:[#allocation3 + $0x138] sm:$0xff] %v3126
      %v3143 = vld [vmem:[#allocation2] sm:$0xff]
      %v3144 = vld [vmem:[#allocation2 + $0x8] sm:$0xff]
      %v3145 = vld [vmem:[#allocation2 + $0x10] sm:$0xff]
      %v3146 = vld [vmem:[#allocation2 + $0x18] sm:$0xff]
      %v3147 = vld [vmem:[#allocation2 + $0x20] sm:$0xff]
      %v3148 = vld [vmem:[#allocation2 + $0x28] sm:$0xff]
      %v3149 = vld [vmem:[#allocation2 + $0x30] sm:$0xff]
      %v3150 = vld [vmem:[#allocation2 + $0x38] sm:$0xff]
      %v3151 = vld [vmem:[#allocation2 + $0x40] sm:$0xff]
      %3161 = vrot.lane.b32.xlu0 %v3143, 99
      %v3162 = vpop.permute.xlu0 %3161
      %3163 = vrot.lane.b32.xlu0 %v3144, 99
      %v3164 = vpop.permute.xlu0 %3163
      %3165 = vrot.lane.b32.xlu0 %v3145, 99
      %v3166 = vpop.permute.xlu0 %3165
      %3167 = vrot.lane.b32.xlu0 %v3146, 99
      %v3168 = vpop.permute.xlu0 %3167
      %3169 = vrot.lane.b32.xlu0 %v3147, 99
      %v3170 = vpop.permute.xlu0 %3169
      %3171 = vrot.lane.b32.xlu0 %v3148, 99
      %v3172 = vpop.permute.xlu0 %3171
      %3173 = vrot.lane.b32.xlu0 %v3149, 99
      %v3174 = vpop.permute.xlu0 %3173
      %3175 = vrot.lane.b32.xlu0 %v3150, 99
      %v3176 = vpop.permute.xlu0 %3175
      %3177 = vrot.lane.b32.xlu0 %v3151, 99
      %v3178 = vpop.permute.xlu0 %3177
      %v3179 = vsel %vm736, %v3162, %v3164
      %v3180 = vsel %vm736, %v3164, %v3166
      %v3181 = vsel %vm736, %v3166, %v3168
      %v3182 = vsel %vm736, %v3168, %v3170
      %v3183 = vsel %vm736, %v3170, %v3172
      %v3184 = vsel %vm736, %v3172, %v3174
      %v3185 = vsel %vm736, %v3174, %v3176
      %v3186 = vsel %vm736, %v3176, %v3178
      %3195 = vst [vmem:[#allocation3 + $0x140] sm:$0xff] %v3179
      %3196 = vst [vmem:[#allocation3 + $0x148] sm:$0xff] %v3180
      %3197 = vst [vmem:[#allocation3 + $0x150] sm:$0xff] %v3181
      %3198 = vst [vmem:[#allocation3 + $0x158] sm:$0xff] %v3182
      %3199 = vst [vmem:[#allocation3 + $0x160] sm:$0xff] %v3183
      %3200 = vst [vmem:[#allocation3 + $0x168] sm:$0xff] %v3184
      %3201 = vst [vmem:[#allocation3 + $0x170] sm:$0xff] %v3185
      %3202 = vst [vmem:[#allocation3 + $0x178] sm:$0xff] %v3186
      %v3203 = vld [vmem:[#allocation2] sm:$0xff]
      %v3204 = vld [vmem:[#allocation2 + $0x8] sm:$0xff]
      %v3205 = vld [vmem:[#allocation2 + $0x10] sm:$0xff]
      %v3206 = vld [vmem:[#allocation2 + $0x18] sm:$0xff]
      %v3207 = vld [vmem:[#allocation2 + $0x20] sm:$0xff]
      %v3208 = vld [vmem:[#allocation2 + $0x28] sm:$0xff]
      %v3209 = vld [vmem:[#allocation2 + $0x30] sm:$0xff]
      %v3210 = vld [vmem:[#allocation2 + $0x38] sm:$0xff]
      %v3211 = vld [vmem:[#allocation2 + $0x40] sm:$0xff]
      %3221 = vrot.lane.b32.xlu0 %v3203, 91
      %v3222 = vpop.permute.xlu0 %3221
      %3223 = vrot.lane.b32.xlu0 %v3204, 91
      %v3224 = vpop.permute.xlu0 %3223
      %3225 = vrot.lane.b32.xlu0 %v3205, 91
      %v3226 = vpop.permute.xlu0 %3225
      %3227 = vrot.lane.b32.xlu0 %v3206, 91
      %v3228 = vpop.permute.xlu0 %3227
      %3229 = vrot.lane.b32.xlu0 %v3207, 91
      %v3230 = vpop.permute.xlu0 %3229
      %3231 = vrot.lane.b32.xlu0 %v3208, 91
      %v3232 = vpop.permute.xlu0 %3231
      %3233 = vrot.lane.b32.xlu0 %v3209, 91
      %v3234 = vpop.permute.xlu0 %3233
      %3235 = vrot.lane.b32.xlu0 %v3210, 91
      %v3236 = vpop.permute.xlu0 %3235
      %3237 = vrot.lane.b32.xlu0 %v3211, 91
      %v3238 = vpop.permute.xlu0 %3237
      %v3239 = vsel %vm797, %v3222, %v3224
      %v3240 = vsel %vm797, %v3224, %v3226
      %v3241 = vsel %vm797, %v3226, %v3228
      %v3242 = vsel %vm797, %v3228, %v3230
      %v3243 = vsel %vm797, %v3230, %v3232
      %v3244 = vsel %vm797, %v3232, %v3234
      %v3245 = vsel %vm797, %v3234, %v3236
      %v3246 = vsel %vm797, %v3236, %v3238
      %3255 = vst [vmem:[#allocation3 + $0x180] sm:$0xff] %v3239
      %3256 = vst [vmem:[#allocation3 + $0x188] sm:$0xff] %v3240
      %3257 = vst [vmem:[#allocation3 + $0x190] sm:$0xff] %v3241
      %3258 = vst [vmem:[#allocation3 + $0x198] sm:$0xff] %v3242
      %3259 = vst [vmem:[#allocation3 + $0x1a0] sm:$0xff] %v3243
      %3260 = vst [vmem:[#allocation3 + $0x1a8] sm:$0xff] %v3244
      %3261 = vst [vmem:[#allocation3 + $0x1b0] sm:$0xff] %v3245
      %3262 = vst [vmem:[#allocation3 + $0x1b8] sm:$0xff] %v3246
      %v3263 = vld [vmem:[#allocation2] sm:$0xff]
      %v3264 = vld [vmem:[#allocation2 + $0x8] sm:$0xff]
      %v3265 = vld [vmem:[#allocation2 + $0x10] sm:$0xff]
      %v3266 = vld [vmem:[#allocation2 + $0x18] sm:$0xff]
      %v3267 = vld [vmem:[#allocation2 + $0x20] sm:$0xff]
      %v3268 = vld [vmem:[#allocation2 + $0x28] sm:$0xff]
      %v3269 = vld [vmem:[#allocation2 + $0x30] sm:$0xff]
      %v3270 = vld [vmem:[#allocation2 + $0x38] sm:$0xff]
      %v3271 = vld [vmem:[#allocation2 + $0x40] sm:$0xff]
      %3281 = vrot.lane.b32.xlu0 %v3263, 90
      %v3282 = vpop.permute.xlu0 %3281
      %3283 = vrot.lane.b32.xlu0 %v3264, 90
      %v3284 = vpop.permute.xlu0 %3283
      %3285 = vrot.lane.b32.xlu0 %v3265, 90
      %v3286 = vpop.permute.xlu0 %3285
      %3287 = vrot.lane.b32.xlu0 %v3266, 90
      %v3288 = vpop.permute.xlu0 %3287
      %3289 = vrot.lane.b32.xlu0 %v3267, 90
      %v3290 = vpop.permute.xlu0 %3289
      %3291 = vrot.lane.b32.xlu0 %v3268, 90
      %v3292 = vpop.permute.xlu0 %3291
      %3293 = vrot.lane.b32.xlu0 %v3269, 90
      %v3294 = vpop.permute.xlu0 %3293
      %3295 = vrot.lane.b32.xlu0 %v3270, 90
      %v3296 = vpop.permute.xlu0 %3295
      %3297 = vrot.lane.b32.xlu0 %v3271, 90
      %v3298 = vpop.permute.xlu0 %3297
      %v3299 = vsel %vm858, %v3282, %v3284
      %v3300 = vsel %vm858, %v3284, %v3286
      %v3301 = vsel %vm858, %v3286, %v3288
      %v3302 = vsel %vm858, %v3288, %v3290
      %v3303 = vsel %vm858, %v3290, %v3292
      %v3304 = vsel %vm858, %v3292, %v3294
      %v3305 = vsel %vm858, %v3294, %v3296
      %v3306 = vsel %vm858, %v3296, %v3298
      %3315 = vst [vmem:[#allocation3 + $0x1c0] sm:$0xff] %v3299
      %3316 = vst [vmem:[#allocation3 + $0x1c8] sm:$0xff] %v3300
      %3317 = vst [vmem:[#allocation3 + $0x1d0] sm:$0xff] %v3301
      %3318 = vst [vmem:[#allocation3 + $0x1d8] sm:$0xff] %v3302
      %3319 = vst [vmem:[#allocation3 + $0x1e0] sm:$0xff] %v3303
      %3320 = vst [vmem:[#allocation3 + $0x1e8] sm:$0xff] %v3304
      %3321 = vst [vmem:[#allocation3 + $0x1f0] sm:$0xff] %v3305
      %3322 = vst [vmem:[#allocation3 + $0x1f8] sm:$0xff] %v3306
      %v3323 = vld [vmem:[#allocation2] sm:$0xff]
      %v3324 = vld [vmem:[#allocation2 + $0x8] sm:$0xff]
      %v3325 = vld [vmem:[#allocation2 + $0x10] sm:$0xff]
      %v3326 = vld [vmem:[#allocation2 + $0x18] sm:$0xff]
      %v3327 = vld [vmem:[#allocation2 + $0x20] sm:$0xff]
      %v3328 = vld [vmem:[#allocation2 + $0x28] sm:$0xff]
      %v3329 = vld [vmem:[#allocation2 + $0x30] sm:$0xff]
      %v3330 = vld [vmem:[#allocation2 + $0x38] sm:$0xff]
      %v3331 = vld [vmem:[#allocation2 + $0x40] sm:$0xff]
      %3341 = vrot.lane.b32.xlu0 %v3323, 89
      %v3342 = vpop.permute.xlu0 %3341
      %3343 = vrot.lane.b32.xlu0 %v3324, 89
      %v3344 = vpop.permute.xlu0 %3343
      %3345 = vrot.lane.b32.xlu0 %v3325, 89
      %v3346 = vpop.permute.xlu0 %3345
      %3347 = vrot.lane.b32.xlu0 %v3326, 89
      %v3348 = vpop.permute.xlu0 %3347
      %3349 = vrot.lane.b32.xlu0 %v3327, 89
      %v3350 = vpop.permute.xlu0 %3349
      %3351 = vrot.lane.b32.xlu0 %v3328, 89
      %v3352 = vpop.permute.xlu0 %3351
      %3353 = vrot.lane.b32.xlu0 %v3329, 89
      %v3354 = vpop.permute.xlu0 %3353
      %3355 = vrot.lane.b32.xlu0 %v3330, 89
      %v3356 = vpop.permute.xlu0 %3355
      %3357 = vrot.lane.b32.xlu0 %v3331, 89
      %v3358 = vpop.permute.xlu0 %3357
      %v3359 = vsel %vm919, %v3342, %v3344
      %v3360 = vsel %vm919, %v3344, %v3346
      %v3361 = vsel %vm919, %v3346, %v3348
      %v3362 = vsel %vm919, %v3348, %v3350
      %v3363 = vsel %vm919, %v3350, %v3352
      %v3364 = vsel %vm919, %v3352, %v3354
      %v3365 = vsel %vm919, %v3354, %v3356
      %v3366 = vsel %vm919, %v3356, %v3358
      %3375 = vst [vmem:[#allocation3 + $0x200] sm:$0xff] %v3359
      %3376 = vst [vmem:[#allocation3 + $0x208] sm:$0xff] %v3360
      %3377 = vst [vmem:[#allocation3 + $0x210] sm:$0xff] %v3361
      %3378 = vst [vmem:[#allocation3 + $0x218] sm:$0xff] %v3362
      %3379 = vst [vmem:[#allocation3 + $0x220] sm:$0xff] %v3363
      %3380 = vst [vmem:[#allocation3 + $0x228] sm:$0xff] %v3364
      %3381 = vst [vmem:[#allocation3 + $0x230] sm:$0xff] %v3365
      %3382 = vst [vmem:[#allocation3 + $0x238] sm:$0xff] %v3366
      %v3383 = vld [vmem:[%s3] sm:$0xff]
      %v3384 = vld [vmem:[#allocation3] sm:$0xff]
      %v3385 = vld [vmem:[#allocation3 + $0x8] sm:$0xff]
      %v3386 = vld [vmem:[#allocation3 + $0x10] sm:$0xff]
      %v3387 = vld [vmem:[#allocation3 + $0x18] sm:$0xff]
      %v3388 = vld [vmem:[#allocation3 + $0x20] sm:$0xff]
      %v3389 = vld [vmem:[#allocation3 + $0x28] sm:$0xff]
      %v3390 = vld [vmem:[#allocation3 + $0x30] sm:$0xff]
      %v3391 = vld [vmem:[#allocation3 + $0x38] sm:$0xff]
      %v3392 = vld [vmem:[#allocation3 + $0x40] sm:$0xff]
      %v3393 = vld [vmem:[#allocation3 + $0x48] sm:$0xff]
      %v3394 = vld [vmem:[#allocation3 + $0x50] sm:$0xff]
      %v3395 = vld [vmem:[#allocation3 + $0x58] sm:$0xff]
      %v3396 = vld [vmem:[#allocation3 + $0x60] sm:$0xff]
      %v3397 = vld [vmem:[#allocation3 + $0x68] sm:$0xff]
      %v3398 = vld [vmem:[#allocation3 + $0x70] sm:$0xff]
      %v3399 = vld [vmem:[#allocation3 + $0x78] sm:$0xff]
      %v3400 = vld [vmem:[#allocation3 + $0x80] sm:$0xff]
      %v3401 = vld [vmem:[#allocation3 + $0x88] sm:$0xff]
      %v3402 = vld [vmem:[#allocation3 + $0x90] sm:$0xff]
      %v3403 = vld [vmem:[#allocation3 + $0x98] sm:$0xff]
      %v3404 = vld [vmem:[#allocation3 + $0xa0] sm:$0xff]
      %v3405 = vld [vmem:[#allocation3 + $0xa8] sm:$0xff]
      %v3406 = vld [vmem:[#allocation3 + $0xb0] sm:$0xff]
      %v3407 = vld [vmem:[#allocation3 + $0xb8] sm:$0xff]
      %v3408 = vld [vmem:[#allocation3 + $0xc0] sm:$0xff]
      %v3409 = vld [vmem:[#allocation3 + $0xc8] sm:$0xff]
      %v3410 = vld [vmem:[#allocation3 + $0xd0] sm:$0xff]
      %v3411 = vld [vmem:[#allocation3 + $0xd8] sm:$0xff]
      %v3412 = vld [vmem:[#allocation3 + $0xe0] sm:$0xff]
      %v3413 = vld [vmem:[#allocation3 + $0xe8] sm:$0xff]
      %v3414 = vld [vmem:[#allocation3 + $0xf0] sm:$0xff]
      %v3415 = vld [vmem:[#allocation3 + $0xf8] sm:$0xff]
      %v3416 = vld [vmem:[#allocation3 + $0x100] sm:$0xff]
      %v3417 = vld [vmem:[#allocation3 + $0x108] sm:$0xff]
      %v3418 = vld [vmem:[#allocation3 + $0x110] sm:$0xff]
      %v3419 = vld [vmem:[#allocation3 + $0x118] sm:$0xff]
      %v3420 = vld [vmem:[#allocation3 + $0x120] sm:$0xff]
      %v3421 = vld [vmem:[#allocation3 + $0x128] sm:$0xff]
      %v3422 = vld [vmem:[#allocation3 + $0x130] sm:$0xff]
      %v3423 = vld [vmem:[#allocation3 + $0x138] sm:$0xff]
      %v3424 = vld [vmem:[#allocation3 + $0x140] sm:$0xff]
      %v3425 = vld [vmem:[#allocation3 + $0x148] sm:$0xff]
      %v3426 = vld [vmem:[#allocation3 + $0x150] sm:$0xff]
      %v3427 = vld [vmem:[#allocation3 + $0x158] sm:$0xff]
      %v3428 = vld [vmem:[#allocation3 + $0x160] sm:$0xff]
      %v3429 = vld [vmem:[#allocation3 + $0x168] sm:$0xff]
      %v3430 = vld [vmem:[#allocation3 + $0x170] sm:$0xff]
      %v3431 = vld [vmem:[#allocation3 + $0x178] sm:$0xff]
      %v3432 = vld [vmem:[#allocation3 + $0x180] sm:$0xff]
      %v3433 = vld [vmem:[#allocation3 + $0x188] sm:$0xff]
      %v3434 = vld [vmem:[#allocation3 + $0x190] sm:$0xff]
      %v3435 = vld [vmem:[#allocation3 + $0x198] sm:$0xff]
      %v3436 = vld [vmem:[#allocation3 + $0x1a0] sm:$0xff]
      %v3437 = vld [vmem:[#allocation3 + $0x1a8] sm:$0xff]
      %v3438 = vld [vmem:[#allocation3 + $0x1b0] sm:$0xff]
      %v3439 = vld [vmem:[#allocation3 + $0x1b8] sm:$0xff]
      %v3440 = vld [vmem:[#allocation3 + $0x1c0] sm:$0xff]
      %v3441 = vld [vmem:[#allocation3 + $0x1c8] sm:$0xff]
      %v3442 = vld [vmem:[#allocation3 + $0x1d0] sm:$0xff]
      %v3443 = vld [vmem:[#allocation3 + $0x1d8] sm:$0xff]
      %v3444 = vld [vmem:[#allocation3 + $0x1e0] sm:$0xff]
      %v3445 = vld [vmem:[#allocation3 + $0x1e8] sm:$0xff]
      %v3446 = vld [vmem:[#allocation3 + $0x1f0] sm:$0xff]
      %v3447 = vld [vmem:[#allocation3 + $0x1f8] sm:$0xff]
      %v3448 = vld [vmem:[#allocation3 + $0x200] sm:$0xff]
      %v3449 = vld [vmem:[#allocation3 + $0x208] sm:$0xff]
      %v3450 = vld [vmem:[#allocation3 + $0x210] sm:$0xff]
      %v3451 = vld [vmem:[#allocation3 + $0x218] sm:$0xff]
      %v3452 = vld [vmem:[#allocation3 + $0x220] sm:$0xff]
      %v3453 = vld [vmem:[#allocation3 + $0x228] sm:$0xff]
      %v3454 = vld [vmem:[#allocation3 + $0x230] sm:$0xff]
      %v3455 = vld [vmem:[#allocation3 + $0x238] sm:$0xff]
      %v3457 = vunpack.c.l.b16 %v3383
      %v3458 = vunpack.c.h.b16 %v3383
      %v3459 = vpack.c.b16 %v3457, %v3457
      %v3460 = vpack.c.b16 %v3458, %v3458
      %v3463 = vsel %vm1023, %v3460, 0
      %3465 = vmatprep.subr.bf16.mxu0 %v3385
      %3466 = vmatpush1.bf16.msra.mxu0 %v3384
      %3467 = vmatprep.subr.bf16.mxu0 %v3393
      %3468 = vmatpush1.bf16.msra.mxu0 %v3392
      %3469 = vmatprep.subr.bf16.mxu0 %v3401
      %3470 = vmatpush1.bf16.msra.mxu0 %v3400
      %3471 = vmatprep.subr.bf16.mxu0 %v3409
      %3472 = vmatpush1.bf16.msra.mxu0 %v3408
      %3473 = vmatprep.subr.bf16.mxu0 %v3417
      %3474 = vmatpush1.bf16.msra.mxu0 %v3416
      %3475 = vmatprep.subr.bf16.mxu0 %v3425
      %3476 = vmatpush1.bf16.msra.mxu0 %v3424
      %3477 = vmatprep.subr.bf16.mxu0 %v3433
      %3478 = vmatpush1.bf16.msra.mxu0 %v3432
      %3479 = vmatprep.subr.bf16.mxu0 %v3441
      %3480 = vmatpush1.bf16.msra.mxu0 %v3440
      %3481 = vmatprep.subr.bf16.mxu0 %v3449
      %3482 = vmatpush1.bf16.msra.mxu0 %v3448
      %3483 = vmatprep.subr.bf16.mxu0 0
      %3484 = vmatpush1.bf16.msra.mxu0 0
      %3485 = vmatprep.subr.bf16.mxu0 0
      %3486 = vmatpush1.bf16.msra.mxu0 0
      %3487 = vmatprep.subr.bf16.mxu0 0
      %3488 = vmatpush1.bf16.msra.mxu0 0
      %3489 = vmatprep.subr.bf16.mxu0 0
      %3490 = vmatpush1.bf16.msra.mxu0 0
      %3491 = vmatprep.subr.bf16.mxu0 0
      %3492 = vmatpush1.bf16.msra.mxu0 0
      %3493 = vmatprep.subr.bf16.mxu0 0
      %3494 = vmatpush1.bf16.msra.mxu0 0
      %3495 = vmatprep.subr.bf16.mxu0 0
      %3496 = vmatpush1.bf16.msra.mxu0 0
      %3497 = vmatprep.mubr.bf16.mxu0 %v3463
      %3498 = vmatmul.mubr.bf16.gmra.mrb[0].mxu0 %v3459
      %v3499 = vpop.f32.mrb[0].mxu0
      %v3500 = vadd.f32 0.0, %v3499
      %v3501 = vpop.f32.mrb[0].mxu0
      %v3502 = vadd.f32 0.0, %v3501
      %v3503 = vpop.f32.mrb[0].mxu0
      %v3504 = vpop.f32.mrb[0].mxu0
      %3505 = vdwg.mxu0
      %3506 = vmatprep.subr.bf16.mxu0 %v3387
      %3507 = vmatpush1.bf16.msra.mxu0 %v3386
      %3508 = vmatprep.subr.bf16.mxu0 %v3395
      %3509 = vmatpush1.bf16.msra.mxu0 %v3394
      %3510 = vmatprep.subr.bf16.mxu0 %v3403
      %3511 = vmatpush1.bf16.msra.mxu0 %v3402
      %3512 = vmatprep.subr.bf16.mxu0 %v3411
      %3513 = vmatpush1.bf16.msra.mxu0 %v3410
      %3514 = vmatprep.subr.bf16.mxu0 %v3419
      %3515 = vmatpush1.bf16.msra.mxu0 %v3418
      %3516 = vmatprep.subr.bf16.mxu0 %v3427
      %3517 = vmatpush1.bf16.msra.mxu0 %v3426
      %3518 = vmatprep.subr.bf16.mxu0 %v3435
      %3519 = vmatpush1.bf16.msra.mxu0 %v3434
      %3520 = vmatprep.subr.bf16.mxu0 %v3443
      %3521 = vmatpush1.bf16.msra.mxu0 %v3442
      %3522 = vmatprep.subr.bf16.mxu0 %v3451
      %3523 = vmatpush1.bf16.msra.mxu0 %v3450
      %3524 = vmatprep.subr.bf16.mxu0 0
      %3525 = vmatpush1.bf16.msra.mxu0 0
      %3526 = vmatprep.subr.bf16.mxu0 0
      %3527 = vmatpush1.bf16.msra.mxu0 0
      %3528 = vmatprep.subr.bf16.mxu0 0
      %3529 = vmatpush1.bf16.msra.mxu0 0
      %3530 = vmatprep.subr.bf16.mxu0 0
      %3531 = vmatpush1.bf16.msra.mxu0 0
      %3532 = vmatprep.subr.bf16.mxu0 0
      %3533 = vmatpush1.bf16.msra.mxu0 0
      %3534 = vmatprep.subr.bf16.mxu0 0
      %3535 = vmatpush1.bf16.msra.mxu0 0
      %3536 = vmatprep.subr.bf16.mxu0 0
      %3537 = vmatpush1.bf16.msra.mxu0 0
      %3538 = vmatprep.mubr.bf16.mxu0 %v3463
      %3539 = vmatmul.mubr.bf16.gmra.mrb[0].mxu0 %v3459
      %v3540 = vpop.f32.mrb[0].mxu0
      %v3541 = vadd.f32 0.0, %v3540
      %v3542 = vpop.f32.mrb[0].mxu0
      %v3543 = vadd.f32 0.0, %v3542
      %v3544 = vpop.f32.mrb[0].mxu0
      %v3545 = vpop.f32.mrb[0].mxu0
      %3546 = vdwg.mxu0
      %3547 = vmatprep.subr.bf16.mxu0 %v3389
      %3548 = vmatpush1.bf16.msra.mxu0 %v3388
      %3549 = vmatprep.subr.bf16.mxu0 %v3397
      %3550 = vmatpush1.bf16.msra.mxu0 %v3396
      %3551 = vmatprep.subr.bf16.mxu0 %v3405
      %3552 = vmatpush1.bf16.msra.mxu0 %v3404
      %3553 = vmatprep.subr.bf16.mxu0 %v3413
      %3554 = vmatpush1.bf16.msra.mxu0 %v3412
      %3555 = vmatprep.subr.bf16.mxu0 %v3421
      %3556 = vmatpush1.bf16.msra.mxu0 %v3420
      %3557 = vmatprep.subr.bf16.mxu0 %v3429
      %3558 = vmatpush1.bf16.msra.mxu0 %v3428
      %3559 = vmatprep.subr.bf16.mxu0 %v3437
      %3560 = vmatpush1.bf16.msra.mxu0 %v3436
      %3561 = vmatprep.subr.bf16.mxu0 %v3445
      %3562 = vmatpush1.bf16.msra.mxu0 %v3444
      %3563 = vmatprep.subr.bf16.mxu0 %v3453
      %3564 = vmatpush1.bf16.msra.mxu0 %v3452
      %3565 = vmatprep.subr.bf16.mxu0 0
      %3566 = vmatpush1.bf16.msra.mxu0 0
      %3567 = vmatprep.subr.bf16.mxu0 0
      %3568 = vmatpush1.bf16.msra.mxu0 0
      %3569 = vmatprep.subr.bf16.mxu0 0
      %3570 = vmatpush1.bf16.msra.mxu0 0
      %3571 = vmatprep.subr.bf16.mxu0 0
      %3572 = vmatpush1.bf16.msra.mxu0 0
      %3573 = vmatprep.subr.bf16.mxu0 0
      %3574 = vmatpush1.bf16.msra.mxu0 0
      %3575 = vmatprep.subr.bf16.mxu0 0
      %3576 = vmatpush1.bf16.msra.mxu0 0
      %3577 = vmatprep.subr.bf16.mxu0 0
      %3578 = vmatpush1.bf16.msra.mxu0 0
      %3579 = vmatprep.mubr.bf16.mxu0 %v3463
      %3580 = vmatmul.mubr.bf16.gmra.mrb[0].mxu0 %v3459
      %v3581 = vpop.f32.mrb[0].mxu0
      %v3582 = vadd.f32 0.0, %v3581
      %v3583 = vpop.f32.mrb[0].mxu0
      %v3584 = vadd.f32 0.0, %v3583
      %v3585 = vpop.f32.mrb[0].mxu0
      %v3586 = vpop.f32.mrb[0].mxu0
      %3587 = vdwg.mxu0
      %3588 = vmatprep.subr.bf16.mxu0 %v3391
      %3589 = vmatpush1.bf16.msra.mxu0 %v3390
      %3590 = vmatprep.subr.bf16.mxu0 %v3399
      %3591 = vmatpush1.bf16.msra.mxu0 %v3398
      %3592 = vmatprep.subr.bf16.mxu0 %v3407
      %3593 = vmatpush1.bf16.msra.mxu0 %v3406
      %3594 = vmatprep.subr.bf16.mxu0 %v3415
      %3595 = vmatpush1.bf16.msra.mxu0 %v3414
      %3596 = vmatprep.subr.bf16.mxu0 %v3423
      %3597 = vmatpush1.bf16.msra.mxu0 %v3422
      %3598 = vmatprep.subr.bf16.mxu0 %v3431
      %3599 = vmatpush1.bf16.msra.mxu0 %v3430
      %3600 = vmatprep.subr.bf16.mxu0 %v3439
      %3601 = vmatpush1.bf16.msra.mxu0 %v3438
      %3602 = vmatprep.subr.bf16.mxu0 %v3447
      %3603 = vmatpush1.bf16.msra.mxu0 %v3446
      %3604 = vmatprep.subr.bf16.mxu0 %v3455
      %3605 = vmatpush1.bf16.msra.mxu0 %v3454
      %3606 = vmatprep.subr.bf16.mxu0 0
      %3607 = vmatpush1.bf16.msra.mxu0 0
      %3608 = vmatprep.subr.bf16.mxu0 0
      %3609 = vmatpush1.bf16.msra.mxu0 0
      %3610 = vmatprep.subr.bf16.mxu0 0
      %3611 = vmatpush1.bf16.msra.mxu0 0
      %3612 = vmatprep.subr.bf16.mxu0 0
      %3613 = vmatpush1.bf16.msra.mxu0 0
      %3614 = vmatprep.subr.bf16.mxu0 0
      %3615 = vmatpush1.bf16.msra.mxu0 0
      %3616 = vmatprep.subr.bf16.mxu0 0
      %3617 = vmatpush1.bf16.msra.mxu0 0
      %3618 = vmatprep.subr.bf16.mxu0 0
      %3619 = vmatpush1.bf16.msra.mxu0 0
      %3620 = vmatprep.mubr.bf16.mxu0 %v3463
      %3621 = vmatmul.mubr.bf16.gmra.mrb[0].mxu0 %v3459
      %v3622 = vpop.f32.mrb[0].mxu0
      %v3623 = vadd.f32 0.0, %v3622
      %v3624 = vpop.f32.mrb[0].mxu0
      %v3625 = vadd.f32 0.0, %v3624
      %v3626 = vpop.f32.mrb[0].mxu0
      %v3627 = vpop.f32.mrb[0].mxu0
      %3628 = vdwg.mxu0
      %v3629 = vadd.f32 %v2835, %v3500
      %v3630 = vadd.f32 %v2836, %v3502
      %v3631 = vadd.f32 %v2837, %v3541
      %v3632 = vadd.f32 %v2838, %v3543
      %v3633 = vadd.f32 %v2839, %v3582
      %v3634 = vadd.f32 %v2840, %v3584
      %v3635 = vadd.f32 %v2841, %v3623
      %v3636 = vadd.f32 %v2842, %v3625
      %v3637 = vld [vmem:[#allocation2] sm:$0xff]
      %v3638 = vld [vmem:[#allocation2 + $0x8] sm:$0xff]
      %v3639 = vld [vmem:[#allocation2 + $0x10] sm:$0xff]
      %v3640 = vld [vmem:[#allocation2 + $0x18] sm:$0xff]
      %v3641 = vld [vmem:[#allocation2 + $0x20] sm:$0xff]
      %v3642 = vld [vmem:[#allocation2 + $0x28] sm:$0xff]
      %v3643 = vld [vmem:[#allocation2 + $0x30] sm:$0xff]
      %v3644 = vld [vmem:[#allocation2 + $0x38] sm:$0xff]
      %v3645 = vld [vmem:[#allocation2 + $0x40] sm:$0xff]
      %3655 = vrot.lane.b32.xlu0 %v3637, 11
      %v3656 = vpop.permute.xlu0 %3655
      %3657 = vrot.lane.b32.xlu0 %v3638, 11
      %v3658 = vpop.permute.xlu0 %3657
      %3659 = vrot.lane.b32.xlu0 %v3639, 11
      %v3660 = vpop.permute.xlu0 %3659
      %3661 = vrot.lane.b32.xlu0 %v3640, 11
      %v3662 = vpop.permute.xlu0 %3661
      %3663 = vrot.lane.b32.xlu0 %v3641, 11
      %v3664 = vpop.permute.xlu0 %3663
      %3665 = vrot.lane.b32.xlu0 %v3642, 11
      %v3666 = vpop.permute.xlu0 %3665
      %3667 = vrot.lane.b32.xlu0 %v3643, 11
      %v3668 = vpop.permute.xlu0 %3667
      %3669 = vrot.lane.b32.xlu0 %v3644, 11
      %v3670 = vpop.permute.xlu0 %3669
      %3671 = vrot.lane.b32.xlu0 %v3645, 11
      %v3672 = vpop.permute.xlu0 %3671
      %v3673 = vsel %vm1235, %v3656, %v3658
      %v3674 = vsel %vm1235, %v3658, %v3660
      %v3675 = vsel %vm1235, %v3660, %v3662
      %v3676 = vsel %vm1235, %v3662, %v3664
      %v3677 = vsel %vm1235, %v3664, %v3666
      %v3678 = vsel %vm1235, %v3666, %v3668
      %v3679 = vsel %vm1235, %v3668, %v3670
      %v3680 = vsel %vm1235, %v3670, %v3672
      %3689 = vst [vmem:[#allocation3] sm:$0xff] %v3673
      %3690 = vst [vmem:[#allocation3 + $0x8] sm:$0xff] %v3674
      %3691 = vst [vmem:[#allocation3 + $0x10] sm:$0xff] %v3675
      %3692 = vst [vmem:[#allocation3 + $0x18] sm:$0xff] %v3676
      %3693 = vst [vmem:[#allocation3 + $0x20] sm:$0xff] %v3677
      %3694 = vst [vmem:[#allocation3 + $0x28] sm:$0xff] %v3678
      %3695 = vst [vmem:[#allocation3 + $0x30] sm:$0xff] %v3679
      %3696 = vst [vmem:[#allocation3 + $0x38] sm:$0xff] %v3680
      %v3697 = vld [vmem:[#allocation2] sm:$0xff]
      %v3698 = vld [vmem:[#allocation2 + $0x8] sm:$0xff]
      %v3699 = vld [vmem:[#allocation2 + $0x10] sm:$0xff]
      %v3700 = vld [vmem:[#allocation2 + $0x18] sm:$0xff]
      %v3701 = vld [vmem:[#allocation2 + $0x20] sm:$0xff]
      %v3702 = vld [vmem:[#allocation2 + $0x28] sm:$0xff]
      %v3703 = vld [vmem:[#allocation2 + $0x30] sm:$0xff]
      %v3704 = vld [vmem:[#allocation2 + $0x38] sm:$0xff]
      %v3705 = vld [vmem:[#allocation2 + $0x40] sm:$0xff]
      %3715 = vrot.lane.b32.xlu0 %v3697, 10
      %v3716 = vpop.permute.xlu0 %3715
      %3717 = vrot.lane.b32.xlu0 %v3698, 10
      %v3718 = vpop.permute.xlu0 %3717
      %3719 = vrot.lane.b32.xlu0 %v3699, 10
      %v3720 = vpop.permute.xlu0 %3719
      %3721 = vrot.lane.b32.xlu0 %v3700, 10
      %v3722 = vpop.permute.xlu0 %3721
      %3723 = vrot.lane.b32.xlu0 %v3701, 10
      %v3724 = vpop.permute.xlu0 %3723
      %3725 = vrot.lane.b32.xlu0 %v3702, 10
      %v3726 = vpop.permute.xlu0 %3725
      %3727 = vrot.lane.b32.xlu0 %v3703, 10
      %v3728 = vpop.permute.xlu0 %3727
      %3729 = vrot.lane.b32.xlu0 %v3704, 10
      %v3730 = vpop.permute.xlu0 %3729
      %3731 = vrot.lane.b32.xlu0 %v3705, 10
      %v3732 = vpop.permute.xlu0 %3731
      %v3733 = vsel %vm1296, %v3716, %v3718
      %v3734 = vsel %vm1296, %v3718, %v3720
      %v3735 = vsel %vm1296, %v3720, %v3722
      %v3736 = vsel %vm1296, %v3722, %v3724
      %v3737 = vsel %vm1296, %v3724, %v3726
      %v3738 = vsel %vm1296, %v3726, %v3728
      %v3739 = vsel %vm1296, %v3728, %v3730
      %v3740 = vsel %vm1296, %v3730, %v3732
      %3749 = vst [vmem:[#allocation3 + $0x40] sm:$0xff] %v3733
      %3750 = vst [vmem:[#allocation3 + $0x48] sm:$0xff] %v3734
      %3751 = vst [vmem:[#allocation3 + $0x50] sm:$0xff] %v3735
      %3752 = vst [vmem:[#allocation3 + $0x58] sm:$0xff] %v3736
      %3753 = vst [vmem:[#allocation3 + $0x60] sm:$0xff] %v3737
      %3754 = vst [vmem:[#allocation3 + $0x68] sm:$0xff] %v3738
      %3755 = vst [vmem:[#allocation3 + $0x70] sm:$0xff] %v3739
      %3756 = vst [vmem:[#allocation3 + $0x78] sm:$0xff] %v3740
      %v3757 = vld [vmem:[#allocation2] sm:$0xff]
      %v3758 = vld [vmem:[#allocation2 + $0x8] sm:$0xff]
      %v3759 = vld [vmem:[#allocation2 + $0x10] sm:$0xff]
      %v3760 = vld [vmem:[#allocation2 + $0x18] sm:$0xff]
      %v3761 = vld [vmem:[#allocation2 + $0x20] sm:$0xff]
      %v3762 = vld [vmem:[#allocation2 + $0x28] sm:$0xff]
      %v3763 = vld [vmem:[#allocation2 + $0x30] sm:$0xff]
      %v3764 = vld [vmem:[#allocation2 + $0x38] sm:$0xff]
      %v3765 = vld [vmem:[#allocation2 + $0x40] sm:$0xff]
      %3775 = vrot.lane.b32.xlu0 %v3757, 9
      %v3776 = vpop.permute.xlu0 %3775
      %3777 = vrot.lane.b32.xlu0 %v3758, 9
      %v3778 = vpop.permute.xlu0 %3777
      %3779 = vrot.lane.b32.xlu0 %v3759, 9
      %v3780 = vpop.permute.xlu0 %3779
      %3781 = vrot.lane.b32.xlu0 %v3760, 9
      %v3782 = vpop.permute.xlu0 %3781
      %3783 = vrot.lane.b32.xlu0 %v3761, 9
      %v3784 = vpop.permute.xlu0 %3783
      %3785 = vrot.lane.b32.xlu0 %v3762, 9
      %v3786 = vpop.permute.xlu0 %3785
      %3787 = vrot.lane.b32.xlu0 %v3763, 9
      %v3788 = vpop.permute.xlu0 %3787
      %3789 = vrot.lane.b32.xlu0 %v3764, 9
      %v3790 = vpop.permute.xlu0 %3789
      %3791 = vrot.lane.b32.xlu0 %v3765, 9
      %v3792 = vpop.permute.xlu0 %3791
      %v3793 = vsel %vm1357, %v3776, %v3778
      %v3794 = vsel %vm1357, %v3778, %v3780
      %v3795 = vsel %vm1357, %v3780, %v3782
      %v3796 = vsel %vm1357, %v3782, %v3784
      %v3797 = vsel %vm1357, %v3784, %v3786
      %v3798 = vsel %vm1357, %v3786, %v3788
      %v3799 = vsel %vm1357, %v3788, %v3790
      %v3800 = vsel %vm1357, %v3790, %v3792
      %3809 = vst [vmem:[#allocation3 + $0x80] sm:$0xff] %v3793
      %3810 = vst [vmem:[#allocation3 + $0x88] sm:$0xff] %v3794
      %3811 = vst [vmem:[#allocation3 + $0x90] sm:$0xff] %v3795
      %3812 = vst [vmem:[#allocation3 + $0x98] sm:$0xff] %v3796
      %3813 = vst [vmem:[#allocation3 + $0xa0] sm:$0xff] %v3797
      %3814 = vst [vmem:[#allocation3 + $0xa8] sm:$0xff] %v3798
      %3815 = vst [vmem:[#allocation3 + $0xb0] sm:$0xff] %v3799
      %3816 = vst [vmem:[#allocation3 + $0xb8] sm:$0xff] %v3800
      %v3817 = vld [vmem:[#allocation2] sm:$0xff]
      %v3818 = vld [vmem:[#allocation2 + $0x8] sm:$0xff]
      %v3819 = vld [vmem:[#allocation2 + $0x10] sm:$0xff]
      %v3820 = vld [vmem:[#allocation2 + $0x18] sm:$0xff]
      %v3821 = vld [vmem:[#allocation2 + $0x20] sm:$0xff]
      %v3822 = vld [vmem:[#allocation2 + $0x28] sm:$0xff]
      %v3823 = vld [vmem:[#allocation2 + $0x30] sm:$0xff]
      %v3824 = vld [vmem:[#allocation2 + $0x38] sm:$0xff]
      %v3825 = vld [vmem:[#allocation2 + $0x40] sm:$0xff]
      %3835 = vrot.lane.b32.xlu0 %v3817, 1
      %v3836 = vpop.permute.xlu0 %3835
      %3837 = vrot.lane.b32.xlu0 %v3818, 1
      %v3838 = vpop.permute.xlu0 %3837
      %3839 = vrot.lane.b32.xlu0 %v3819, 1
      %v3840 = vpop.permute.xlu0 %3839
      %3841 = vrot.lane.b32.xlu0 %v3820, 1
      %v3842 = vpop.permute.xlu0 %3841
      %3843 = vrot.lane.b32.xlu0 %v3821, 1
      %v3844 = vpop.permute.xlu0 %3843
      %3845 = vrot.lane.b32.xlu0 %v3822, 1
      %v3846 = vpop.permute.xlu0 %3845
      %3847 = vrot.lane.b32.xlu0 %v3823, 1
      %v3848 = vpop.permute.xlu0 %3847
      %3849 = vrot.lane.b32.xlu0 %v3824, 1
      %v3850 = vpop.permute.xlu0 %3849
      %3851 = vrot.lane.b32.xlu0 %v3825, 1
      %v3852 = vpop.permute.xlu0 %3851
      %v3853 = vsel %vm1418, %v3836, %v3838
      %v3854 = vsel %vm1418, %v3838, %v3840
      %v3855 = vsel %vm1418, %v3840, %v3842
      %v3856 = vsel %vm1418, %v3842, %v3844
      %v3857 = vsel %vm1418, %v3844, %v3846
      %v3858 = vsel %vm1418, %v3846, %v3848
      %v3859 = vsel %vm1418, %v3848, %v3850
      %v3860 = vsel %vm1418, %v3850, %v3852
      %3869 = vst [vmem:[#allocation3 + $0xc0] sm:$0xff] %v3853
      %3870 = vst [vmem:[#allocation3 + $0xc8] sm:$0xff] %v3854
      %3871 = vst [vmem:[#allocation3 + $0xd0] sm:$0xff] %v3855
      %3872 = vst [vmem:[#allocation3 + $0xd8] sm:$0xff] %v3856
      %3873 = vst [vmem:[#allocation3 + $0xe0] sm:$0xff] %v3857
      %3874 = vst [vmem:[#allocation3 + $0xe8] sm:$0xff] %v3858
      %3875 = vst [vmem:[#allocation3 + $0xf0] sm:$0xff] %v3859
      %3876 = vst [vmem:[#allocation3 + $0xf8] sm:$0xff] %v3860
      %v3877 = vld [vmem:[#allocation2 + $0x8] sm:$0xff]
      %v3878 = vld [vmem:[#allocation2 + $0x10] sm:$0xff]
      %v3879 = vld [vmem:[#allocation2 + $0x18] sm:$0xff]
      %v3880 = vld [vmem:[#allocation2 + $0x20] sm:$0xff]
      %v3881 = vld [vmem:[#allocation2 + $0x28] sm:$0xff]
      %v3882 = vld [vmem:[#allocation2 + $0x30] sm:$0xff]
      %v3883 = vld [vmem:[#allocation2 + $0x38] sm:$0xff]
      %v3884 = vld [vmem:[#allocation2 + $0x40] sm:$0xff]
      %3885 = vst [vmem:[#allocation3 + $0x100] sm:$0xff] %v3877
      %3886 = vst [vmem:[#allocation3 + $0x108] sm:$0xff] %v3878
      %3887 = vst [vmem:[#allocation3 + $0x110] sm:$0xff] %v3879
      %3888 = vst [vmem:[#allocation3 + $0x118] sm:$0xff] %v3880
      %3889 = vst [vmem:[#allocation3 + $0x120] sm:$0xff] %v3881
      %3890 = vst [vmem:[#allocation3 + $0x128] sm:$0xff] %v3882
      %3891 = vst [vmem:[#allocation3 + $0x130] sm:$0xff] %v3883
      %3892 = vst [vmem:[#allocation3 + $0x138] sm:$0xff] %v3884
      %v3893 = vld [vmem:[#allocation2 + $0x8] sm:$0xff]
      %v3894 = vld [vmem:[#allocation2 + $0x10] sm:$0xff]
      %v3895 = vld [vmem:[#allocation2 + $0x18] sm:$0xff]
      %v3896 = vld [vmem:[#allocation2 + $0x20] sm:$0xff]
      %v3897 = vld [vmem:[#allocation2 + $0x28] sm:$0xff]
      %v3898 = vld [vmem:[#allocation2 + $0x30] sm:$0xff]
      %v3899 = vld [vmem:[#allocation2 + $0x38] sm:$0xff]
      %v3900 = vld [vmem:[#allocation2 + $0x40] sm:$0xff]
      %v3901 = vld [vmem:[#allocation2 + $0x48] sm:$0xff]
      %3911 = vrot.lane.b32.xlu0 %v3893, 127
      %v3912 = vpop.permute.xlu0 %3911
      %3913 = vrot.lane.b32.xlu0 %v3894, 127
      %v3914 = vpop.permute.xlu0 %3913
      %3915 = vrot.lane.b32.xlu0 %v3895, 127
      %v3916 = vpop.permute.xlu0 %3915
      %3917 = vrot.lane.b32.xlu0 %v3896, 127
      %v3918 = vpop.permute.xlu0 %3917
      %3919 = vrot.lane.b32.xlu0 %v3897, 127
      %v3920 = vpop.permute.xlu0 %3919
      %3921 = vrot.lane.b32.xlu0 %v3898, 127
      %v3922 = vpop.permute.xlu0 %3921
      %3923 = vrot.lane.b32.xlu0 %v3899, 127
      %v3924 = vpop.permute.xlu0 %3923
      %3925 = vrot.lane.b32.xlu0 %v3900, 127
      %v3926 = vpop.permute.xlu0 %3925
      %3927 = vrot.lane.b32.xlu0 %v3901, 127
      %v3928 = vpop.permute.xlu0 %3927
      %v3929 = vsel %vm1495, %v3912, %v3914
      %v3930 = vsel %vm1495, %v3914, %v3916
      %v3931 = vsel %vm1495, %v3916, %v3918
      %v3932 = vsel %vm1495, %v3918, %v3920
      %v3933 = vsel %vm1495, %v3920, %v3922
      %v3934 = vsel %vm1495, %v3922, %v3924
      %v3935 = vsel %vm1495, %v3924, %v3926
      %v3936 = vsel %vm1495, %v3926, %v3928
      %3945 = vst [vmem:[#allocation3 + $0x140] sm:$0xff] %v3929
      %3946 = vst [vmem:[#allocation3 + $0x148] sm:$0xff] %v3930
      %3947 = vst [vmem:[#allocation3 + $0x150] sm:$0xff] %v3931
      %3948 = vst [vmem:[#allocation3 + $0x158] sm:$0xff] %v3932
      %3949 = vst [vmem:[#allocation3 + $0x160] sm:$0xff] %v3933
      %3950 = vst [vmem:[#allocation3 + $0x168] sm:$0xff] %v3934
      %3951 = vst [vmem:[#allocation3 + $0x170] sm:$0xff] %v3935
      %3952 = vst [vmem:[#allocation3 + $0x178] sm:$0xff] %v3936
      %v3953 = vld [vmem:[#allocation2 + $0x8] sm:$0xff]
      %v3954 = vld [vmem:[#allocation2 + $0x10] sm:$0xff]
      %v3955 = vld [vmem:[#allocation2 + $0x18] sm:$0xff]
      %v3956 = vld [vmem:[#allocation2 + $0x20] sm:$0xff]
      %v3957 = vld [vmem:[#allocation2 + $0x28] sm:$0xff]
      %v3958 = vld [vmem:[#allocation2 + $0x30] sm:$0xff]
      %v3959 = vld [vmem:[#allocation2 + $0x38] sm:$0xff]
      %v3960 = vld [vmem:[#allocation2 + $0x40] sm:$0xff]
      %v3961 = vld [vmem:[#allocation2 + $0x48] sm:$0xff]
      %3971 = vrot.lane.b32.xlu0 %v3953, 119
      %v3972 = vpop.permute.xlu0 %3971
      %3973 = vrot.lane.b32.xlu0 %v3954, 119
      %v3974 = vpop.permute.xlu0 %3973
      %3975 = vrot.lane.b32.xlu0 %v3955, 119
      %v3976 = vpop.permute.xlu0 %3975
      %3977 = vrot.lane.b32.xlu0 %v3956, 119
      %v3978 = vpop.permute.xlu0 %3977
      %3979 = vrot.lane.b32.xlu0 %v3957, 119
      %v3980 = vpop.permute.xlu0 %3979
      %3981 = vrot.lane.b32.xlu0 %v3958, 119
      %v3982 = vpop.permute.xlu0 %3981
      %3983 = vrot.lane.b32.xlu0 %v3959, 119
      %v3984 = vpop.permute.xlu0 %3983
      %3985 = vrot.lane.b32.xlu0 %v3960, 119
      %v3986 = vpop.permute.xlu0 %3985
      %3987 = vrot.lane.b32.xlu0 %v3961, 119
      %v3988 = vpop.permute.xlu0 %3987
      %v3989 = vsel %vm1556, %v3972, %v3974
      %v3990 = vsel %vm1556, %v3974, %v3976
      %v3991 = vsel %vm1556, %v3976, %v3978
      %v3992 = vsel %vm1556, %v3978, %v3980
      %v3993 = vsel %vm1556, %v3980, %v3982
      %v3994 = vsel %vm1556, %v3982, %v3984
      %v3995 = vsel %vm1556, %v3984, %v3986
      %v3996 = vsel %vm1556, %v3986, %v3988
      %4005 = vst [vmem:[#allocation3 + $0x180] sm:$0xff] %v3989
      %4006 = vst [vmem:[#allocation3 + $0x188] sm:$0xff] %v3990
      %4007 = vst [vmem:[#allocation3 + $0x190] sm:$0xff] %v3991
      %4008 = vst [vmem:[#allocation3 + $0x198] sm:$0xff] %v3992
      %4009 = vst [vmem:[#allocation3 + $0x1a0] sm:$0xff] %v3993
      %4010 = vst [vmem:[#allocation3 + $0x1a8] sm:$0xff] %v3994
      %4011 = vst [vmem:[#allocation3 + $0x1b0] sm:$0xff] %v3995
      %4012 = vst [vmem:[#allocation3 + $0x1b8] sm:$0xff] %v3996
      %v4013 = vld [vmem:[#allocation2 + $0x8] sm:$0xff]
      %v4014 = vld [vmem:[#allocation2 + $0x10] sm:$0xff]
      %v4015 = vld [vmem:[#allocation2 + $0x18] sm:$0xff]
      %v4016 = vld [vmem:[#allocation2 + $0x20] sm:$0xff]
      %v4017 = vld [vmem:[#allocation2 + $0x28] sm:$0xff]
      %v4018 = vld [vmem:[#allocation2 + $0x30] sm:$0xff]
      %v4019 = vld [vmem:[#allocation2 + $0x38] sm:$0xff]
      %v4020 = vld [vmem:[#allocation2 + $0x40] sm:$0xff]
      %v4021 = vld [vmem:[#allocation2 + $0x48] sm:$0xff]
      %4031 = vrot.lane.b32.xlu0 %v4013, 118
      %v4032 = vpop.permute.xlu0 %4031
      %4033 = vrot.lane.b32.xlu0 %v4014, 118
      %v4034 = vpop.permute.xlu0 %4033
      %4035 = vrot.lane.b32.xlu0 %v4015, 118
      %v4036 = vpop.permute.xlu0 %4035
      %4037 = vrot.lane.b32.xlu0 %v4016, 118
      %v4038 = vpop.permute.xlu0 %4037
      %4039 = vrot.lane.b32.xlu0 %v4017, 118
      %v4040 = vpop.permute.xlu0 %4039
      %4041 = vrot.lane.b32.xlu0 %v4018, 118
      %v4042 = vpop.permute.xlu0 %4041
      %4043 = vrot.lane.b32.xlu0 %v4019, 118
      %v4044 = vpop.permute.xlu0 %4043
      %4045 = vrot.lane.b32.xlu0 %v4020, 118
      %v4046 = vpop.permute.xlu0 %4045
      %4047 = vrot.lane.b32.xlu0 %v4021, 118
      %v4048 = vpop.permute.xlu0 %4047
      %v4049 = vsel %vm1617, %v4032, %v4034
      %v4050 = vsel %vm1617, %v4034, %v4036
      %v4051 = vsel %vm1617, %v4036, %v4038
      %v4052 = vsel %vm1617, %v4038, %v4040
      %v4053 = vsel %vm1617, %v4040, %v4042
      %v4054 = vsel %vm1617, %v4042, %v4044
      %v4055 = vsel %vm1617, %v4044, %v4046
      %v4056 = vsel %vm1617, %v4046, %v4048
      %4065 = vst [vmem:[#allocation3 + $0x1c0] sm:$0xff] %v4049
      %4066 = vst [vmem:[#allocation3 + $0x1c8] sm:$0xff] %v4050
      %4067 = vst [vmem:[#allocation3 + $0x1d0] sm:$0xff] %v4051
      %4068 = vst [vmem:[#allocation3 + $0x1d8] sm:$0xff] %v4052
      %4069 = vst [vmem:[#allocation3 + $0x1e0] sm:$0xff] %v4053
      %4070 = vst [vmem:[#allocation3 + $0x1e8] sm:$0xff] %v4054
      %4071 = vst [vmem:[#allocation3 + $0x1f0] sm:$0xff] %v4055
      %4072 = vst [vmem:[#allocation3 + $0x1f8] sm:$0xff] %v4056
      %v4073 = vld [vmem:[#allocation2 + $0x8] sm:$0xff]
      %v4074 = vld [vmem:[#allocation2 + $0x10] sm:$0xff]
      %v4075 = vld [vmem:[#allocation2 + $0x18] sm:$0xff]
      %v4076 = vld [vmem:[#allocation2 + $0x20] sm:$0xff]
      %v4077 = vld [vmem:[#allocation2 + $0x28] sm:$0xff]
      %v4078 = vld [vmem:[#allocation2 + $0x30] sm:$0xff]
      %v4079 = vld [vmem:[#allocation2 + $0x38] sm:$0xff]
      %v4080 = vld [vmem:[#allocation2 + $0x40] sm:$0xff]
      %v4081 = vld [vmem:[#allocation2 + $0x48] sm:$0xff]
      %4091 = vrot.lane.b32.xlu0 %v4073, 117
      %v4092 = vpop.permute.xlu0 %4091
      %4093 = vrot.lane.b32.xlu0 %v4074, 117
      %v4094 = vpop.permute.xlu0 %4093
      %4095 = vrot.lane.b32.xlu0 %v4075, 117
      %v4096 = vpop.permute.xlu0 %4095
      %4097 = vrot.lane.b32.xlu0 %v4076, 117
      %v4098 = vpop.permute.xlu0 %4097
      %4099 = vrot.lane.b32.xlu0 %v4077, 117
      %v4100 = vpop.permute.xlu0 %4099
      %4101 = vrot.lane.b32.xlu0 %v4078, 117
      %v4102 = vpop.permute.xlu0 %4101
      %4103 = vrot.lane.b32.xlu0 %v4079, 117
      %v4104 = vpop.permute.xlu0 %4103
      %4105 = vrot.lane.b32.xlu0 %v4080, 117
      %v4106 = vpop.permute.xlu0 %4105
      %4107 = vrot.lane.b32.xlu0 %v4081, 117
      %v4108 = vpop.permute.xlu0 %4107
      %v4109 = vsel %vm1678, %v4092, %v4094
      %v4110 = vsel %vm1678, %v4094, %v4096
      %v4111 = vsel %vm1678, %v4096, %v4098
      %v4112 = vsel %vm1678, %v4098, %v4100
      %v4113 = vsel %vm1678, %v4100, %v4102
      %v4114 = vsel %vm1678, %v4102, %v4104
      %v4115 = vsel %vm1678, %v4104, %v4106
      %v4116 = vsel %vm1678, %v4106, %v4108
      %4125 = vst [vmem:[#allocation3 + $0x200] sm:$0xff] %v4109
      %4126 = vst [vmem:[#allocation3 + $0x208] sm:$0xff] %v4110
      %4127 = vst [vmem:[#allocation3 + $0x210] sm:$0xff] %v4111
      %4128 = vst [vmem:[#allocation3 + $0x218] sm:$0xff] %v4112
      %4129 = vst [vmem:[#allocation3 + $0x220] sm:$0xff] %v4113
      %4130 = vst [vmem:[#allocation3 + $0x228] sm:$0xff] %v4114
      %4131 = vst [vmem:[#allocation3 + $0x230] sm:$0xff] %v4115
      %4132 = vst [vmem:[#allocation3 + $0x238] sm:$0xff] %v4116
      %s4133 = scalar_lea.vmem %s3, 8
      %v4134 = vld [vmem:[%s4133] sm:$0xff]
      %v4135 = vld [vmem:[#allocation3] sm:$0xff]
      %v4136 = vld [vmem:[#allocation3 + $0x8] sm:$0xff]
      %v4137 = vld [vmem:[#allocation3 + $0x10] sm:$0xff]
      %v4138 = vld [vmem:[#allocation3 + $0x18] sm:$0xff]
      %v4139 = vld [vmem:[#allocation3 + $0x20] sm:$0xff]
      %v4140 = vld [vmem:[#allocation3 + $0x28] sm:$0xff]
      %v4141 = vld [vmem:[#allocation3 + $0x30] sm:$0xff]
      %v4142 = vld [vmem:[#allocation3 + $0x38] sm:$0xff]
      %v4143 = vld [vmem:[#allocation3 + $0x40] sm:$0xff]
      %v4144 = vld [vmem:[#allocation3 + $0x48] sm:$0xff]
      %v4145 = vld [vmem:[#allocation3 + $0x50] sm:$0xff]
      %v4146 = vld [vmem:[#allocation3 + $0x58] sm:$0xff]
      %v4147 = vld [vmem:[#allocation3 + $0x60] sm:$0xff]
      %v4148 = vld [vmem:[#allocation3 + $0x68] sm:$0xff]
      %v4149 = vld [vmem:[#allocation3 + $0x70] sm:$0xff]
      %v4150 = vld [vmem:[#allocation3 + $0x78] sm:$0xff]
      %v4151 = vld [vmem:[#allocation3 + $0x80] sm:$0xff]
      %v4152 = vld [vmem:[#allocation3 + $0x88] sm:$0xff]
      %v4153 = vld [vmem:[#allocation3 + $0x90] sm:$0xff]
      %v4154 = vld [vmem:[#allocation3 + $0x98] sm:$0xff]
      %v4155 = vld [vmem:[#allocation3 + $0xa0] sm:$0xff]
      %v4156 = vld [vmem:[#allocation3 + $0xa8] sm:$0xff]
      %v4157 = vld [vmem:[#allocation3 + $0xb0] sm:$0xff]
      %v4158 = vld [vmem:[#allocation3 + $0xb8] sm:$0xff]
      %v4159 = vld [vmem:[#allocation3 + $0xc0] sm:$0xff]
      %v4160 = vld [vmem:[#allocation3 + $0xc8] sm:$0xff]
      %v4161 = vld [vmem:[#allocation3 + $0xd0] sm:$0xff]
      %v4162 = vld [vmem:[#allocation3 + $0xd8] sm:$0xff]
      %v4163 = vld [vmem:[#allocation3 + $0xe0] sm:$0xff]
      %v4164 = vld [vmem:[#allocation3 + $0xe8] sm:$0xff]
      %v4165 = vld [vmem:[#allocation3 + $0xf0] sm:$0xff]
      %v4166 = vld [vmem:[#allocation3 + $0xf8] sm:$0xff]
      %v4167 = vld [vmem:[#allocation3 + $0x100] sm:$0xff]
      %v4168 = vld [vmem:[#allocation3 + $0x108] sm:$0xff]
      %v4169 = vld [vmem:[#allocation3 + $0x110] sm:$0xff]
      %v4170 = vld [vmem:[#allocation3 + $0x118] sm:$0xff]
      %v4171 = vld [vmem:[#allocation3 + $0x120] sm:$0xff]
      %v4172 = vld [vmem:[#allocation3 + $0x128] sm:$0xff]
      %v4173 = vld [vmem:[#allocation3 + $0x130] sm:$0xff]
      %v4174 = vld [vmem:[#allocation3 + $0x138] sm:$0xff]
      %v4175 = vld [vmem:[#allocation3 + $0x140] sm:$0xff]
      %v4176 = vld [vmem:[#allocation3 + $0x148] sm:$0xff]
      %v4177 = vld [vmem:[#allocation3 + $0x150] sm:$0xff]
      %v4178 = vld [vmem:[#allocation3 + $0x158] sm:$0xff]
      %v4179 = vld [vmem:[#allocation3 + $0x160] sm:$0xff]
      %v4180 = vld [vmem:[#allocation3 + $0x168] sm:$0xff]
      %v4181 = vld [vmem:[#allocation3 + $0x170] sm:$0xff]
      %v4182 = vld [vmem:[#allocation3 + $0x178] sm:$0xff]
      %v4183 = vld [vmem:[#allocation3 + $0x180] sm:$0xff]
      %v4184 = vld [vmem:[#allocation3 + $0x188] sm:$0xff]
      %v4185 = vld [vmem:[#allocation3 + $0x190] sm:$0xff]
      %v4186 = vld [vmem:[#allocation3 + $0x198] sm:$0xff]
      %v4187 = vld [vmem:[#allocation3 + $0x1a0] sm:$0xff]
      %v4188 = vld [vmem:[#allocation3 + $0x1a8] sm:$0xff]
      %v4189 = vld [vmem:[#allocation3 + $0x1b0] sm:$0xff]
      %v4190 = vld [vmem:[#allocation3 + $0x1b8] sm:$0xff]
      %v4191 = vld [vmem:[#allocation3 + $0x1c0] sm:$0xff]
      %v4192 = vld [vmem:[#allocation3 + $0x1c8] sm:$0xff]
      %v4193 = vld [vmem:[#allocation3 + $0x1d0] sm:$0xff]
      %v4194 = vld [vmem:[#allocation3 + $0x1d8] sm:$0xff]
      %v4195 = vld [vmem:[#allocation3 + $0x1e0] sm:$0xff]
      %v4196 = vld [vmem:[#allocation3 + $0x1e8] sm:$0xff]
      %v4197 = vld [vmem:[#allocation3 + $0x1f0] sm:$0xff]
      %v4198 = vld [vmem:[#allocation3 + $0x1f8] sm:$0xff]
      %v4199 = vld [vmem:[#allocation3 + $0x200] sm:$0xff]
      %v4200 = vld [vmem:[#allocation3 + $0x208] sm:$0xff]
      %v4201 = vld [vmem:[#allocation3 + $0x210] sm:$0xff]
      %v4202 = vld [vmem:[#allocation3 + $0x218] sm:$0xff]
      %v4203 = vld [vmem:[#allocation3 + $0x220] sm:$0xff]
      %v4204 = vld [vmem:[#allocation3 + $0x228] sm:$0xff]
      %v4205 = vld [vmem:[#allocation3 + $0x230] sm:$0xff]
      %v4206 = vld [vmem:[#allocation3 + $0x238] sm:$0xff]
      %v4208 = vunpack.c.l.b16 %v4134
      %v4209 = vunpack.c.h.b16 %v4134
      %v4210 = vpack.c.b16 %v4208, %v4208
      %v4211 = vpack.c.b16 %v4209, %v4209
      %v4214 = vsel %vm1023, %v4211, 0
      %4216 = vmatprep.subr.bf16.mxu0 %v4136
      %4217 = vmatpush1.bf16.msra.mxu0 %v4135
      %4218 = vmatprep.subr.bf16.mxu0 %v4144
      %4219 = vmatpush1.bf16.msra.mxu0 %v4143
      %4220 = vmatprep.subr.bf16.mxu0 %v4152
      %4221 = vmatpush1.bf16.msra.mxu0 %v4151
      %4222 = vmatprep.subr.bf16.mxu0 %v4160
      %4223 = vmatpush1.bf16.msra.mxu0 %v4159
      %4224 = vmatprep.subr.bf16.mxu0 %v4168
      %4225 = vmatpush1.bf16.msra.mxu0 %v4167
      %4226 = vmatprep.subr.bf16.mxu0 %v4176
      %4227 = vmatpush1.bf16.msra.mxu0 %v4175
      %4228 = vmatprep.subr.bf16.mxu0 %v4184
      %4229 = vmatpush1.bf16.msra.mxu0 %v4183
      %4230 = vmatprep.subr.bf16.mxu0 %v4192
      %4231 = vmatpush1.bf16.msra.mxu0 %v4191
      %4232 = vmatprep.subr.bf16.mxu0 %v4200
      %4233 = vmatpush1.bf16.msra.mxu0 %v4199
      %4234 = vmatprep.subr.bf16.mxu0 0
      %4235 = vmatpush1.bf16.msra.mxu0 0
      %4236 = vmatprep.subr.bf16.mxu0 0
      %4237 = vmatpush1.bf16.msra.mxu0 0
      %4238 = vmatprep.subr.bf16.mxu0 0
      %4239 = vmatpush1.bf16.msra.mxu0 0
      %4240 = vmatprep.subr.bf16.mxu0 0
      %4241 = vmatpush1.bf16.msra.mxu0 0
      %4242 = vmatprep.subr.bf16.mxu0 0
      %4243 = vmatpush1.bf16.msra.mxu0 0
      %4244 = vmatprep.subr.bf16.mxu0 0
      %4245 = vmatpush1.bf16.msra.mxu0 0
      %4246 = vmatprep.subr.bf16.mxu0 0
      %4247 = vmatpush1.bf16.msra.mxu0 0
      %4248 = vmatprep.mubr.bf16.mxu0 %v4214
      %4249 = vmatmul.mubr.bf16.gmra.mrb[0].mxu0 %v4210
      %v4250 = vpop.f32.mrb[0].mxu0
      %v4251 = vadd.f32 0.0, %v4250
      %v4252 = vpop.f32.mrb[0].mxu0
      %v4253 = vadd.f32 0.0, %v4252
      %v4254 = vpop.f32.mrb[0].mxu0
      %v4255 = vpop.f32.mrb[0].mxu0
      %4256 = vdwg.mxu0
      %4257 = vmatprep.subr.bf16.mxu0 %v4138
      %4258 = vmatpush1.bf16.msra.mxu0 %v4137
      %4259 = vmatprep.subr.bf16.mxu0 %v4146
      %4260 = vmatpush1.bf16.msra.mxu0 %v4145
      %4261 = vmatprep.subr.bf16.mxu0 %v4154
      %4262 = vmatpush1.bf16.msra.mxu0 %v4153
      %4263 = vmatprep.subr.bf16.mxu0 %v4162
      %4264 = vmatpush1.bf16.msra.mxu0 %v4161
      %4265 = vmatprep.subr.bf16.mxu0 %v4170
      %4266 = vmatpush1.bf16.msra.mxu0 %v4169
      %4267 = vmatprep.subr.bf16.mxu0 %v4178
      %4268 = vmatpush1.bf16.msra.mxu0 %v4177
      %4269 = vmatprep.subr.bf16.mxu0 %v4186
      %4270 = vmatpush1.bf16.msra.mxu0 %v4185
      %4271 = vmatprep.subr.bf16.mxu0 %v4194
      %4272 = vmatpush1.bf16.msra.mxu0 %v4193
      %4273 = vmatprep.subr.bf16.mxu0 %v4202
      %4274 = vmatpush1.bf16.msra.mxu0 %v4201
      %4275 = vmatprep.subr.bf16.mxu0 0
      %4276 = vmatpush1.bf16.msra.mxu0 0
      %4277 = vmatprep.subr.bf16.mxu0 0
      %4278 = vmatpush1.bf16.msra.mxu0 0
      %4279 = vmatprep.subr.bf16.mxu0 0
      %4280 = vmatpush1.bf16.msra.mxu0 0
      %4281 = vmatprep.subr.bf16.mxu0 0
      %4282 = vmatpush1.bf16.msra.mxu0 0
      %4283 = vmatprep.subr.bf16.mxu0 0
      %4284 = vmatpush1.bf16.msra.mxu0 0
      %4285 = vmatprep.subr.bf16.mxu0 0
      %4286 = vmatpush1.bf16.msra.mxu0 0
      %4287 = vmatprep.subr.bf16.mxu0 0
      %4288 = vmatpush1.bf16.msra.mxu0 0
      %4289 = vmatprep.mubr.bf16.mxu0 %v4214
      %4290 = vmatmul.mubr.bf16.gmra.mrb[0].mxu0 %v4210
      %v4291 = vpop.f32.mrb[0].mxu0
      %v4292 = vadd.f32 0.0, %v4291
      %v4293 = vpop.f32.mrb[0].mxu0
      %v4294 = vadd.f32 0.0, %v4293
      %v4295 = vpop.f32.mrb[0].mxu0
      %v4296 = vpop.f32.mrb[0].mxu0
      %4297 = vdwg.mxu0
      %4298 = vmatprep.subr.bf16.mxu0 %v4140
      %4299 = vmatpush1.bf16.msra.mxu0 %v4139
      %4300 = vmatprep.subr.bf16.mxu0 %v4148
      %4301 = vmatpush1.bf16.msra.mxu0 %v4147
      %4302 = vmatprep.subr.bf16.mxu0 %v4156
      %4303 = vmatpush1.bf16.msra.mxu0 %v4155
      %4304 = vmatprep.subr.bf16.mxu0 %v4164
      %4305 = vmatpush1.bf16.msra.mxu0 %v4163
      %4306 = vmatprep.subr.bf16.mxu0 %v4172
      %4307 = vmatpush1.bf16.msra.mxu0 %v4171
      %4308 = vmatprep.subr.bf16.mxu0 %v4180
      %4309 = vmatpush1.bf16.msra.mxu0 %v4179
      %4310 = vmatprep.subr.bf16.mxu0 %v4188
      %4311 = vmatpush1.bf16.msra.mxu0 %v4187
      %4312 = vmatprep.subr.bf16.mxu0 %v4196
      %4313 = vmatpush1.bf16.msra.mxu0 %v4195
      %4314 = vmatprep.subr.bf16.mxu0 %v4204
      %4315 = vmatpush1.bf16.msra.mxu0 %v4203
      %4316 = vmatprep.subr.bf16.mxu0 0
      %4317 = vmatpush1.bf16.msra.mxu0 0
      %4318 = vmatprep.subr.bf16.mxu0 0
      %4319 = vmatpush1.bf16.msra.mxu0 0
      %4320 = vmatprep.subr.bf16.mxu0 0
      %4321 = vmatpush1.bf16.msra.mxu0 0
      %4322 = vmatprep.subr.bf16.mxu0 0
      %4323 = vmatpush1.bf16.msra.mxu0 0
      %4324 = vmatprep.subr.bf16.mxu0 0
      %4325 = vmatpush1.bf16.msra.mxu0 0
      %4326 = vmatprep.subr.bf16.mxu0 0
      %4327 = vmatpush1.bf16.msra.mxu0 0
      %4328 = vmatprep.subr.bf16.mxu0 0
      %4329 = vmatpush1.bf16.msra.mxu0 0
      %4330 = vmatprep.mubr.bf16.mxu0 %v4214
      %4331 = vmatmul.mubr.bf16.gmra.mrb[0].mxu0 %v4210
      %v4332 = vpop.f32.mrb[0].mxu0
      %v4333 = vadd.f32 0.0, %v4332
      %v4334 = vpop.f32.mrb[0].mxu0
      %v4335 = vadd.f32 0.0, %v4334
      %v4336 = vpop.f32.mrb[0].mxu0
      %v4337 = vpop.f32.mrb[0].mxu0
      %4338 = vdwg.mxu0
      %4339 = vmatprep.subr.bf16.mxu0 %v4142
      %4340 = vmatpush1.bf16.msra.mxu0 %v4141
      %4341 = vmatprep.subr.bf16.mxu0 %v4150
      %4342 = vmatpush1.bf16.msra.mxu0 %v4149
      %4343 = vmatprep.subr.bf16.mxu0 %v4158
      %4344 = vmatpush1.bf16.msra.mxu0 %v4157
      %4345 = vmatprep.subr.bf16.mxu0 %v4166
      %4346 = vmatpush1.bf16.msra.mxu0 %v4165
      %4347 = vmatprep.subr.bf16.mxu0 %v4174
      %4348 = vmatpush1.bf16.msra.mxu0 %v4173
      %4349 = vmatprep.subr.bf16.mxu0 %v4182
      %4350 = vmatpush1.bf16.msra.mxu0 %v4181
      %4351 = vmatprep.subr.bf16.mxu0 %v4190
      %4352 = vmatpush1.bf16.msra.mxu0 %v4189
      %4353 = vmatprep.subr.bf16.mxu0 %v4198
      %4354 = vmatpush1.bf16.msra.mxu0 %v4197
      %4355 = vmatprep.subr.bf16.mxu0 %v4206
      %4356 = vmatpush1.bf16.msra.mxu0 %v4205
      %4357 = vmatprep.subr.bf16.mxu0 0
      %4358 = vmatpush1.bf16.msra.mxu0 0
      %4359 = vmatprep.subr.bf16.mxu0 0
      %4360 = vmatpush1.bf16.msra.mxu0 0
      %4361 = vmatprep.subr.bf16.mxu0 0
      %4362 = vmatpush1.bf16.msra.mxu0 0
      %4363 = vmatprep.subr.bf16.mxu0 0
      %4364 = vmatpush1.bf16.msra.mxu0 0
      %4365 = vmatprep.subr.bf16.mxu0 0
      %4366 = vmatpush1.bf16.msra.mxu0 0
      %4367 = vmatprep.subr.bf16.mxu0 0
      %4368 = vmatpush1.bf16.msra.mxu0 0
      %4369 = vmatprep.subr.bf16.mxu0 0
      %4370 = vmatpush1.bf16.msra.mxu0 0
      %4371 = vmatprep.mubr.bf16.mxu0 %v4214
      %4372 = vmatmul.mubr.bf16.gmra.mrb[0].mxu0 %v4210
      %v4373 = vpop.f32.mrb[0].mxu0
      %v4374 = vadd.f32 0.0, %v4373
      %v4375 = vpop.f32.mrb[0].mxu0
      %v4376 = vadd.f32 0.0, %v4375
      %v4377 = vpop.f32.mrb[0].mxu0
      %v4378 = vpop.f32.mrb[0].mxu0
      %4379 = vdwg.mxu0
      %v4380 = vadd.f32 %v3629, %v4251
      %v4381 = vadd.f32 %v3630, %v4253
      %v4382 = vadd.f32 %v3631, %v4292
      %v4383 = vadd.f32 %v3632, %v4294
      %v4384 = vadd.f32 %v3633, %v4333
      %v4385 = vadd.f32 %v3634, %v4335
      %v4386 = vadd.f32 %v3635, %v4374
      %v4387 = vadd.f32 %v3636, %v4376
      %v4388 = vld [vmem:[#allocation2 + $0x8] sm:$0xff]
      %v4389 = vld [vmem:[#allocation2 + $0x10] sm:$0xff]
      %v4390 = vld [vmem:[#allocation2 + $0x18] sm:$0xff]
      %v4391 = vld [vmem:[#allocation2 + $0x20] sm:$0xff]
      %v4392 = vld [vmem:[#allocation2 + $0x28] sm:$0xff]
      %v4393 = vld [vmem:[#allocation2 + $0x30] sm:$0xff]
      %v4394 = vld [vmem:[#allocation2 + $0x38] sm:$0xff]
      %v4395 = vld [vmem:[#allocation2 + $0x40] sm:$0xff]
      %v4396 = vld [vmem:[#allocation2 + $0x48] sm:$0xff]
      %4406 = vrot.lane.b32.xlu0 %v4388, 39
      %v4407 = vpop.permute.xlu0 %4406
      %4408 = vrot.lane.b32.xlu0 %v4389, 39
      %v4409 = vpop.permute.xlu0 %4408
      %4410 = vrot.lane.b32.xlu0 %v4390, 39
      %v4411 = vpop.permute.xlu0 %4410
      %4412 = vrot.lane.b32.xlu0 %v4391, 39
      %v4413 = vpop.permute.xlu0 %4412
      %4414 = vrot.lane.b32.xlu0 %v4392, 39
      %v4415 = vpop.permute.xlu0 %4414
      %4416 = vrot.lane.b32.xlu0 %v4393, 39
      %v4417 = vpop.permute.xlu0 %4416
      %4418 = vrot.lane.b32.xlu0 %v4394, 39
      %v4419 = vpop.permute.xlu0 %4418
      %4420 = vrot.lane.b32.xlu0 %v4395, 39
      %v4421 = vpop.permute.xlu0 %4420
      %4422 = vrot.lane.b32.xlu0 %v4396, 39
      %v4423 = vpop.permute.xlu0 %4422
      %v4424 = vsel %vm1994, %v4407, %v4409
      %v4425 = vsel %vm1994, %v4409, %v4411
      %v4426 = vsel %vm1994, %v4411, %v4413
      %v4427 = vsel %vm1994, %v4413, %v4415
      %v4428 = vsel %vm1994, %v4415, %v4417
      %v4429 = vsel %vm1994, %v4417, %v4419
      %v4430 = vsel %vm1994, %v4419, %v4421
      %v4431 = vsel %vm1994, %v4421, %v4423
      %4440 = vst [vmem:[#allocation3] sm:$0xff] %v4424
      %4441 = vst [vmem:[#allocation3 + $0x8] sm:$0xff] %v4425
      %4442 = vst [vmem:[#allocation3 + $0x10] sm:$0xff] %v4426
      %4443 = vst [vmem:[#allocation3 + $0x18] sm:$0xff] %v4427
      %4444 = vst [vmem:[#allocation3 + $0x20] sm:$0xff] %v4428
      %4445 = vst [vmem:[#allocation3 + $0x28] sm:$0xff] %v4429
      %4446 = vst [vmem:[#allocation3 + $0x30] sm:$0xff] %v4430
      %4447 = vst [vmem:[#allocation3 + $0x38] sm:$0xff] %v4431
      %v4448 = vld [vmem:[#allocation2 + $0x8] sm:$0xff]
      %v4449 = vld [vmem:[#allocation2 + $0x10] sm:$0xff]
      %v4450 = vld [vmem:[#allocation2 + $0x18] sm:$0xff]
      %v4451 = vld [vmem:[#allocation2 + $0x20] sm:$0xff]
      %v4452 = vld [vmem:[#allocation2 + $0x28] sm:$0xff]
      %v4453 = vld [vmem:[#allocation2 + $0x30] sm:$0xff]
      %v4454 = vld [vmem:[#allocation2 + $0x38] sm:$0xff]
      %v4455 = vld [vmem:[#allocation2 + $0x40] sm:$0xff]
      %v4456 = vld [vmem:[#allocation2 + $0x48] sm:$0xff]
      %4466 = vrot.lane.b32.xlu0 %v4448, 38
      %v4467 = vpop.permute.xlu0 %4466
      %4468 = vrot.lane.b32.xlu0 %v4449, 38
      %v4469 = vpop.permute.xlu0 %4468
      %4470 = vrot.lane.b32.xlu0 %v4450, 38
      %v4471 = vpop.permute.xlu0 %4470
      %4472 = vrot.lane.b32.xlu0 %v4451, 38
      %v4473 = vpop.permute.xlu0 %4472
      %4474 = vrot.lane.b32.xlu0 %v4452, 38
      %v4475 = vpop.permute.xlu0 %4474
      %4476 = vrot.lane.b32.xlu0 %v4453, 38
      %v4477 = vpop.permute.xlu0 %4476
      %4478 = vrot.lane.b32.xlu0 %v4454, 38
      %v4479 = vpop.permute.xlu0 %4478
      %4480 = vrot.lane.b32.xlu0 %v4455, 38
      %v4481 = vpop.permute.xlu0 %4480
      %4482 = vrot.lane.b32.xlu0 %v4456, 38
      %v4483 = vpop.permute.xlu0 %4482
      %v4484 = vsel %vm2055, %v4467, %v4469
      %v4485 = vsel %vm2055, %v4469, %v4471
      %v4486 = vsel %vm2055, %v4471, %v4473
      %v4487 = vsel %vm2055, %v4473, %v4475
      %v4488 = vsel %vm2055, %v4475, %v4477
      %v4489 = vsel %vm2055, %v4477, %v4479
      %v4490 = vsel %vm2055, %v4479, %v4481
      %v4491 = vsel %vm2055, %v4481, %v4483
      %4500 = vst [vmem:[#allocation3 + $0x40] sm:$0xff] %v4484
      %4501 = vst [vmem:[#allocation3 + $0x48] sm:$0xff] %v4485
      %4502 = vst [vmem:[#allocation3 + $0x50] sm:$0xff] %v4486
      %4503 = vst [vmem:[#allocation3 + $0x58] sm:$0xff] %v4487
      %4504 = vst [vmem:[#allocation3 + $0x60] sm:$0xff] %v4488
      %4505 = vst [vmem:[#allocation3 + $0x68] sm:$0xff] %v4489
      %4506 = vst [vmem:[#allocation3 + $0x70] sm:$0xff] %v4490
      %4507 = vst [vmem:[#allocation3 + $0x78] sm:$0xff] %v4491
      %v4508 = vld [vmem:[#allocation2 + $0x8] sm:$0xff]
      %v4509 = vld [vmem:[#allocation2 + $0x10] sm:$0xff]
      %v4510 = vld [vmem:[#allocation2 + $0x18] sm:$0xff]
      %v4511 = vld [vmem:[#allocation2 + $0x20] sm:$0xff]
      %v4512 = vld [vmem:[#allocation2 + $0x28] sm:$0xff]
      %v4513 = vld [vmem:[#allocation2 + $0x30] sm:$0xff]
      %v4514 = vld [vmem:[#allocation2 + $0x38] sm:$0xff]
      %v4515 = vld [vmem:[#allocation2 + $0x40] sm:$0xff]
      %v4516 = vld [vmem:[#allocation2 + $0x48] sm:$0xff]
      %4526 = vrot.lane.b32.xlu0 %v4508, 37
      %v4527 = vpop.permute.xlu0 %4526
      %4528 = vrot.lane.b32.xlu0 %v4509, 37
      %v4529 = vpop.permute.xlu0 %4528
      %4530 = vrot.lane.b32.xlu0 %v4510, 37
      %v4531 = vpop.permute.xlu0 %4530
      %4532 = vrot.lane.b32.xlu0 %v4511, 37
      %v4533 = vpop.permute.xlu0 %4532
      %4534 = vrot.lane.b32.xlu0 %v4512, 37
      %v4535 = vpop.permute.xlu0 %4534
      %4536 = vrot.lane.b32.xlu0 %v4513, 37
      %v4537 = vpop.permute.xlu0 %4536
      %4538 = vrot.lane.b32.xlu0 %v4514, 37
      %v4539 = vpop.permute.xlu0 %4538
      %4540 = vrot.lane.b32.xlu0 %v4515, 37
      %v4541 = vpop.permute.xlu0 %4540
      %4542 = vrot.lane.b32.xlu0 %v4516, 37
      %v4543 = vpop.permute.xlu0 %4542
      %v4544 = vsel %vm2116, %v4527, %v4529
      %v4545 = vsel %vm2116, %v4529, %v4531
      %v4546 = vsel %vm2116, %v4531, %v4533
      %v4547 = vsel %vm2116, %v4533, %v4535
      %v4548 = vsel %vm2116, %v4535, %v4537
      %v4549 = vsel %vm2116, %v4537, %v4539
      %v4550 = vsel %vm2116, %v4539, %v4541
      %v4551 = vsel %vm2116, %v4541, %v4543
      %4560 = vst [vmem:[#allocation3 + $0x80] sm:$0xff] %v4544
      %4561 = vst [vmem:[#allocation3 + $0x88] sm:$0xff] %v4545
      %4562 = vst [vmem:[#allocation3 + $0x90] sm:$0xff] %v4546
      %4563 = vst [vmem:[#allocation3 + $0x98] sm:$0xff] %v4547
      %4564 = vst [vmem:[#allocation3 + $0xa0] sm:$0xff] %v4548
      %4565 = vst [vmem:[#allocation3 + $0xa8] sm:$0xff] %v4549
      %4566 = vst [vmem:[#allocation3 + $0xb0] sm:$0xff] %v4550
      %4567 = vst [vmem:[#allocation3 + $0xb8] sm:$0xff] %v4551
      %v4568 = vld [vmem:[#allocation2 + $0x8] sm:$0xff]
      %v4569 = vld [vmem:[#allocation2 + $0x10] sm:$0xff]
      %v4570 = vld [vmem:[#allocation2 + $0x18] sm:$0xff]
      %v4571 = vld [vmem:[#allocation2 + $0x20] sm:$0xff]
      %v4572 = vld [vmem:[#allocation2 + $0x28] sm:$0xff]
      %v4573 = vld [vmem:[#allocation2 + $0x30] sm:$0xff]
      %v4574 = vld [vmem:[#allocation2 + $0x38] sm:$0xff]
      %v4575 = vld [vmem:[#allocation2 + $0x40] sm:$0xff]
      %v4576 = vld [vmem:[#allocation2 + $0x48] sm:$0xff]
      %4586 = vrot.lane.b32.xlu0 %v4568, 29
      %v4587 = vpop.permute.xlu0 %4586
      %4588 = vrot.lane.b32.xlu0 %v4569, 29
      %v4589 = vpop.permute.xlu0 %4588
      %4590 = vrot.lane.b32.xlu0 %v4570, 29
      %v4591 = vpop.permute.xlu0 %4590
      %4592 = vrot.lane.b32.xlu0 %v4571, 29
      %v4593 = vpop.permute.xlu0 %4592
      %4594 = vrot.lane.b32.xlu0 %v4572, 29
      %v4595 = vpop.permute.xlu0 %4594
      %4596 = vrot.lane.b32.xlu0 %v4573, 29
      %v4597 = vpop.permute.xlu0 %4596
      %4598 = vrot.lane.b32.xlu0 %v4574, 29
      %v4599 = vpop.permute.xlu0 %4598
      %4600 = vrot.lane.b32.xlu0 %v4575, 29
      %v4601 = vpop.permute.xlu0 %4600
      %4602 = vrot.lane.b32.xlu0 %v4576, 29
      %v4603 = vpop.permute.xlu0 %4602
      %v4604 = vsel %vm2177, %v4587, %v4589
      %v4605 = vsel %vm2177, %v4589, %v4591
      %v4606 = vsel %vm2177, %v4591, %v4593
      %v4607 = vsel %vm2177, %v4593, %v4595
      %v4608 = vsel %vm2177, %v4595, %v4597
      %v4609 = vsel %vm2177, %v4597, %v4599
      %v4610 = vsel %vm2177, %v4599, %v4601
      %v4611 = vsel %vm2177, %v4601, %v4603
      %4620 = vst [vmem:[#allocation3 + $0xc0] sm:$0xff] %v4604
      %4621 = vst [vmem:[#allocation3 + $0xc8] sm:$0xff] %v4605
      %4622 = vst [vmem:[#allocation3 + $0xd0] sm:$0xff] %v4606
      %4623 = vst [vmem:[#allocation3 + $0xd8] sm:$0xff] %v4607
      %4624 = vst [vmem:[#allocation3 + $0xe0] sm:$0xff] %v4608
      %4625 = vst [vmem:[#allocation3 + $0xe8] sm:$0xff] %v4609
      %4626 = vst [vmem:[#allocation3 + $0xf0] sm:$0xff] %v4610
      %4627 = vst [vmem:[#allocation3 + $0xf8] sm:$0xff] %v4611
      %v4628 = vld [vmem:[#allocation2 + $0x8] sm:$0xff]
      %v4629 = vld [vmem:[#allocation2 + $0x10] sm:$0xff]
      %v4630 = vld [vmem:[#allocation2 + $0x18] sm:$0xff]
      %v4631 = vld [vmem:[#allocation2 + $0x20] sm:$0xff]
      %v4632 = vld [vmem:[#allocation2 + $0x28] sm:$0xff]
      %v4633 = vld [vmem:[#allocation2 + $0x30] sm:$0xff]
      %v4634 = vld [vmem:[#allocation2 + $0x38] sm:$0xff]
      %v4635 = vld [vmem:[#allocation2 + $0x40] sm:$0xff]
      %v4636 = vld [vmem:[#allocation2 + $0x48] sm:$0xff]
      %4646 = vrot.lane.b32.xlu0 %v4628, 28
      %v4647 = vpop.permute.xlu0 %4646
      %4648 = vrot.lane.b32.xlu0 %v4629, 28
      %v4649 = vpop.permute.xlu0 %4648
      %4650 = vrot.lane.b32.xlu0 %v4630, 28
      %v4651 = vpop.permute.xlu0 %4650
      %4652 = vrot.lane.b32.xlu0 %v4631, 28
      %v4653 = vpop.permute.xlu0 %4652
      %4654 = vrot.lane.b32.xlu0 %v4632, 28
      %v4655 = vpop.permute.xlu0 %4654
      %4656 = vrot.lane.b32.xlu0 %v4633, 28
      %v4657 = vpop.permute.xlu0 %4656
      %4658 = vrot.lane.b32.xlu0 %v4634, 28
      %v4659 = vpop.permute.xlu0 %4658
      %4660 = vrot.lane.b32.xlu0 %v4635, 28
      %v4661 = vpop.permute.xlu0 %4660
      %4662 = vrot.lane.b32.xlu0 %v4636, 28
      %v4663 = vpop.permute.xlu0 %4662
      %v4664 = vsel %vm2238, %v4647, %v4649
      %v4665 = vsel %vm2238, %v4649, %v4651
      %v4666 = vsel %vm2238, %v4651, %v4653
      %v4667 = vsel %vm2238, %v4653, %v4655
      %v4668 = vsel %vm2238, %v4655, %v4657
      %v4669 = vsel %vm2238, %v4657, %v4659
      %v4670 = vsel %vm2238, %v4659, %v4661
      %v4671 = vsel %vm2238, %v4661, %v4663
      %4680 = vst [vmem:[#allocation3 + $0x100] sm:$0xff] %v4664
      %4681 = vst [vmem:[#allocation3 + $0x108] sm:$0xff] %v4665
      %4682 = vst [vmem:[#allocation3 + $0x110] sm:$0xff] %v4666
      %4683 = vst [vmem:[#allocation3 + $0x118] sm:$0xff] %v4667
      %4684 = vst [vmem:[#allocation3 + $0x120] sm:$0xff] %v4668
      %4685 = vst [vmem:[#allocation3 + $0x128] sm:$0xff] %v4669
      %4686 = vst [vmem:[#allocation3 + $0x130] sm:$0xff] %v4670
      %4687 = vst [vmem:[#allocation3 + $0x138] sm:$0xff] %v4671
      %v4688 = vld [vmem:[#allocation2 + $0x8] sm:$0xff]
      %v4689 = vld [vmem:[#allocation2 + $0x10] sm:$0xff]
      %v4690 = vld [vmem:[#allocation2 + $0x18] sm:$0xff]
      %v4691 = vld [vmem:[#allocation2 + $0x20] sm:$0xff]
      %v4692 = vld [vmem:[#allocation2 + $0x28] sm:$0xff]
      %v4693 = vld [vmem:[#allocation2 + $0x30] sm:$0xff]
      %v4694 = vld [vmem:[#allocation2 + $0x38] sm:$0xff]
      %v4695 = vld [vmem:[#allocation2 + $0x40] sm:$0xff]
      %v4696 = vld [vmem:[#allocation2 + $0x48] sm:$0xff]
      %4706 = vrot.lane.b32.xlu0 %v4688, 27
      %v4707 = vpop.permute.xlu0 %4706
      %4708 = vrot.lane.b32.xlu0 %v4689, 27
      %v4709 = vpop.permute.xlu0 %4708
      %4710 = vrot.lane.b32.xlu0 %v4690, 27
      %v4711 = vpop.permute.xlu0 %4710
      %4712 = vrot.lane.b32.xlu0 %v4691, 27
      %v4713 = vpop.permute.xlu0 %4712
      %4714 = vrot.lane.b32.xlu0 %v4692, 27
      %v4715 = vpop.permute.xlu0 %4714
      %4716 = vrot.lane.b32.xlu0 %v4693, 27
      %v4717 = vpop.permute.xlu0 %4716
      %4718 = vrot.lane.b32.xlu0 %v4694, 27
      %v4719 = vpop.permute.xlu0 %4718
      %4720 = vrot.lane.b32.xlu0 %v4695, 27
      %v4721 = vpop.permute.xlu0 %4720
      %4722 = vrot.lane.b32.xlu0 %v4696, 27
      %v4723 = vpop.permute.xlu0 %4722
      %v4724 = vsel %vm2299, %v4707, %v4709
      %v4725 = vsel %vm2299, %v4709, %v4711
      %v4726 = vsel %vm2299, %v4711, %v4713
      %v4727 = vsel %vm2299, %v4713, %v4715
      %v4728 = vsel %vm2299, %v4715, %v4717
      %v4729 = vsel %vm2299, %v4717, %v4719
      %v4730 = vsel %vm2299, %v4719, %v4721
      %v4731 = vsel %vm2299, %v4721, %v4723
      %4740 = vst [vmem:[#allocation3 + $0x140] sm:$0xff] %v4724
      %4741 = vst [vmem:[#allocation3 + $0x148] sm:$0xff] %v4725
      %4742 = vst [vmem:[#allocation3 + $0x150] sm:$0xff] %v4726
      %4743 = vst [vmem:[#allocation3 + $0x158] sm:$0xff] %v4727
      %4744 = vst [vmem:[#allocation3 + $0x160] sm:$0xff] %v4728
      %4745 = vst [vmem:[#allocation3 + $0x168] sm:$0xff] %v4729
      %4746 = vst [vmem:[#allocation3 + $0x170] sm:$0xff] %v4730
      %4747 = vst [vmem:[#allocation3 + $0x178] sm:$0xff] %v4731
      %v4748 = vld [vmem:[#allocation2 + $0x8] sm:$0xff]
      %v4749 = vld [vmem:[#allocation2 + $0x10] sm:$0xff]
      %v4750 = vld [vmem:[#allocation2 + $0x18] sm:$0xff]
      %v4751 = vld [vmem:[#allocation2 + $0x20] sm:$0xff]
      %v4752 = vld [vmem:[#allocation2 + $0x28] sm:$0xff]
      %v4753 = vld [vmem:[#allocation2 + $0x30] sm:$0xff]
      %v4754 = vld [vmem:[#allocation2 + $0x38] sm:$0xff]
      %v4755 = vld [vmem:[#allocation2 + $0x40] sm:$0xff]
      %v4756 = vld [vmem:[#allocation2 + $0x48] sm:$0xff]
      %4766 = vrot.lane.b32.xlu0 %v4748, 19
      %v4767 = vpop.permute.xlu0 %4766
      %4768 = vrot.lane.b32.xlu0 %v4749, 19
      %v4769 = vpop.permute.xlu0 %4768
      %4770 = vrot.lane.b32.xlu0 %v4750, 19
      %v4771 = vpop.permute.xlu0 %4770
      %4772 = vrot.lane.b32.xlu0 %v4751, 19
      %v4773 = vpop.permute.xlu0 %4772
      %4774 = vrot.lane.b32.xlu0 %v4752, 19
      %v4775 = vpop.permute.xlu0 %4774
      %4776 = vrot.lane.b32.xlu0 %v4753, 19
      %v4777 = vpop.permute.xlu0 %4776
      %4778 = vrot.lane.b32.xlu0 %v4754, 19
      %v4779 = vpop.permute.xlu0 %4778
      %4780 = vrot.lane.b32.xlu0 %v4755, 19
      %v4781 = vpop.permute.xlu0 %4780
      %4782 = vrot.lane.b32.xlu0 %v4756, 19
      %v4783 = vpop.permute.xlu0 %4782
      %v4784 = vsel %vm2360, %v4767, %v4769
      %v4785 = vsel %vm2360, %v4769, %v4771
      %v4786 = vsel %vm2360, %v4771, %v4773
      %v4787 = vsel %vm2360, %v4773, %v4775
      %v4788 = vsel %vm2360, %v4775, %v4777
      %v4789 = vsel %vm2360, %v4777, %v4779
      %v4790 = vsel %vm2360, %v4779, %v4781
      %v4791 = vsel %vm2360, %v4781, %v4783
      %4800 = vst [vmem:[#allocation3 + $0x180] sm:$0xff] %v4784
      %4801 = vst [vmem:[#allocation3 + $0x188] sm:$0xff] %v4785
      %4802 = vst [vmem:[#allocation3 + $0x190] sm:$0xff] %v4786
      %4803 = vst [vmem:[#allocation3 + $0x198] sm:$0xff] %v4787
      %4804 = vst [vmem:[#allocation3 + $0x1a0] sm:$0xff] %v4788
      %4805 = vst [vmem:[#allocation3 + $0x1a8] sm:$0xff] %v4789
      %4806 = vst [vmem:[#allocation3 + $0x1b0] sm:$0xff] %v4790
      %4807 = vst [vmem:[#allocation3 + $0x1b8] sm:$0xff] %v4791
      %v4808 = vld [vmem:[#allocation2 + $0x8] sm:$0xff]
      %v4809 = vld [vmem:[#allocation2 + $0x10] sm:$0xff]
      %v4810 = vld [vmem:[#allocation2 + $0x18] sm:$0xff]
      %v4811 = vld [vmem:[#allocation2 + $0x20] sm:$0xff]
      %v4812 = vld [vmem:[#allocation2 + $0x28] sm:$0xff]
      %v4813 = vld [vmem:[#allocation2 + $0x30] sm:$0xff]
      %v4814 = vld [vmem:[#allocation2 + $0x38] sm:$0xff]
      %v4815 = vld [vmem:[#allocation2 + $0x40] sm:$0xff]
      %v4816 = vld [vmem:[#allocation2 + $0x48] sm:$0xff]
      %4826 = vrot.lane.b32.xlu0 %v4808, 18
      %v4827 = vpop.permute.xlu0 %4826
      %4828 = vrot.lane.b32.xlu0 %v4809, 18
      %v4829 = vpop.permute.xlu0 %4828
      %4830 = vrot.lane.b32.xlu0 %v4810, 18
      %v4831 = vpop.permute.xlu0 %4830
      %4832 = vrot.lane.b32.xlu0 %v4811, 18
      %v4833 = vpop.permute.xlu0 %4832
      %4834 = vrot.lane.b32.xlu0 %v4812, 18
      %v4835 = vpop.permute.xlu0 %4834
      %4836 = vrot.lane.b32.xlu0 %v4813, 18
      %v4837 = vpop.permute.xlu0 %4836
      %4838 = vrot.lane.b32.xlu0 %v4814, 18
      %v4839 = vpop.permute.xlu0 %4838
      %4840 = vrot.lane.b32.xlu0 %v4815, 18
      %v4841 = vpop.permute.xlu0 %4840
      %4842 = vrot.lane.b32.xlu0 %v4816, 18
      %v4843 = vpop.permute.xlu0 %4842
      %v4844 = vsel %vm2421, %v4827, %v4829
      %v4845 = vsel %vm2421, %v4829, %v4831
      %v4846 = vsel %vm2421, %v4831, %v4833
      %v4847 = vsel %vm2421, %v4833, %v4835
      %v4848 = vsel %vm2421, %v4835, %v4837
      %v4849 = vsel %vm2421, %v4837, %v4839
      %v4850 = vsel %vm2421, %v4839, %v4841
      %v4851 = vsel %vm2421, %v4841, %v4843
      %4860 = vst [vmem:[#allocation3 + $0x1c0] sm:$0xff] %v4844
      %4861 = vst [vmem:[#allocation3 + $0x1c8] sm:$0xff] %v4845
      %4862 = vst [vmem:[#allocation3 + $0x1d0] sm:$0xff] %v4846
      %4863 = vst [vmem:[#allocation3 + $0x1d8] sm:$0xff] %v4847
      %4864 = vst [vmem:[#allocation3 + $0x1e0] sm:$0xff] %v4848
      %4865 = vst [vmem:[#allocation3 + $0x1e8] sm:$0xff] %v4849
      %4866 = vst [vmem:[#allocation3 + $0x1f0] sm:$0xff] %v4850
      %4867 = vst [vmem:[#allocation3 + $0x1f8] sm:$0xff] %v4851
      %v4868 = vld [vmem:[#allocation2 + $0x8] sm:$0xff]
      %v4869 = vld [vmem:[#allocation2 + $0x10] sm:$0xff]
      %v4870 = vld [vmem:[#allocation2 + $0x18] sm:$0xff]
      %v4871 = vld [vmem:[#allocation2 + $0x20] sm:$0xff]
      %v4872 = vld [vmem:[#allocation2 + $0x28] sm:$0xff]
      %v4873 = vld [vmem:[#allocation2 + $0x30] sm:$0xff]
      %v4874 = vld [vmem:[#allocation2 + $0x38] sm:$0xff]
      %v4875 = vld [vmem:[#allocation2 + $0x40] sm:$0xff]
      %v4876 = vld [vmem:[#allocation2 + $0x48] sm:$0xff]
      %4886 = vrot.lane.b32.xlu0 %v4868, 17
      %v4887 = vpop.permute.xlu0 %4886
      %4888 = vrot.lane.b32.xlu0 %v4869, 17
      %v4889 = vpop.permute.xlu0 %4888
      %4890 = vrot.lane.b32.xlu0 %v4870, 17
      %v4891 = vpop.permute.xlu0 %4890
      %4892 = vrot.lane.b32.xlu0 %v4871, 17
      %v4893 = vpop.permute.xlu0 %4892
      %4894 = vrot.lane.b32.xlu0 %v4872, 17
      %v4895 = vpop.permute.xlu0 %4894
      %4896 = vrot.lane.b32.xlu0 %v4873, 17
      %v4897 = vpop.permute.xlu0 %4896
      %4898 = vrot.lane.b32.xlu0 %v4874, 17
      %v4899 = vpop.permute.xlu0 %4898
      %4900 = vrot.lane.b32.xlu0 %v4875, 17
      %v4901 = vpop.permute.xlu0 %4900
      %4902 = vrot.lane.b32.xlu0 %v4876, 17
      %v4903 = vpop.permute.xlu0 %4902
      %v4904 = vsel %vm2482, %v4887, %v4889
      %v4905 = vsel %vm2482, %v4889, %v4891
      %v4906 = vsel %vm2482, %v4891, %v4893
      %v4907 = vsel %vm2482, %v4893, %v4895
      %v4908 = vsel %vm2482, %v4895, %v4897
      %v4909 = vsel %vm2482, %v4897, %v4899
      %v4910 = vsel %vm2482, %v4899, %v4901
      %v4911 = vsel %vm2482, %v4901, %v4903
      %4920 = vst [vmem:[#allocation3 + $0x200] sm:$0xff] %v4904
      %4921 = vst [vmem:[#allocation3 + $0x208] sm:$0xff] %v4905
      %4922 = vst [vmem:[#allocation3 + $0x210] sm:$0xff] %v4906
      %4923 = vst [vmem:[#allocation3 + $0x218] sm:$0xff] %v4907
      %4924 = vst [vmem:[#allocation3 + $0x220] sm:$0xff] %v4908
      %4925 = vst [vmem:[#allocation3 + $0x228] sm:$0xff] %v4909
      %4926 = vst [vmem:[#allocation3 + $0x230] sm:$0xff] %v4910
      %4927 = vst [vmem:[#allocation3 + $0x238] sm:$0xff] %v4911
      %s4928 = scalar_lea.vmem %s3, 16
      %v4929 = vld [vmem:[%s4928] sm:$0xff]
      %v4930 = vld [vmem:[#allocation3] sm:$0xff]
      %v4931 = vld [vmem:[#allocation3 + $0x8] sm:$0xff]
      %v4932 = vld [vmem:[#allocation3 + $0x10] sm:$0xff]
      %v4933 = vld [vmem:[#allocation3 + $0x18] sm:$0xff]
      %v4934 = vld [vmem:[#allocation3 + $0x20] sm:$0xff]
      %v4935 = vld [vmem:[#allocation3 + $0x28] sm:$0xff]
      %v4936 = vld [vmem:[#allocation3 + $0x30] sm:$0xff]
      %v4937 = vld [vmem:[#allocation3 + $0x38] sm:$0xff]
      %v4938 = vld [vmem:[#allocation3 + $0x40] sm:$0xff]
      %v4939 = vld [vmem:[#allocation3 + $0x48] sm:$0xff]
      %v4940 = vld [vmem:[#allocation3 + $0x50] sm:$0xff]
      %v4941 = vld [vmem:[#allocation3 + $0x58] sm:$0xff]
      %v4942 = vld [vmem:[#allocation3 + $0x60] sm:$0xff]
      %v4943 = vld [vmem:[#allocation3 + $0x68] sm:$0xff]
      %v4944 = vld [vmem:[#allocation3 + $0x70] sm:$0xff]
      %v4945 = vld [vmem:[#allocation3 + $0x78] sm:$0xff]
      %v4946 = vld [vmem:[#allocation3 + $0x80] sm:$0xff]
      %v4947 = vld [vmem:[#allocation3 + $0x88] sm:$0xff]
      %v4948 = vld [vmem:[#allocation3 + $0x90] sm:$0xff]
      %v4949 = vld [vmem:[#allocation3 + $0x98] sm:$0xff]
      %v4950 = vld [vmem:[#allocation3 + $0xa0] sm:$0xff]
      %v4951 = vld [vmem:[#allocation3 + $0xa8] sm:$0xff]
      %v4952 = vld [vmem:[#allocation3 + $0xb0] sm:$0xff]
      %v4953 = vld [vmem:[#allocation3 + $0xb8] sm:$0xff]
      %v4954 = vld [vmem:[#allocation3 + $0xc0] sm:$0xff]
      %v4955 = vld [vmem:[#allocation3 + $0xc8] sm:$0xff]
      %v4956 = vld [vmem:[#allocation3 + $0xd0] sm:$0xff]
      %v4957 = vld [vmem:[#allocation3 + $0xd8] sm:$0xff]
      %v4958 = vld [vmem:[#allocation3 + $0xe0] sm:$0xff]
      %v4959 = vld [vmem:[#allocation3 + $0xe8] sm:$0xff]
      %v4960 = vld [vmem:[#allocation3 + $0xf0] sm:$0xff]
      %v4961 = vld [vmem:[#allocation3 + $0xf8] sm:$0xff]
      %v4962 = vld [vmem:[#allocation3 + $0x100] sm:$0xff]
      %v4963 = vld [vmem:[#allocation3 + $0x108] sm:$0xff]
      %v4964 = vld [vmem:[#allocation3 + $0x110] sm:$0xff]
      %v4965 = vld [vmem:[#allocation3 + $0x118] sm:$0xff]
      %v4966 = vld [vmem:[#allocation3 + $0x120] sm:$0xff]
      %v4967 = vld [vmem:[#allocation3 + $0x128] sm:$0xff]
      %v4968 = vld [vmem:[#allocation3 + $0x130] sm:$0xff]
      %v4969 = vld [vmem:[#allocation3 + $0x138] sm:$0xff]
      %v4970 = vld [vmem:[#allocation3 + $0x140] sm:$0xff]
      %v4971 = vld [vmem:[#allocation3 + $0x148] sm:$0xff]
      %v4972 = vld [vmem:[#allocation3 + $0x150] sm:$0xff]
      %v4973 = vld [vmem:[#allocation3 + $0x158] sm:$0xff]
      %v4974 = vld [vmem:[#allocation3 + $0x160] sm:$0xff]
      %v4975 = vld [vmem:[#allocation3 + $0x168] sm:$0xff]
      %v4976 = vld [vmem:[#allocation3 + $0x170] sm:$0xff]
      %v4977 = vld [vmem:[#allocation3 + $0x178] sm:$0xff]
      %v4978 = vld [vmem:[#allocation3 + $0x180] sm:$0xff]
      %v4979 = vld [vmem:[#allocation3 + $0x188] sm:$0xff]
      %v4980 = vld [vmem:[#allocation3 + $0x190] sm:$0xff]
      %v4981 = vld [vmem:[#allocation3 + $0x198] sm:$0xff]
      %v4982 = vld [vmem:[#allocation3 + $0x1a0] sm:$0xff]
      %v4983 = vld [vmem:[#allocation3 + $0x1a8] sm:$0xff]
      %v4984 = vld [vmem:[#allocation3 + $0x1b0] sm:$0xff]
      %v4985 = vld [vmem:[#allocation3 + $0x1b8] sm:$0xff]
      %v4986 = vld [vmem:[#allocation3 + $0x1c0] sm:$0xff]
      %v4987 = vld [vmem:[#allocation3 + $0x1c8] sm:$0xff]
      %v4988 = vld [vmem:[#allocation3 + $0x1d0] sm:$0xff]
      %v4989 = vld [vmem:[#allocation3 + $0x1d8] sm:$0xff]
      %v4990 = vld [vmem:[#allocation3 + $0x1e0] sm:$0xff]
      %v4991 = vld [vmem:[#allocation3 + $0x1e8] sm:$0xff]
      %v4992 = vld [vmem:[#allocation3 + $0x1f0] sm:$0xff]
      %v4993 = vld [vmem:[#allocation3 + $0x1f8] sm:$0xff]
      %v4994 = vld [vmem:[#allocation3 + $0x200] sm:$0xff]
      %v4995 = vld [vmem:[#allocation3 + $0x208] sm:$0xff]
      %v4996 = vld [vmem:[#allocation3 + $0x210] sm:$0xff]
      %v4997 = vld [vmem:[#allocation3 + $0x218] sm:$0xff]
      %v4998 = vld [vmem:[#allocation3 + $0x220] sm:$0xff]
      %v4999 = vld [vmem:[#allocation3 + $0x228] sm:$0xff]
      %v5000 = vld [vmem:[#allocation3 + $0x230] sm:$0xff]
      %v5001 = vld [vmem:[#allocation3 + $0x238] sm:$0xff]
      %v5003 = vunpack.c.l.b16 %v4929
      %v5004 = vunpack.c.h.b16 %v4929
      %v5005 = vpack.c.b16 %v5003, %v5003
      %v5006 = vpack.c.b16 %v5004, %v5004
      %v5009 = vsel %vm1023, %v5006, 0
      %5011 = vmatprep.subr.bf16.mxu0 %v4931
      %5012 = vmatpush1.bf16.msra.mxu0 %v4930
      %5013 = vmatprep.subr.bf16.mxu0 %v4939
      %5014 = vmatpush1.bf16.msra.mxu0 %v4938
      %5015 = vmatprep.subr.bf16.mxu0 %v4947
      %5016 = vmatpush1.bf16.msra.mxu0 %v4946
      %5017 = vmatprep.subr.bf16.mxu0 %v4955
      %5018 = vmatpush1.bf16.msra.mxu0 %v4954
      %5019 = vmatprep.subr.bf16.mxu0 %v4963
      %5020 = vmatpush1.bf16.msra.mxu0 %v4962
      %5021 = vmatprep.subr.bf16.mxu0 %v4971
      %5022 = vmatpush1.bf16.msra.mxu0 %v4970
      %5023 = vmatprep.subr.bf16.mxu0 %v4979
      %5024 = vmatpush1.bf16.msra.mxu0 %v4978
      %5025 = vmatprep.subr.bf16.mxu0 %v4987
      %5026 = vmatpush1.bf16.msra.mxu0 %v4986
      %5027 = vmatprep.subr.bf16.mxu0 %v4995
      %5028 = vmatpush1.bf16.msra.mxu0 %v4994
      %5029 = vmatprep.subr.bf16.mxu0 0
      %5030 = vmatpush1.bf16.msra.mxu0 0
      %5031 = vmatprep.subr.bf16.mxu0 0
      %5032 = vmatpush1.bf16.msra.mxu0 0
      %5033 = vmatprep.subr.bf16.mxu0 0
      %5034 = vmatpush1.bf16.msra.mxu0 0
      %5035 = vmatprep.subr.bf16.mxu0 0
      %5036 = vmatpush1.bf16.msra.mxu0 0
      %5037 = vmatprep.subr.bf16.mxu0 0
      %5038 = vmatpush1.bf16.msra.mxu0 0
      %5039 = vmatprep.subr.bf16.mxu0 0
      %5040 = vmatpush1.bf16.msra.mxu0 0
      %5041 = vmatprep.subr.bf16.mxu0 0
      %5042 = vmatpush1.bf16.msra.mxu0 0
      %5043 = vmatprep.mubr.bf16.mxu0 %v5009
      %5044 = vmatmul.mubr.bf16.gmra.mrb[0].mxu0 %v5005
      %v5045 = vpop.f32.mrb[0].mxu0
      %v5046 = vadd.f32 0.0, %v5045
      %v5047 = vpop.f32.mrb[0].mxu0
      %v5048 = vadd.f32 0.0, %v5047
      %v5049 = vpop.f32.mrb[0].mxu0
      %v5050 = vpop.f32.mrb[0].mxu0
      %5051 = vdwg.mxu0
      %5052 = vmatprep.subr.bf16.mxu0 %v4933
      %5053 = vmatpush1.bf16.msra.mxu0 %v4932
      %5054 = vmatprep.subr.bf16.mxu0 %v4941
      %5055 = vmatpush1.bf16.msra.mxu0 %v4940
      %5056 = vmatprep.subr.bf16.mxu0 %v4949
      %5057 = vmatpush1.bf16.msra.mxu0 %v4948
      %5058 = vmatprep.subr.bf16.mxu0 %v4957
      %5059 = vmatpush1.bf16.msra.mxu0 %v4956
      %5060 = vmatprep.subr.bf16.mxu0 %v4965
      %5061 = vmatpush1.bf16.msra.mxu0 %v4964
      %5062 = vmatprep.subr.bf16.mxu0 %v4973
      %5063 = vmatpush1.bf16.msra.mxu0 %v4972
      %5064 = vmatprep.subr.bf16.mxu0 %v4981
      %5065 = vmatpush1.bf16.msra.mxu0 %v4980
      %5066 = vmatprep.subr.bf16.mxu0 %v4989
      %5067 = vmatpush1.bf16.msra.mxu0 %v4988
      %5068 = vmatprep.subr.bf16.mxu0 %v4997
      %5069 = vmatpush1.bf16.msra.mxu0 %v4996
      %5070 = vmatprep.subr.bf16.mxu0 0
      %5071 = vmatpush1.bf16.msra.mxu0 0
      %5072 = vmatprep.subr.bf16.mxu0 0
      %5073 = vmatpush1.bf16.msra.mxu0 0
      %5074 = vmatprep.subr.bf16.mxu0 0
      %5075 = vmatpush1.bf16.msra.mxu0 0
      %5076 = vmatprep.subr.bf16.mxu0 0
      %5077 = vmatpush1.bf16.msra.mxu0 0
      %5078 = vmatprep.subr.bf16.mxu0 0
      %5079 = vmatpush1.bf16.msra.mxu0 0
      %5080 = vmatprep.subr.bf16.mxu0 0
      %5081 = vmatpush1.bf16.msra.mxu0 0
      %5082 = vmatprep.subr.bf16.mxu0 0
      %5083 = vmatpush1.bf16.msra.mxu0 0
      %5084 = vmatprep.mubr.bf16.mxu0 %v5009
      %5085 = vmatmul.mubr.bf16.gmra.mrb[0].mxu0 %v5005
      %v5086 = vpop.f32.mrb[0].mxu0
      %v5087 = vadd.f32 0.0, %v5086
      %v5088 = vpop.f32.mrb[0].mxu0
      %v5089 = vadd.f32 0.0, %v5088
      %v5090 = vpop.f32.mrb[0].mxu0
      %v5091 = vpop.f32.mrb[0].mxu0
      %5092 = vdwg.mxu0
      %5093 = vmatprep.subr.bf16.mxu0 %v4935
      %5094 = vmatpush1.bf16.msra.mxu0 %v4934
      %5095 = vmatprep.subr.bf16.mxu0 %v4943
      %5096 = vmatpush1.bf16.msra.mxu0 %v4942
      %5097 = vmatprep.subr.bf16.mxu0 %v4951
      %5098 = vmatpush1.bf16.msra.mxu0 %v4950
      %5099 = vmatprep.subr.bf16.mxu0 %v4959
      %5100 = vmatpush1.bf16.msra.mxu0 %v4958
      %5101 = vmatprep.subr.bf16.mxu0 %v4967
      %5102 = vmatpush1.bf16.msra.mxu0 %v4966
      %5103 = vmatprep.subr.bf16.mxu0 %v4975
      %5104 = vmatpush1.bf16.msra.mxu0 %v4974
      %5105 = vmatprep.subr.bf16.mxu0 %v4983
      %5106 = vmatpush1.bf16.msra.mxu0 %v4982
      %5107 = vmatprep.subr.bf16.mxu0 %v4991
      %5108 = vmatpush1.bf16.msra.mxu0 %v4990
      %5109 = vmatprep.subr.bf16.mxu0 %v4999
      %5110 = vmatpush1.bf16.msra.mxu0 %v4998
      %5111 = vmatprep.subr.bf16.mxu0 0
      %5112 = vmatpush1.bf16.msra.mxu0 0
      %5113 = vmatprep.subr.bf16.mxu0 0
      %5114 = vmatpush1.bf16.msra.mxu0 0
      %5115 = vmatprep.subr.bf16.mxu0 0
      %5116 = vmatpush1.bf16.msra.mxu0 0
      %5117 = vmatprep.subr.bf16.mxu0 0
      %5118 = vmatpush1.bf16.msra.mxu0 0
      %5119 = vmatprep.subr.bf16.mxu0 0
      %5120 = vmatpush1.bf16.msra.mxu0 0
      %5121 = vmatprep.subr.bf16.mxu0 0
      %5122 = vmatpush1.bf16.msra.mxu0 0
      %5123 = vmatprep.subr.bf16.mxu0 0
      %5124 = vmatpush1.bf16.msra.mxu0 0
      %5125 = vmatprep.mubr.bf16.mxu0 %v5009
      %5126 = vmatmul.mubr.bf16.gmra.mrb[0].mxu0 %v5005
      %v5127 = vpop.f32.mrb[0].mxu0
      %v5128 = vadd.f32 0.0, %v5127
      %v5129 = vpop.f32.mrb[0].mxu0
      %v5130 = vadd.f32 0.0, %v5129
      %v5131 = vpop.f32.mrb[0].mxu0
      %v5132 = vpop.f32.mrb[0].mxu0
      %5133 = vdwg.mxu0
      %5134 = vmatprep.subr.bf16.mxu0 %v4937
      %5135 = vmatpush1.bf16.msra.mxu0 %v4936
      %5136 = vmatprep.subr.bf16.mxu0 %v4945
      %5137 = vmatpush1.bf16.msra.mxu0 %v4944
      %5138 = vmatprep.subr.bf16.mxu0 %v4953
      %5139 = vmatpush1.bf16.msra.mxu0 %v4952
      %5140 = vmatprep.subr.bf16.mxu0 %v4961
      %5141 = vmatpush1.bf16.msra.mxu0 %v4960
      %5142 = vmatprep.subr.bf16.mxu0 %v4969
      %5143 = vmatpush1.bf16.msra.mxu0 %v4968
      %5144 = vmatprep.subr.bf16.mxu0 %v4977
      %5145 = vmatpush1.bf16.msra.mxu0 %v4976
      %5146 = vmatprep.subr.bf16.mxu0 %v4985
      %5147 = vmatpush1.bf16.msra.mxu0 %v4984
      %5148 = vmatprep.subr.bf16.mxu0 %v4993
      %5149 = vmatpush1.bf16.msra.mxu0 %v4992
      %5150 = vmatprep.subr.bf16.mxu0 %v5001
      %5151 = vmatpush1.bf16.msra.mxu0 %v5000
      %5152 = vmatprep.subr.bf16.mxu0 0
      %5153 = vmatpush1.bf16.msra.mxu0 0
      %5154 = vmatprep.subr.bf16.mxu0 0
      %5155 = vmatpush1.bf16.msra.mxu0 0
      %5156 = vmatprep.subr.bf16.mxu0 0
      %5157 = vmatpush1.bf16.msra.mxu0 0
      %5158 = vmatprep.subr.bf16.mxu0 0
      %5159 = vmatpush1.bf16.msra.mxu0 0
      %5160 = vmatprep.subr.bf16.mxu0 0
      %5161 = vmatpush1.bf16.msra.mxu0 0
      %5162 = vmatprep.subr.bf16.mxu0 0
      %5163 = vmatpush1.bf16.msra.mxu0 0
      %5164 = vmatprep.subr.bf16.mxu0 0
      %5165 = vmatpush1.bf16.msra.mxu0 0
      %5166 = vmatprep.mubr.bf16.mxu0 %v5009
      %5167 = vmatmul.mubr.bf16.gmra.mrb[0].mxu0 %v5005
      %v5168 = vpop.f32.mrb[0].mxu0
      %v5169 = vadd.f32 0.0, %v5168
      %v5170 = vpop.f32.mrb[0].mxu0
      %v5171 = vadd.f32 0.0, %v5170
      %v5172 = vpop.f32.mrb[0].mxu0
      %v5173 = vpop.f32.mrb[0].mxu0
      %5174 = vdwg.mxu0
      %v5175 = vadd.f32 %v4380, %v5046
      %v5176 = vadd.f32 %v4381, %v5048
      %v5177 = vadd.f32 %v4382, %v5087
      %v5178 = vadd.f32 %v4383, %v5089
      %v5179 = vadd.f32 %v4384, %v5128
      %v5180 = vadd.f32 %v4385, %v5130
      %v5181 = vadd.f32 %v4386, %v5169
      %v5182 = vadd.f32 %v4387, %v5171
      %v5183 = vmax.f32 %v5175, 0.0
      %v5184 = vmax.f32 %v5176, 0.0
      %v5185 = vmax.f32 %v5177, 0.0
      %v5186 = vmax.f32 %v5178, 0.0
      %v5187 = vmax.f32 %v5179, 0.0
      %v5188 = vmax.f32 %v5180, 0.0
      %v5189 = vmax.f32 %v5181, 0.0
      %v5190 = vmax.f32 %v5182, 0.0
      %5191 = vst [vmem:[%s251] sm:$0xff] %v5183
      %5192 = vst [vmem:[%s251 + $0x8] sm:$0xff] %v5184
      %5193 = vst [vmem:[%s251 + $0x10] sm:$0xff] %v5185
      %5194 = vst [vmem:[%s251 + $0x18] sm:$0xff] %v5186
      %5195 = vst [vmem:[%s251 + $0x20] sm:$0xff] %v5187
      %5196 = vst [vmem:[%s251 + $0x28] sm:$0xff] %v5188
      %5197 = vst [vmem:[%s251 + $0x30] sm:$0xff] %v5189
      %5198 = vst [vmem:[%s251 + $0x38] sm:$0xff] %v5190
      %p5199 = scmp.lt.s32.totalorder %s17, 1
      %s5200 = scalar_select %p5199, %s17, 1
      %s5201 = smul.addr %s5200, 8
      %s5202 = smul.addr %s5201, 8
      %s5203 = scalar_lea.vmem %s6, %s5202
      // Predicated region
      $region45: #{down_conv_block.1} parent=43 // pred_check
        %p5204 = pneg %p166
      $region46: #{down_conv_block.1} parent=43 // pred_check_branch
        %5206 = sbr.rel (%p5204) target = $region48
      $region47: #{down_conv_block.1} parent=43 // pred_region
        _
      $region48: #{down_conv_block.1} parent=43 // pred_fallthru
        _
    $region44: #{down_conv_block.1} parent=5 // pred_fallthru
      _
    %p5207 = scmp.le.s32.totalorder 2, %s12
    // Predicated region
    $region49: #{down_conv_block.1} parent=5 // pred_check
      %p5208 = pneg %p5207
    $region50: #{down_conv_block.1} parent=5 // pred_check_branch
      %5210 = sbr.rel (%p5208) target = $region52
    $region51: #{down_conv_block.1} parent=5 // pred_region
      %s5211 = ssub.s32 %s12, 2
      // Predicated region
      $region53: #{down_conv_block.1} parent=51 // pred_check
        %p5212 = pneg %p172
      $region54: #{down_conv_block.1} parent=51 // pred_check_branch
        %5214 = sbr.rel (%p5212) target = $region56
      $region55: #{down_conv_block.1} parent=51 // pred_region
        %p5215 = scmp.lt.s32.totalorder %s18, 1
        %s5216 = scalar_select %p5215, %s18, 1
        %s5217 = smul.addr %s5216, 8
        %s5218 = smul.addr %s5217, 8
        %s5219 = scalar_lea.vmem %s6, %s5218
      $region56: #{down_conv_block.1} parent=51 // pred_fallthru
        _
    $region52: #{down_conv_block.1} parent=5 // pred_fallthru
      _
  $region6: #{down_conv_block.1} parent=0 // loop_footer
    %s16 = sadd.s32 1, %s12
  $region7: #{down_conv_block.1} parent=0 // loop_footer_branch
    %11 = sbr.rel target = $region3
  $region8: #{down_conv_block.1} parent=0 // loop_exit
    _

</llo_original>
